<compile_context>
chip_gen: v7x
topology: tpu7x:2x2x1
jax: 0.10.0
libtpu: 0.0.40
codegen_flags: <defaults>
</compile_context>

<pallas_src>
import functools
import math

import jax
import jax.numpy as jnp
from jax import lax
from jax.experimental import pallas as pl
from jax.experimental.pallas import tpu as pltpu

INF = 1e5          # matches InvariantPointAttention(inf=1e5)
BF16 = jnp.bfloat16
LN_EPS = 1e-5
VMEM_LIMIT = 40 * 1024 * 1024   # safe for v7x's 64 MiB/TC, plenty on v5e/v6e


# ---------------------------------------------------------------------------
# small helpers
# ---------------------------------------------------------------------------
def _round_up(x, m):
    return ((x + m - 1) // m) * m


def _pick_tile(n, bytes_per_row, budget=16 * 1024 * 1024,
               cands=(512, 256, 128, 64, 32, 16, 8)):
    """Largest divisor tile of n whose (double-buffered) resident bytes fit."""
    divisors = [c for c in cands if c <= n and n % c == 0]
    for c in divisors:
        if 2 * c * bytes_per_row <= budget:
            return c
    return divisors[-1] if divisors else n


def _const_spec(shape):
    return pl.BlockSpec(shape, lambda i: (0,) * len(shape))


def _rowwise_pallas(kernel, row_inputs, consts, const_specs, n_out):
    """Run `kernel` over large row tiles of the (R, K) row_inputs.

    Only O(N)-sized node tensors pass through here (the N^2 pair tensors have
    their own fused kernels), so the occasional pad of a tiny array is cheap."""
    R = row_inputs[0].shape[0]
    tile = min(512, _round_up(R, 8))
    Rp = _round_up(R, tile)
    if Rp != R:
        row_inputs = [jnp.pad(r, ((0, Rp - R), (0, 0))) for r in row_inputs]
    row_specs = [pl.BlockSpec((tile, r.shape[1]), lambda i: (i, 0)) for r in row_inputs]
    out = pl.pallas_call(
        kernel,
        grid=(Rp // tile,),
        in_specs=row_specs + const_specs,
        out_specs=pl.BlockSpec((tile, n_out), lambda i: (i, 0)),
        out_shape=jax.ShapeDtypeStruct((Rp, n_out), jnp.float32),
        compiler_params=pltpu.CompilerParams(dimension_semantics=("parallel",)),
    )(*row_inputs, *consts)
    return out[:R] if Rp != R else out


# ---------------------------------------------------------------------------
# generic linear kernel
# ---------------------------------------------------------------------------
def _linear_kernel(x_ref, w_ref, b_ref, o_ref, *, pre_relu, post_relu):
    x = x_ref[...]
    if pre_relu:
        x = jnp.maximum(x, 0.0)
    y = jnp.dot(x.astype(BF16), w_ref[...], preferred_element_type=jnp.float32)
    y = y + b_ref[...]
    if post_relu:
        y = jnp.maximum(y, 0.0)
    o_ref[...] = y


def linear_pallas(x, w, b, *, pre_relu=False, post_relu=False):
    orig = x.shape
    K = orig[-1]
    Nout = w.shape[1]
    out = _rowwise_pallas(
        functools.partial(_linear_kernel, pre_relu=pre_relu, post_relu=post_relu),
        [x.reshape(-1, K)],
        (w.astype(BF16), b.reshape(1, Nout)),
        [_const_spec((K, Nout)), _const_spec((1, Nout))],
        Nout)
    return out.reshape(orig[:-1] + (Nout,))


# ---------------------------------------------------------------------------
# fused node-path kernel: IPA out-linear + residual + LN + TransitionLayer
# ---------------------------------------------------------------------------
def _node_update_kernel(cat_ref, s_ref, wo, bo, g1, be1, w1, bb1, w2, bb2, w3, bb3,
                        g2, be2, o_ref, *, eps):
    ipa = jnp.dot(cat_ref[...].astype(BF16), wo[...],
                  preferred_element_type=jnp.float32) + bo[...]
    x = s_ref[...] + ipa
    mu = jnp.mean(x, axis=-1, keepdims=True)
    var = jnp.mean(jnp.square(x - mu), axis=-1, keepdims=True)
    s1 = (x - mu) * lax.rsqrt(var + eps) * g1[...] + be1[...]

    h = jnp.dot(s1.astype(BF16), w1[...], preferred_element_type=jnp.float32) + bb1[...]
    h = jnp.maximum(h, 0.0)
    h = jnp.dot(h.astype(BF16), w2[...], preferred_element_type=jnp.float32) + bb2[...]
    h = jnp.maximum(h, 0.0)
    h = jnp.dot(h.astype(BF16), w3[...], preferred_element_type=jnp.float32) + bb3[...]
    y = h + s1
    mu = jnp.mean(y, axis=-1, keepdims=True)
    var = jnp.mean(jnp.square(y - mu), axis=-1, keepdims=True)
    o_ref[...] = (y - mu) * lax.rsqrt(var + eps) * g2[...] + be2[...]


def node_update_forward(p, s, ipa_cat):
    B, N, c = s.shape
    Dcat = ipa_cat.shape[-1]
    t = p['transition']
    out = _rowwise_pallas(
        functools.partial(_node_update_kernel, eps=LN_EPS),
        [ipa_cat.reshape(-1, Dcat), s.reshape(-1, c)],
        (p['ipa']['out']['w'].astype(BF16), p['ipa']['out']['b'].reshape(1, c),
         p['ipa_ln']['g'].reshape(1, c), p['ipa_ln']['b'].reshape(1, c),
         t['l1']['w'].astype(BF16), t['l1']['b'].reshape(1, c),
         t['l2']['w'].astype(BF16), t['l2']['b'].reshape(1, c),
         t['l3']['w'].astype(BF16), t['l3']['b'].reshape(1, c),
         t['ln']['g'].reshape(1, c), t['ln']['b'].reshape(1, c)),
        [_const_spec((Dcat, c)), _const_spec((1, c)),
         _const_spec((1, c)), _const_spec((1, c)),
         _const_spec((c, c)), _const_spec((1, c)),
         _const_spec((c, c)), _const_spec((1, c)),
         _const_spec((c, c)), _const_spec((1, c)),
         _const_spec((1, c)), _const_spec((1, c))],
        c)
    return out.reshape(B, N, c)


# ---------------------------------------------------------------------------
# AngleResnet block kernel
# ---------------------------------------------------------------------------
def _resnet_block_kernel(x_ref, w1, b1, w2, b2, o_ref):
    x = x_ref[...]
    a = jnp.maximum(x, 0.0)
    a = jnp.dot(a.astype(BF16), w1[...], preferred_element_type=jnp.float32) + b1[...]
    a = jnp.maximum(a, 0.0)
    a = jnp.dot(a.astype(BF16), w2[...], preferred_element_type=jnp.float32) + b2[...]
    o_ref[...] = a + x


def resnet_block_pallas(x, blk):
    orig = x.shape
    c = orig[-1]
    out = _rowwise_pallas(
        _resnet_block_kernel,
        [x.reshape(-1, c)],
        (blk['l1']['w'].astype(BF16), blk['l1']['b'].reshape(1, c),
         blk['l2']['w'].astype(BF16), blk['l2']['b'].reshape(1, c)),
        [_const_spec((c, c)), _const_spec((1, c))] * 2,
        c)
    return out.reshape(orig)


# ---------------------------------------------------------------------------
# fused IPA attention core (query-tiled, heads batched, bias fused in-kernel)
# ---------------------------------------------------------------------------
def _ipa_attn_kernel(qf_ref, kf_ref, vv_ref, mb_ref, z_ref, wbt_ref,
                     ocat_ref, opair_ref):
    H = qf_ref.shape[1]
    TQ = qf_ref.shape[2]

    dn_qk = (((2,), (2,)), ((0,), (0,)))   # contract minor feature dim, batch lead
    dn_av = (((2,), (1,)), ((0,), (0,)))   # contract key dim, batch lead

    qf = qf_ref[0]                          # [H, tq, C+3Pq+1]  bf16
    kf = kf_ref[0]                          # [H, N,  C+3Pq+1]  bf16
    z3 = z_ref[0]                           # [tq, N, Cz]       bf16

    # scalar + point logits in ONE MXU pass; the 1/sqrt(3C) scale, the 2x on the
    # point cross term and the -|k_pts'|^2 term are folded into the qf/kf
    # features in the wrapper (the per-query |q_pts'|^2 term cancels in softmax)
    logits = lax.dot_general(qf, kf, dn_qk, preferred_element_type=jnp.float32)

    # pair bias fused in-kernel from the resident z tile:  z @ (w_b * sqrt(1/3)).
    # The linear_b bias is constant along keys -> cancels in softmax -> dropped.
    wbt_b = jnp.broadcast_to(wbt_ref[...][None, :, :], (TQ,) + wbt_ref.shape)
    bias = lax.dot_general(wbt_b, z3, dn_qk,
                           preferred_element_type=jnp.float32)      # [tq, H, N]
    bias = jnp.stack([bias[:, h, :] for h in range(H)], axis=0)     # [H, tq, N]

    logits = logits + bias + mb_ref[0][None, :, :]

    # softmax over keys (EUP reciprocal frees VALU slots)
    amax = jnp.max(logits, axis=-1, keepdims=True)
    e = jnp.exp(logits - amax)
    a = e * pl.reciprocal(jnp.sum(e, axis=-1, keepdims=True), approx=True)
    ab = a.astype(BF16)                                              # [H, tq, N]

    # one MXU pass for o and o_pt (v | v_pts packed per head in the wrapper)
    ocat_ref[0] = lax.dot_general(ab, vv_ref[0], dn_av,
                                  preferred_element_type=jnp.float32)   # [H,tq,Fv]

    # o_pair: contract all heads against the resident z tile, batched over queries
    at = jnp.stack([ab[h] for h in range(H)], axis=1)                # [tq, H, N]
    opair_ref[0] = lax.dot_general(at, z3, dn_av,
                                   preferred_element_type=jnp.float32)  # [tq,H,Cz]


def ipa_attention_pallas(qf, kf, vv, mask_bias, z, wbt):
    B, H, N, Fq = qf.shape
    Fv = vv.shape[-1]
    Cz = z.shape[-1]
    # per query-row resident bytes (dominated by the bf16 z tile at real sizes)
    row_bytes = N * Cz * 2 + N * 2 + H * (Fq * 2 + Fv * 4 + Cz * 4)
    tq = _pick_tile(N, row_bytes)

    return pl.pallas_call(
        _ipa_attn_kernel,
        grid=(B, N // tq),
        in_specs=[
            pl.BlockSpec((1, H, tq, Fq), lambda b, i: (b, 0, i, 0)),
            pl.BlockSpec((1, H, N, Fq), lambda b, i: (b, 0, 0, 0)),
            pl.BlockSpec((1, H, N, Fv), lambda b, i: (b, 0, 0, 0)),
            pl.BlockSpec((1, tq, N), lambda b, i: (b, i, 0)),
            pl.BlockSpec((1, tq, N, Cz), lambda b, i: (b, i, 0, 0)),
            pl.BlockSpec((H, Cz), lambda b, i: (0, 0)),
        ],
        out_specs=[
            pl.BlockSpec((1, H, tq, Fv), lambda b, i: (b, 0, i, 0)),
            pl.BlockSpec((1, tq, H, Cz), lambda b, i: (b, i, 0, 0)),
        ],
        out_shape=(
            jax.ShapeDtypeStruct((B, H, N, Fv), jnp.float32),
            jax.ShapeDtypeStruct((B, N, H, Cz), jnp.float32),
        ),
        compiler_params=pltpu.CompilerParams(
            dimension_semantics=("parallel", "parallel"),
            vmem_limit_bytes=VMEM_LIMIT),
    )(qf, kf, vv, mask_bias, z, wbt)


# ---------------------------------------------------------------------------
# fused EdgeTransition kernel (trunk + final + LN + mask; no concat temp)
# ---------------------------------------------------------------------------
def _edge_transition_kernel(edge_ref, row1_ref, col1_ref, rowf_ref, colf_ref,
                            mask_ref, w1e, w2, b2, wf, wfe, g_ref, lb_ref,
                            o_ref, *, eps):
    ti, N, Cz = edge_ref.shape[1], edge_ref.shape[2], edge_ref.shape[3]
    hd = w2.shape[0]

    e3 = edge_ref[0]                                   # [ti, N, Cz] bf16
    e2 = e3.reshape(ti * N, Cz)

    # trunk layer 1: concat([edge, node_i, node_j]) @ W1 decomposed into the
    # edge part (in-kernel) + grid-invariant node_i / node_j parts (precomputed)
    h = jnp.dot(e2, w1e[...], preferred_element_type=jnp.float32)
    h = h.reshape(ti, N, hd) + row1_ref[0][:, None, :] + col1_ref[0][None, :, :]
    h = jnp.maximum(h, 0.0)

    # trunk layer 2
    h = jnp.dot(h.reshape(ti * N, hd).astype(BF16), w2[...],
                preferred_element_type=jnp.float32) + b2[...]
    h = jnp.maximum(h, 0.0)

    # final layer on (trunk_out + h0); the h0 @ Wf residual path is decomposed
    # the same way (edge part in-kernel, node parts precomputed in the wrapper)
    y = jnp.dot(h.astype(BF16), wf[...], preferred_element_type=jnp.float32)
    y = y + jnp.dot(e2, wfe[...], preferred_element_type=jnp.float32)
    y = y.reshape(ti, N, Cz) + rowf_ref[0][:, None, :] + colf_ref[0][None, :, :]

    mu = jnp.mean(y, axis=-1, keepdims=True)
    var = jnp.mean(jnp.square(y - mu), axis=-1, keepdims=True)
    y = (y - mu) * lax.rsqrt(var + eps) * g_ref[...] + lb_ref[...]

    o_ref[0] = (y * mask_ref[0][:, :, None]).astype(o_ref.dtype)


def edge_transition_forward(p, node_emb, edge_emb, pair_mask_bf):
    B, N, _ = node_emb.shape
    Cz = edge_emb.shape[-1]
    node_small = linear_pallas(node_emb, p['init']['w'], p['init']['b'])   # [B,N,be]
    be = node_small.shape[-1]
    hd = Cz + 2 * be

    w1, b1 = p['trunk'][0]['w'], p['trunk'][0]['b']
    w2, b2 = p['trunk'][1]['w'], p['trunk'][1]['b']
    wf, bf = p['final']['w'], p['final']['b']

    # grid-invariant node contributions (O(N) work, hoisted out of the N^2 kernel)
    row1 = node_small @ w1[Cz:Cz + be] + b1            # [B, N, hd]
    col1 = node_small @ w1[Cz + be:]                    # [B, N, hd]
    rowf = node_small @ wf[Cz:Cz + be] + bf             # [B, N, Cz]
    colf = node_small @ wf[Cz + be:]                     # [B, N, Cz]

    row_bytes = 2 * N * Cz * 2 + 2 * (hd + Cz) * 4 + N * 2
    ti = _pick_tile(N, row_bytes)

    def cspec(shape):
        return pl.BlockSpec(shape, lambda b, i: (0,) * len(shape))

    return pl.pallas_call(
        functools.partial(_edge_transition_kernel, eps=LN_EPS),
        grid=(B, N // ti),
        in_specs=[
            pl.BlockSpec((1, ti, N, Cz), lambda b, i: (b, i, 0, 0)),
            pl.BlockSpec((1, ti, hd), lambda b, i: (b, i, 0)),
            pl.BlockSpec((1, N, hd), lambda b, i: (b, 0, 0)),
            pl.BlockSpec((1, ti, Cz), lambda b, i: (b, i, 0)),
            pl.BlockSpec((1, N, Cz), lambda b, i: (b, 0, 0)),
            pl.BlockSpec((1, ti, N), lambda b, i: (b, i, 0)),
            cspec((Cz, hd)), cspec((hd, hd)), cspec((1, hd)),
            cspec((hd, Cz)), cspec((Cz, Cz)),
            cspec((1, Cz)), cspec((1, Cz)),
        ],
        out_specs=pl.BlockSpec((1, ti, N, Cz), lambda b, i: (b, i, 0, 0)),
        out_shape=jax.ShapeDtypeStruct((B, N, N, Cz), BF16),
        compiler_params=pltpu.CompilerParams(
            dimension_semantics=("parallel", "parallel"),
            vmem_limit_bytes=VMEM_LIMIT),
    )(edge_emb, row1, col1, rowf, colf, pair_mask_bf,
      w1[:Cz].astype(BF16), w2.astype(BF16), b2.reshape(1, hd),
      wf.astype(BF16), wf[:Cz].astype(BF16),
      p['ln']['g'].reshape(1, Cz), p['ln']['b'].reshape(1, Cz))


# ---------------------------------------------------------------------------
# Rigid helper (explicit rot [B,N,3,3] + trans [B,N,3] representation)
# ---------------------------------------------------------------------------
def rigid_apply(rot, trans, pts):
    # pts: [B, N, M, 3];  R x + t
    return jnp.einsum('bnij,bnmj->bnmi', rot, pts) + trans[:, :, None, :]


# ---------------------------------------------------------------------------
# InvariantPointAttention forward (returns the pre-out-linear concat)
# ---------------------------------------------------------------------------
def ipa_forward(p, cfg, s, z_bf, rot, trans, mask_bias):
    B, N, _ = s.shape
    H, C = cfg['no_heads'], cfg['c_hidden']
    Pq, Pv = cfg['no_qk_points'], cfg['no_v_points']
    Cz = z_bf.shape[-1]

    # --- single fused projection GEMM for q / kv / q_pts / kv_pts ---
    w_cat = jnp.concatenate([p['q']['w'], p['kv']['w'],
                             p['q_pts']['w'], p['kv_pts']['w']], axis=1)
    b_cat = jnp.concatenate([p['q']['b'], p['kv']['b'],
                             p['q_pts']['b'], p['kv_pts']['b']], axis=0)
    proj = linear_pallas(s, w_cat, b_cat)

    d_q, d_kv, d_qp = H * C, 2 * H * C, H * Pq * 3
    q = proj[..., :d_q].reshape(B, N, H, C)
    kv = proj[..., d_q:d_q + d_kv].reshape(B, N, H, 2 * C)
    k, v = kv[..., :C], kv[..., C:]
    q_pts_f = proj[..., d_q + d_kv:d_q + d_kv + d_qp]
    kv_pts_f = proj[..., d_q + d_kv + d_qp:]

    q_pts = q_pts_f.reshape(B, N, 3, H * Pq).transpose(0, 1, 3, 2)        # [B,N,H*Pq,3]
    q_pts = rigid_apply(rot, trans, q_pts).reshape(B, N, H, Pq, 3)
    kv_pts = kv_pts_f.reshape(B, N, 3, H * (Pq + Pv)).transpose(0, 1, 3, 2)
    kv_pts = rigid_apply(rot, trans, kv_pts).reshape(B, N, H, Pq + Pv, 3)
    k_pts, v_pts = kv_pts[..., :Pq, :], kv_pts[..., Pq:, :]

    # head weights folded into the qk points so  -0.5*hw*|q-k|^2 = 2 q'.k' - |k'|^2
    # (the per-query |q'|^2 term is shift-invariant under softmax and dropped)
    hw = jax.nn.softplus(p['head_weights']) * math.sqrt(1.0 / (3.0 * (Pq * 9.0 / 2.0)))
    pscale = jnp.sqrt(0.5 * hw)
    qs = q_pts * pscale[None, None, :, None, None]
    ks = k_pts * pscale[None, None, :, None, None]
    ksq = jnp.sum(ks * ks, axis=(-1, -2))                                 # [B,N,H]

    scale_q = math.sqrt(1.0 / (3.0 * C))
    ones = jnp.ones((B, N, H, 1), jnp.float32)
    qf = jnp.concatenate([q * scale_q, 2.0 * qs.reshape(B, N, H, Pq * 3), ones], axis=-1)
    kf = jnp.concatenate([k, ks.reshape(B, N, H, Pq * 3), -ksq[..., None]], axis=-1)
    vv = jnp.concatenate([v, v_pts.reshape(B, N, H, Pv * 3)], axis=-1)

    qf = jnp.transpose(qf, (0, 2, 1, 3)).astype(BF16)                      # [B,H,N,*]
    kf = jnp.transpose(kf, (0, 2, 1, 3)).astype(BF16)
    vv = jnp.transpose(vv, (0, 2, 1, 3)).astype(BF16)
    wbt = (p['b']['w'].T * math.sqrt(1.0 / 3.0)).astype(BF16)              # [H, Cz]

    o_cat, o_pair = ipa_attention_pallas(qf, kf, vv, mask_bias, z_bf, wbt)

    o = jnp.transpose(o_cat[..., :C], (0, 2, 1, 3)).reshape(B, N, H * C)
    o_pt = jnp.transpose(o_cat[..., C:], (0, 2, 1, 3)).reshape(B, N, H, Pv, 3)
    # TODO(synk): invert_rot_mul_vec is an external helper; assumed rotation-only
    # inverse (R^T x), following the function name.
    o_pt = jnp.einsum('bnji,bnhpj->bnhpi', rot, o_pt)
    o_pt_norm = jnp.sqrt(jnp.sum(o_pt ** 2, axis=-1) + cfg['eps']).reshape(B, N, H * Pv)
    o_pt_flat = o_pt.reshape(B, N, H * Pv, 3)
    o_pair = o_pair.reshape(B, N, H * Cz)

    return jnp.concatenate(
        [o, o_pt_flat[..., 0], o_pt_flat[..., 1], o_pt_flat[..., 2], o_pt_norm, o_pair],
        axis=-1)


# ---------------------------------------------------------------------------
# AngleResnet / StructureBlock / StructureUpdateModule
# ---------------------------------------------------------------------------
def angle_resnet_forward(p, cfg, s, s_initial):
    B, N, c = s.shape
    nr = cfg['no_rigids']
    s_i = s_initial.reshape(B, -1, c * nr)
    s_r = s.reshape(B, -1, c * nr)
    s_i = linear_pallas(s_i, p['initial']['w'], p['initial']['b'], pre_relu=True)
    s_r = linear_pallas(s_r, p['in']['w'], p['in']['b'], pre_relu=True)
    s_r = s_r + s_i
    for blk in p['blocks']:
        s_r = resnet_block_pallas(s_r, blk)
    s_r = linear_pallas(s_r, p['out']['w'], p['out']['b'], pre_relu=True)
    s_r = s_r.reshape(s_r.shape[:-1] + (-1, 2))
    denom = jnp.sqrt(jnp.maximum(jnp.sum(s_r ** 2, axis=-1, keepdims=True), cfg['epsilon']))
    return s_r / denom


def structure_block_forward(p, cfg, init_node_emb, node_emb, pair_bf, rot, trans,
                            mask_bias, pair_mask_bf):
    ipa_cat = ipa_forward(p['ipa'], cfg, node_emb, pair_bf, rot, trans, mask_bias)
    node_emb = node_update_forward(p, node_emb, ipa_cat)
    chi = angle_resnet_forward(p['angle'], cfg, node_emb, init_node_emb)
    pair_bf = edge_transition_forward(p['edge'], node_emb, pair_bf, pair_mask_bf)
    return node_emb, pair_bf, chi


def structure_update_forward(params, seq_idx, backbone_coords, init_node_emb,
                             pair_emb, rot, trans, pair_mask, *, cfg):
    del seq_idx, backbone_coords  # only consumed by the external torsion_to_frame
    # Pair-sized tensors are streamed in bf16 (halves the dominant N^2 HBM
    # traffic); all accumulation and LayerNorm math stays in f32.
    pair_bf = pair_emb.astype(BF16)
    pair_mask_bf = pair_mask.astype(BF16)
    mask_bias = (INF * (pair_mask - 1.0)).astype(BF16)
    node_emb = init_node_emb
    for bp in params['blocks']:
        node_emb, pair_bf, chi = structure_block_forward(
            bp, cfg, init_node_emb, node_emb, pair_bf, rot, trans,
            mask_bias, pair_mask_bf)
        # TODO(synk): structure_build.torsion_to_frame is an external dependency not
        # provided with the module; rigids are kept fixed across blocks instead of
        # being rebuilt from the predicted chi angles.
    return node_emb


# ---------------------------------------------------------------------------
# Deterministic parameter initialization
# ---------------------------------------------------------------------------
def init_linear_params(key, fan_in, fan_out):
    kw, kb = jax.random.split(key)
    w = jax.random.normal(kw, (fan_in, fan_out), jnp.float32) / math.sqrt(fan_in)
    b = 0.01 * jax.random.normal(kb, (fan_out,), jnp.float32)
    return {'w': w, 'b': b}


def init_ln(dim):
    return {'g': jnp.ones((dim,), jnp.float32), 'b': jnp.zeros((dim,), jnp.float32)}


def init_block_params(key, cfg):
    c_n, c_z = cfg['c_n'], cfg['c_z']
    H, C = cfg['no_heads'], cfg['c_hidden']
    Pq, Pv = cfg['no_qk_points'], cfg['no_v_points']
    cr = cfg['c_resnet']
    keys = list(jax.random.split(key, 32))
    it = iter(keys)
    ipa = {
        'q': init_linear_params(next(it), c_n, H * C),
        'kv': init_linear_params(next(it), c_n, 2 * H * C),
        'q_pts': init_linear_params(next(it), c_n, H * Pq * 3),
        'kv_pts': init_linear_params(next(it), c_n, H * (Pq + Pv) * 3),
        'b': init_linear_params(next(it), c_z, H),
        'head_weights': jnp.full((H,), 0.541324854612918, jnp.float32),  # softplus^-1(1)
        'out': init_linear_params(next(it), H * (c_z + C + Pv * 4), c_n),
    }
    transition = {
        'l1': init_linear_params(next(it), c_n, c_n),
        'l2': init_linear_params(next(it), c_n, c_n),
        'l3': init_linear_params(next(it), c_n, c_n),
        'ln': init_ln(c_n),
    }
    angle = {
        'in': init_linear_params(next(it), c_n * cfg['no_rigids'], cr),
        'initial': init_linear_params(next(it), c_n * cfg['no_rigids'], cr),
        'blocks': [{'l1': init_linear_params(next(it), cr, cr),
                    'l2': init_linear_params(next(it), cr, cr)}
                   for _ in range(cfg['no_resnet_blocks'])],
        'out': init_linear_params(next(it), cr, cfg['no_angles'] * 2),
    }
    hidden = (c_n // 2) * 2 + c_z
    edge = {
        'init': init_linear_params(next(it), c_n, c_n // 2),
        'trunk': [init_linear_params(next(it), hidden, hidden) for _ in range(2)],
        'final': init_linear_params(next(it), hidden, c_z),
        'ln': init_ln(c_z),
    }
    return {'ipa': ipa, 'ipa_ln': init_ln(c_n), 'transition': transition,
            'angle': angle, 'edge': edge}


def quat_to_rot(q):
    q = q / jnp.linalg.norm(q, axis=-1, keepdims=True)
    w, x, y, z = q[..., 0], q[..., 1], q[..., 2], q[..., 3]
    r0 = jnp.stack([1 - 2 * (y * y + z * z), 2 * (x * y - w * z), 2 * (x * z + w * y)], axis=-1)
    r1 = jnp.stack([2 * (x * y + w * z), 1 - 2 * (x * x + z * z), 2 * (y * z - w * x)], axis=-1)
    r2 = jnp.stack([2 * (x * z - w * y), 2 * (y * z + w * x), 1 - 2 * (x * x + y * y)], axis=-1)
    return jnp.stack([r0, r1, r2], axis=-2)


# ---------------------------------------------------------------------------
if __name__ == "__main__":
    cfg = dict(
        no_blocks=2, c_n=32, c_z=16, c_hidden=16, no_heads=4,
        no_qk_points=4, no_v_points=8, c_resnet=32, no_resnet_blocks=2,
        no_angles=4, no_rigids=4, epsilon=1e-8, eps=1e-8,
    )
    B, N_res = 2, 2
    N = N_res * cfg['no_rigids']   # N_rigid = 8

    key = jax.random.PRNGKey(0)
    k_par, k_node, k_pair, k_quat, k_trans = jax.random.split(key, 5)

    block_keys = jax.random.split(k_par, cfg['no_blocks'])
    params = {'blocks': [init_block_params(bk, cfg) for bk in block_keys]}

    init_node_emb = jax.random.normal(k_node, (B, N, cfg['c_n']), jnp.float32)
    pair_emb = jax.random.normal(k_pair, (B, N, N, cfg['c_z']), jnp.float32)
    rot = quat_to_rot(jax.random.normal(k_quat, (B, N, 4), jnp.float32))
    trans = jax.random.normal(k_trans, (B, N, 3), jnp.float32)
    pair_mask = jnp.ones((B, N, N), jnp.float32)
    seq_idx = jnp.broadcast_to(jnp.arange(N_res, dtype=jnp.int32)[None, :], (B, N_res))
    backbone_coords = jnp.zeros((B, N_res, 4, 3), jnp.float32)

    fwd = jax.jit(functools.partial(structure_update_forward, cfg=cfg))
    out = fwd(params, seq_idx, backbone_coords, init_node_emb, pair_emb,
              rot, trans, pair_mask)
    out = jax.block_until_ready(out)

    assert out.shape == (B, N, cfg['c_n'])
    assert bool(jnp.all(jnp.isfinite(out)))
    print("KERNEL_OK")
</pallas_src>

<mosaic_0001>
module attributes {stable_mosaic.version = 11 : i64} {
  func.func @_linear_kernel(%arg0: i32, %arg1: memref<16x32xf32, #tpu.memory_space<vmem>>, %arg2: memref<32x384xbf16, #tpu.memory_space<vmem>>, %arg3: memref<1x384xf32, #tpu.memory_space<vmem>>, %arg4: memref<16x384xf32, #tpu.memory_space<vmem>>) attributes {dimension_semantics = [#tpu.dimension_semantics<parallel>], iteration_bounds = array<i64: 1>, scalar_prefetch = 0 : i64, scratch_operands = 0 : i64, tpu.core_type = #tpu.core_type<tc>, window_params = [{transform_indices = @transform_0, window_bounds = array<i64: 16, 32>}, {pipeline_mode = #tpu.pipeline_mode<synchronous>, transform_indices = @transform_1, window_bounds = array<i64: 32, 384>}, {pipeline_mode = #tpu.pipeline_mode<synchronous>, transform_indices = @transform_2, window_bounds = array<i64: 1, 384>}, {transform_indices = @transform_3, window_bounds = array<i64: 16, 384>}]} {
    %c0 = arith.constant 0 : index
    %c0_0 = arith.constant 0 : index
    %0 = vector.load %arg1[%c0, %c0_0] : memref<16x32xf32, #tpu.memory_space<vmem>>, vector<16x32xf32>
    %1 = arith.truncf %0 : vector<16x32xf32> to vector<16x32xbf16>
    %c0_1 = arith.constant 0 : index
    %c0_2 = arith.constant 0 : index
    %2 = vector.load %arg2[%c0_1, %c0_2] : memref<32x384xbf16, #tpu.memory_space<vmem>>, vector<32x384xbf16>
    %cst = arith.constant dense<0.000000e+00> : vector<16x384xf32>
    %3 = tpu.matmul %1, %2, %cst {dimension_numbers = #tpu.dot_dimension_numbers<[1], [0], [0], [1], [0, 0, 1, 1], [], []>} : vector<16x32xbf16>, vector<32x384xbf16>, vector<16x384xf32> -> vector<16x384xf32>
    %c0_3 = arith.constant 0 : index
    %c0_4 = arith.constant 0 : index
    %4 = vector.load %arg3[%c0_3, %c0_4] : memref<1x384xf32, #tpu.memory_space<vmem>>, vector<1x384xf32>
    %5 = vector.broadcast %4 : vector<1x384xf32> to vector<16x384xf32>
    %6 = arith.addf %3, %5 : vector<16x384xf32>
    %c0_5 = arith.constant 0 : index
    %c0_6 = arith.constant 0 : index
    %7 = vector.load %arg4[%c0_5, %c0_6] : memref<16x384xf32, #tpu.memory_space<vmem>>, vector<16x384xf32>
    tpu.vector_store %arg4[%c0_5, %c0_6], %6 {strides = array<i32>} : memref<16x384xf32, #tpu.memory_space<vmem>>, vector<16x384xf32>,
    return
  }
  func.func @transform_0(%arg0: i32) -> (i32, i32) {
    %c0_i32 = arith.constant 0 : i32
    %c0_i32_0 = arith.constant 0 : i32
    return %arg0, %c0_i32 : i32, i32
  }
  func.func @transform_1(%arg0: i32) -> (i32, i32) {
    %c0_i32 = arith.constant 0 : i32
    %c0_i32_0 = arith.constant 0 : i32
    %c0_i32_1 = arith.constant 0 : i32
    return %c0_i32, %c0_i32_0 : i32, i32
  }
  func.func @transform_2(%arg0: i32) -> (i32, i32) {
    %c0_i32 = arith.constant 0 : i32
    %c0_i32_0 = arith.constant 0 : i32
    %c0_i32_1 = arith.constant 0 : i32
    return %c0_i32, %c0_i32_0 : i32, i32
  }
  func.func @transform_3(%arg0: i32) -> (i32, i32) {
    %c0_i32 = arith.constant 0 : i32
    %c0_i32_0 = arith.constant 0 : i32
    return %arg0, %c0_i32 : i32, i32
  }
}

module attributes {stable_mosaic.version = 11 : i64} {
  func.func @_ipa_attn_kernel(%arg0: i32, %arg1: i32, %arg2: memref<1x4x8x29xbf16, #tpu.memory_space<vmem>>, %arg3: memref<1x4x8x29xbf16, #tpu.memory_space<vmem>>, %arg4: memref<1x4x8x40xbf16, #tpu.memory_space<vmem>>, %arg5: memref<1x8x8xbf16, #tpu.memory_space<vmem>>, %arg6: memref<1x8x8x16xbf16, #tpu.memory_space<vmem>>, %arg7: memref<4x16xbf16, #tpu.memory_space<vmem>>, %arg8: memref<1x4x8x40xf32, #tpu.memory_space<vmem>>, %arg9: memref<1x8x4x16xf32, #tpu.memory_space<vmem>>) attributes {dimension_semantics = [#tpu.dimension_semantics<parallel>, #tpu.dimension_semantics<parallel>], iteration_bounds = array<i64: 2, 1>, scalar_prefetch = 0 : i64, scratch_operands = 0 : i64, tpu.core_type = #tpu.core_type<tc>, window_params = [{transform_indices = @transform_0, window_bounds = array<i64: 1, 4, 8, 29>}, {transform_indices = @transform_1, window_bounds = array<i64: 1, 4, 8, 29>}, {transform_indices = @transform_2, window_bounds = array<i64: 1, 4, 8, 40>}, {transform_indices = @transform_3, window_bounds = array<i64: 1, 8, 8>}, {transform_indices = @transform_4, window_bounds = array<i64: 1, 8, 8, 16>}, {pipeline_mode = #tpu.pipeline_mode<synchronous>, transform_indices = @transform_5, window_bounds = array<i64: 4, 16>}, {transform_indices = @transform_6, window_bounds = array<i64: 1, 4, 8, 40>}, {transform_indices = @transform_7, window_bounds = array<i64: 1, 8, 4, 16>}]} {
    %c0 = arith.constant 0 : index
    %c0_0 = arith.constant 0 : index
    %c0_1 = arith.constant 0 : index
    %c0_2 = arith.constant 0 : index
    %0 = vector.load %arg2[%c0, %c0_0, %c0_1, %c0_2] : memref<1x4x8x29xbf16, #tpu.memory_space<vmem>>, vector<1x4x8x29xbf16>
    %1 = vector.shape_cast %0 : vector<1x4x8x29xbf16> to vector<4x8x29xbf16>
    %c0_3 = arith.constant 0 : index
    %c0_4 = arith.constant 0 : index
    %c0_5 = arith.constant 0 : index
    %c0_6 = arith.constant 0 : index
    %2 = vector.load %arg3[%c0_3, %c0_4, %c0_5, %c0_6] : memref<1x4x8x29xbf16, #tpu.memory_space<vmem>>, vector<1x4x8x29xbf16>
    %3 = vector.shape_cast %2 : vector<1x4x8x29xbf16> to vector<4x8x29xbf16>
    %c0_7 = arith.constant 0 : index
    %c0_8 = arith.constant 0 : index
    %c0_9 = arith.constant 0 : index
    %c0_10 = arith.constant 0 : index
    %4 = vector.load %arg6[%c0_7, %c0_8, %c0_9, %c0_10] : memref<1x8x8x16xbf16, #tpu.memory_space<vmem>>, vector<1x8x8x16xbf16>
    %5 = vector.shape_cast %4 : vector<1x8x8x16xbf16> to vector<8x8x16xbf16>
    %cst = arith.constant dense<0.000000e+00> : vector<4x8x8xf32>
    %6 = tpu.matmul %1, %3, %cst {dimension_numbers = #tpu.dot_dimension_numbers<[2], [2], [1], [1], [0, 0, 0, 1, 1, 1], [0], [0]>} : vector<4x8x29xbf16>, vector<4x8x29xbf16>, vector<4x8x8xf32> -> vector<4x8x8xf32>
    %c0_11 = arith.constant 0 : index
    %c0_12 = arith.constant 0 : index
    %7 = vector.load %arg7[%c0_11, %c0_12] : memref<4x16xbf16, #tpu.memory_space<vmem>>, vector<4x16xbf16>
    %8 = vector.shape_cast %7 : vector<4x16xbf16> to vector<1x4x16xbf16>
    %9 = vector.shape_cast %8 : vector<1x4x16xbf16> to vector<1x4x16xbf16>
    %10 = vector.broadcast %9 : vector<1x4x16xbf16> to vector<8x4x16xbf16>
    %cst_13 = arith.constant dense<0.000000e+00> : vector<8x4x8xf32>
    %11 = tpu.matmul %10, %5, %cst_13 {dimension_numbers = #tpu.dot_dimension_numbers<[2], [2], [1], [1], [0, 0, 0, 1, 1, 1], [0], [0]>} : vector<8x4x16xbf16>, vector<8x8x16xbf16>, vector<8x4x8xf32> -> vector<8x4x8xf32>
    %12 = vector.extract_strided_slice %11 {offsets = [0, 0, 0], sizes = [8, 1, 8], strides = [1, 1, 1]} : vector<8x4x8xf32> to vector<8x1x8xf32>
    %13 = vector.shape_cast %12 : vector<8x1x8xf32> to vector<8x8xf32>
    %14 = vector.extract_strided_slice %11 {offsets = [0, 1, 0], sizes = [8, 1, 8], strides = [1, 1, 1]} : vector<8x4x8xf32> to vector<8x1x8xf32>
    %15 = vector.shape_cast %14 : vector<8x1x8xf32> to vector<8x8xf32>
    %16 = vector.extract_strided_slice %11 {offsets = [0, 2, 0], sizes = [8, 1, 8], strides = [1, 1, 1]} : vector<8x4x8xf32> to vector<8x1x8xf32>
    %17 = vector.shape_cast %16 : vector<8x1x8xf32> to vector<8x8xf32>
    %18 = vector.extract_strided_slice %11 {offsets = [0, 3, 0], sizes = [8, 1, 8], strides = [1, 1, 1]} : vector<8x4x8xf32> to vector<8x1x8xf32>
    %19 = vector.shape_cast %18 : vector<8x1x8xf32> to vector<8x8xf32>
    %20 = vector.shape_cast %13 : vector<8x8xf32> to vector<1x8x8xf32>
    %21 = vector.shape_cast %15 : vector<8x8xf32> to vector<1x8x8xf32>
    %22 = vector.shape_cast %17 : vector<8x8xf32> to vector<1x8x8xf32>
    %23 = vector.shape_cast %19 : vector<8x8xf32> to vector<1x8x8xf32>
    %24 = tpu.concatenate %20, %21, %22, %23 in 0 : vector<1x8x8xf32>, vector<1x8x8xf32>, vector<1x8x8xf32>, vector<1x8x8xf32> -> vector<4x8x8xf32>
    %25 = arith.addf %6, %24 : vector<4x8x8xf32>
    %c0_14 = arith.constant 0 : index
    %c0_15 = arith.constant 0 : index
    %c0_16 = arith.constant 0 : index
    %26 = vector.load %arg5[%c0_14, %c0_15, %c0_16] : memref<1x8x8xbf16, #tpu.memory_space<vmem>>, vector<1x8x8xbf16>
    %27 = vector.shape_cast %26 : vector<1x8x8xbf16> to vector<8x8xbf16>
    %28 = vector.shape_cast %27 : vector<8x8xbf16> to vector<1x8x8xbf16>
    %29 = arith.extf %28 : vector<1x8x8xbf16> to vector<1x8x8xf32>
    %30 = vector.broadcast %29 : vector<1x8x8xf32> to vector<4x8x8xf32>
    %31 = arith.addf %25, %30 : vector<4x8x8xf32>
    %cst_17 = arith.constant dense<0xFF800000> : vector<4x8xf32>
    %32 = vector.multi_reduction <maximumf>, %31, %cst_17 [2] : vector<4x8x8xf32> to vector<4x8xf32>
    %33 = vector.shape_cast %32 : vector<4x8xf32> to vector<4x8x1xf32>
    %34 = vector.broadcast %33 : vector<4x8x1xf32> to vector<4x8x8xf32>
    %35 = arith.subf %31, %34 : vector<4x8x8xf32>
    %36 = math.exp %35 : vector<4x8x8xf32>
    %cst_18 = arith.constant dense<0.000000e+00> : vector<4x8xf32>
    %37 = vector.multi_reduction <add>, %36, %cst_18 [2] : vector<4x8x8xf32> to vector<4x8xf32>
    %38 = vector.shape_cast %37 : vector<4x8xf32> to vector<4x8x1xf32>
    %39 = tpu.reciprocal %38 {approx = true} : vector<4x8x1xf32> -> vector<4x8x1xf32>
    %40 = vector.broadcast %39 : vector<4x8x1xf32> to vector<4x8x8xf32>
    %41 = arith.mulf %36, %40 : vector<4x8x8xf32>
    %42 = arith.truncf %41 : vector<4x8x8xf32> to vector<4x8x8xbf16>
    %c0_19 = arith.constant 0 : index
    %c0_20 = arith.constant 0 : index
    %c0_21 = arith.constant 0 : index
    %c0_22 = arith.constant 0 : index
    %43 = vector.load %arg4[%c0_19, %c0_20, %c0_21, %c0_22] : memref<1x4x8x40xbf16, #tpu.memory_space<vmem>>, vector<1x4x8x40xbf16>
    %44 = vector.shape_cast %43 : vector<1x4x8x40xbf16> to vector<4x8x40xbf16>
    %cst_23 = arith.constant dense<0.000000e+00> : vector<4x8x40xf32>
    %45 = tpu.matmul %42, %44, %cst_23 {dimension_numbers = #tpu.dot_dimension_numbers<[2], [1], [1], [2], [0, 0, 0, 1, 1, 2], [0], [0]>} : vector<4x8x8xbf16>, vector<4x8x40xbf16>, vector<4x8x40xf32> -> vector<4x8x40xf32>
    %c0_24 = arith.constant 0 : index
    %c0_25 = arith.constant 0 : index
    %c0_26 = arith.constant 0 : index
    %c0_27 = arith.constant 0 : index
    %46 = vector.load %arg8[%c0_24, %c0_25, %c0_26, %c0_27] : memref<1x4x8x40xf32, #tpu.memory_space<vmem>>, vector<1x4x8x40xf32>
    %47 = vector.shape_cast %46 : vector<1x4x8x40xf32> to vector<4x8x40xf32>
    %48 = vector.shape_cast %45 : vector<4x8x40xf32> to vector<1x4x8x40xf32>
    tpu.vector_store %arg8[%c0_24, %c0_25, %c0_26, %c0_27], %48 {strides = array<i32>} : memref<1x4x8x40xf32, #tpu.memory_space<vmem>>, vector<1x4x8x40xf32>,
    %49 = vector.extract_strided_slice %42 {offsets = [0, 0, 0], sizes = [1, 8, 8], strides = [1, 1, 1]} : vector<4x8x8xbf16> to vector<1x8x8xbf16>
    %50 = vector.shape_cast %49 : vector<1x8x8xbf16> to vector<8x8xbf16>
    %51 = vector.extract_strided_slice %42 {offsets = [1, 0, 0], sizes = [1, 8, 8], strides = [1, 1, 1]} : vector<4x8x8xbf16> to vector<1x8x8xbf16>
    %52 = vector.shape_cast %51 : vector<1x8x8xbf16> to vector<8x8xbf16>
    %53 = vector.extract_strided_slice %42 {offsets = [2, 0, 0], sizes = [1, 8, 8], strides = [1, 1, 1]} : vector<4x8x8xbf16> to vector<1x8x8xbf16>
    %54 = vector.shape_cast %53 : vector<1x8x8xbf16> to vector<8x8xbf16>
    %55 = vector.extract_strided_slice %42 {offsets = [3, 0, 0], sizes = [1, 8, 8], strides = [1, 1, 1]} : vector<4x8x8xbf16> to vector<1x8x8xbf16>
    %56 = vector.shape_cast %55 : vector<1x8x8xbf16> to vector<8x8xbf16>
    %57 = vector.shape_cast %50 : vector<8x8xbf16> to vector<8x1x8xbf16>
    %58 = vector.shape_cast %52 : vector<8x8xbf16> to vector<8x1x8xbf16>
    %59 = vector.shape_cast %54 : vector<8x8xbf16> to vector<8x1x8xbf16>
    %60 = vector.shape_cast %56 : vector<8x8xbf16> to vector<8x1x8xbf16>
    %61 = tpu.concatenate %57, %58, %59, %60 in 1 : vector<8x1x8xbf16>, vector<8x1x8xbf16>, vector<8x1x8xbf16>, vector<8x1x8xbf16> -> vector<8x4x8xbf16>
    %cst_28 = arith.constant dense<0.000000e+00> : vector<8x4x16xf32>
    %62 = tpu.matmul %61, %5, %cst_28 {dimension_numbers = #tpu.dot_dimension_numbers<[2], [1], [1], [2], [0, 0, 0, 1, 1, 2], [0], [0]>} : vector<8x4x8xbf16>, vector<8x8x16xbf16>, vector<8x4x16xf32> -> vector<8x4x16xf32>
    %c0_29 = arith.constant 0 : index
    %c0_30 = arith.constant 0 : index
    %c0_31 = arith.constant 0 : index
    %c0_32 = arith.constant 0 : index
    %63 = vector.load %arg9[%c0_29, %c0_30, %c0_31, %c0_32] : memref<1x8x4x16xf32, #tpu.memory_space<vmem>>, vector<1x8x4x16xf32>
    %64 = vector.shape_cast %63 : vector<1x8x4x16xf32> to vector<8x4x16xf32>
    %65 = vector.shape_cast %62 : vector<8x4x16xf32> to vector<1x8x4x16xf32>
    tpu.vector_store %arg9[%c0_29, %c0_30, %c0_31, %c0_32], %65 {strides = array<i32>} : memref<1x8x4x16xf32, #tpu.memory_space<vmem>>, vector<1x8x4x16xf32>,
    return
  }
  func.func @transform_0(%arg0: i32, %arg1: i32) -> (i32, i32, i32, i32) {
    %c0_i32 = arith.constant 0 : i32
    %c0_i32_0 = arith.constant 0 : i32
    %c0_i32_1 = arith.constant 0 : i32
    return %arg0, %c0_i32, %arg1, %c0_i32_0 : i32, i32, i32, i32
  }
  func.func @transform_1(%arg0: i32, %arg1: i32) -> (i32, i32, i32, i32) {
    %c0_i32 = arith.constant 0 : i32
    %c0_i32_0 = arith.constant 0 : i32
    %c0_i32_1 = arith.constant 0 : i32
    %c0_i32_2 = arith.constant 0 : i32
    return %arg0, %c0_i32, %c0_i32_0, %c0_i32_1 : i32, i32, i32, i32
  }
  func.func @transform_2(%arg0: i32, %arg1: i32) -> (i32, i32, i32, i32) {
    %c0_i32 = arith.constant 0 : i32
    %c0_i32_0 = arith.constant 0 : i32
    %c0_i32_1 = arith.constant 0 : i32
    %c0_i32_2 = arith.constant 0 : i32
    return %arg0, %c0_i32, %c0_i32_0, %c0_i32_1 : i32, i32, i32, i32
  }
  func.func @transform_3(%arg0: i32, %arg1: i32) -> (i32, i32, i32) {
    %c0_i32 = arith.constant 0 : i32
    %c0_i32_0 = arith.constant 0 : i32
    return %arg0, %arg1, %c0_i32 : i32, i32, i32
  }
  func.func @transform_4(%arg0: i32, %arg1: i32) -> (i32, i32, i32, i32) {
    %c0_i32 = arith.constant 0 : i32
    %c0_i32_0 = arith.constant 0 : i32
    %c0_i32_1 = arith.constant 0 : i32
    return %arg0, %arg1, %c0_i32, %c0_i32_0 : i32, i32, i32, i32
  }
  func.func @transform_5(%arg0: i32, %arg1: i32) -> (i32, i32) {
    %c0_i32 = arith.constant 0 : i32
    %c0_i32_0 = arith.constant 0 : i32
    %c0_i32_1 = arith.constant 0 : i32
    return %c0_i32, %c0_i32_0 : i32, i32
  }
  func.func @transform_6(%arg0: i32, %arg1: i32) -> (i32, i32, i32, i32) {
    %c0_i32 = arith.constant 0 : i32
    %c0_i32_0 = arith.constant 0 : i32
    %c0_i32_1 = arith.constant 0 : i32
    return %arg0, %c0_i32, %arg1, %c0_i32_0 : i32, i32, i32, i32
  }
  func.func @transform_7(%arg0: i32, %arg1: i32) -> (i32, i32, i32, i32) {
    %c0_i32 = arith.constant 0 : i32
    %c0_i32_0 = arith.constant 0 : i32
    %c0_i32_1 = arith.constant 0 : i32
    return %arg0, %arg1, %c0_i32, %c0_i32_0 : i32, i32, i32, i32
  }
}

module attributes {stable_mosaic.version = 11 : i64} {
  func.func @_node_update_kernel(%arg0: i32, %arg1: memref<16x256xf32, #tpu.memory_space<vmem>>, %arg2: memref<16x32xf32, #tpu.memory_space<vmem>>, %arg3: memref<256x32xbf16, #tpu.memory_space<vmem>>, %arg4: memref<1x32xf32, #tpu.memory_space<vmem>>, %arg5: memref<1x32xf32, #tpu.memory_space<vmem>>, %arg6: memref<1x32xf32, #tpu.memory_space<vmem>>, %arg7: memref<32x32xbf16, #tpu.memory_space<vmem>>, %arg8: memref<1x32xf32, #tpu.memory_space<vmem>>, %arg9: memref<32x32xbf16, #tpu.memory_space<vmem>>, %arg10: memref<1x32xf32, #tpu.memory_space<vmem>>, %arg11: memref<32x32xbf16, #tpu.memory_space<vmem>>, %arg12: memref<1x32xf32, #tpu.memory_space<vmem>>, %arg13: memref<1x32xf32, #tpu.memory_space<vmem>>, %arg14: memref<1x32xf32, #tpu.memory_space<vmem>>, %arg15: memref<16x32xf32, #tpu.memory_space<vmem>>) attributes {dimension_semantics = [#tpu.dimension_semantics<parallel>], iteration_bounds = array<i64: 1>, scalar_prefetch = 0 : i64, scratch_operands = 0 : i64, tpu.core_type = #tpu.core_type<tc>, window_params = [{transform_indices = @transform_0, window_bounds = array<i64: 16, 256>}, {transform_indices = @transform_1, window_bounds = array<i64: 16, 32>}, {pipeline_mode = #tpu.pipeline_mode<synchronous>, transform_indices = @transform_2, window_bounds = array<i64: 256, 32>}, {pipeline_mode = #tpu.pipeline_mode<synchronous>, transform_indices = @transform_3, window_bounds = array<i64: 1, 32>}, {pipeline_mode = #tpu.pipeline_mode<synchronous>, transform_indices = @transform_4, window_bounds = array<i64: 1, 32>}, {pipeline_mode = #tpu.pipeline_mode<synchronous>, transform_indices = @transform_5, window_bounds = array<i64: 1, 32>}, {pipeline_mode = #tpu.pipeline_mode<synchronous>, transform_indices = @transform_6, window_bounds = array<i64: 32, 32>}, {pipeline_mode = #tpu.pipeline_mode<synchronous>, transform_indices = @transform_7, window_bounds = array<i64: 1, 32>}, {pipeline_mode = #tpu.pipeline_mode<synchronous>, transform_indices = @transform_8, window_bounds = array<i64: 32, 32>}, {pipeline_mode = #tpu.pipeline_mode<synchronous>, transform_indices = @transform_9, window_bounds = array<i64: 1, 32>}, {pipeline_mode = #tpu.pipeline_mode<synchronous>, transform_indices = @transform_10, window_bounds = array<i64: 32, 32>}, {pipeline_mode = #tpu.pipeline_mode<synchronous>, transform_indices = @transform_11, window_bounds = array<i64: 1, 32>}, {pipeline_mode = #tpu.pipeline_mode<synchronous>, transform_indices = @transform_12, window_bounds = array<i64: 1, 32>}, {pipeline_mode = #tpu.pipeline_mode<synchronous>, transform_indices = @transform_13, window_bounds = array<i64: 1, 32>}, {transform_indices = @transform_14, window_bounds = array<i64: 16, 32>}]} {
    %c0 = arith.constant 0 : index
    %c0_0 = arith.constant 0 : index
    %0 = vector.load %arg1[%c0, %c0_0] : memref<16x256xf32, #tpu.memory_space<vmem>>, vector<16x256xf32>
    %1 = arith.truncf %0 : vector<16x256xf32> to vector<16x256xbf16>
    %c0_1 = arith.constant 0 : index
    %c0_2 = arith.constant 0 : index
    %2 = vector.load %arg3[%c0_1, %c0_2] : memref<256x32xbf16, #tpu.memory_space<vmem>>, vector<256x32xbf16>
    %cst = arith.constant dense<0.000000e+00> : vector<16x32xf32>
    %3 = tpu.matmul %1, %2, %cst {dimension_numbers = #tpu.dot_dimension_numbers<[1], [0], [0], [1], [0, 0, 1, 1], [], []>} : vector<16x256xbf16>, vector<256x32xbf16>, vector<16x32xf32> -> vector<16x32xf32>
    %c0_3 = arith.constant 0 : index
    %c0_4 = arith.constant 0 : index
    %4 = vector.load %arg4[%c0_3, %c0_4] : memref<1x32xf32, #tpu.memory_space<vmem>>, vector<1x32xf32>
    %5 = vector.broadcast %4 : vector<1x32xf32> to vector<16x32xf32>
    %6 = arith.addf %3, %5 : vector<16x32xf32>
    %c0_5 = arith.constant 0 : index
    %c0_6 = arith.constant 0 : index
    %7 = vector.load %arg2[%c0_5, %c0_6] : memref<16x32xf32, #tpu.memory_space<vmem>>, vector<16x32xf32>
    %8 = arith.addf %7, %6 : vector<16x32xf32>
    %cst_7 = arith.constant dense<0.000000e+00> : vector<16xf32>
    %9 = vector.multi_reduction <add>, %8, %cst_7 [1] : vector<16x32xf32> to vector<16xf32>
    %10 = vector.shape_cast %9 : vector<16xf32> to vector<16x1xf32>
    %cst_8 = arith.constant 3.200000e+01 : f32
    %11 = vector.broadcast %cst_8 : f32 to vector<16x1xf32>
    %12 = arith.divf %10, %11 : vector<16x1xf32>
    %13 = vector.broadcast %12 : vector<16x1xf32> to vector<16x32xf32>
    %14 = arith.subf %8, %13 : vector<16x32xf32>
    %15 = arith.mulf %14, %14 : vector<16x32xf32>
    %cst_9 = arith.constant dense<0.000000e+00> : vector<16xf32>
    %16 = vector.multi_reduction <add>, %15, %cst_9 [1] : vector<16x32xf32> to vector<16xf32>
    %17 = vector.shape_cast %16 : vector<16xf32> to vector<16x1xf32>
    %cst_10 = arith.constant 3.200000e+01 : f32
    %18 = vector.broadcast %cst_10 : f32 to vector<16x1xf32>
    %19 = arith.divf %17, %18 : vector<16x1xf32>
    %20 = vector.broadcast %12 : vector<16x1xf32> to vector<16x32xf32>
    %21 = arith.subf %8, %20 : vector<16x32xf32>
    %cst_11 = arith.constant 9.99999974E-6 : f32
    %22 = vector.broadcast %cst_11 : f32 to vector<16x1xf32>
    %23 = arith.addf %19, %22 : vector<16x1xf32>
    %24 = math.rsqrt %23 : vector<16x1xf32>
    %25 = vector.broadcast %24 : vector<16x1xf32> to vector<16x32xf32>
    %26 = arith.mulf %21, %25 : vector<16x32xf32>
    %c0_12 = arith.constant 0 : index
    %c0_13 = arith.constant 0 : index
    %27 = vector.load %arg5[%c0_12, %c0_13] : memref<1x32xf32, #tpu.memory_space<vmem>>, vector<1x32xf32>
    %28 = vector.broadcast %27 : vector<1x32xf32> to vector<16x32xf32>
    %29 = arith.mulf %26, %28 : vector<16x32xf32>
    %c0_14 = arith.constant 0 : index
    %c0_15 = arith.constant 0 : index
    %30 = vector.load %arg6[%c0_14, %c0_15] : memref<1x32xf32, #tpu.memory_space<vmem>>, vector<1x32xf32>
    %31 = vector.broadcast %30 : vector<1x32xf32> to vector<16x32xf32>
    %32 = arith.addf %29, %31 : vector<16x32xf32>
    %33 = arith.truncf %32 : vector<16x32xf32> to vector<16x32xbf16>
    %c0_16 = arith.constant 0 : index
    %c0_17 = arith.constant 0 : index
    %34 = vector.load %arg7[%c0_16, %c0_17] : memref<32x32xbf16, #tpu.memory_space<vmem>>, vector<32x32xbf16>
    %cst_18 = arith.constant dense<0.000000e+00> : vector<16x32xf32>
    %35 = tpu.matmul %33, %34, %cst_18 {dimension_numbers = #tpu.dot_dimension_numbers<[1], [0], [0], [1], [0, 0, 1, 1], [], []>} : vector<16x32xbf16>, vector<32x32xbf16>, vector<16x32xf32> -> vector<16x32xf32>
    %c0_19 = arith.constant 0 : index
    %c0_20 = arith.constant 0 : index
    %36 = vector.load %arg8[%c0_19, %c0_20] : memref<1x32xf32, #tpu.memory_space<vmem>>, vector<1x32xf32>
    %37 = vector.broadcast %36 : vector<1x32xf32> to vector<16x32xf32>
    %38 = arith.addf %35, %37 : vector<16x32xf32>
    %cst_21 = arith.constant 0.000000e+00 : f32
    %39 = vector.broadcast %cst_21 : f32 to vector<16x32xf32>
    %40 = arith.maximumf %38, %39 : vector<16x32xf32>
    %41 = arith.truncf %40 : vector<16x32xf32> to vector<16x32xbf16>
    %c0_22 = arith.constant 0 : index
    %c0_23 = arith.constant 0 : index
    %42 = vector.load %arg9[%c0_22, %c0_23] : memref<32x32xbf16, #tpu.memory_space<vmem>>, vector<32x32xbf16>
    %cst_24 = arith.constant dense<0.000000e+00> : vector<16x32xf32>
    %43 = tpu.matmul %41, %42, %cst_24 {dimension_numbers = #tpu.dot_dimension_numbers<[1], [0], [0], [1], [0, 0, 1, 1], [], []>} : vector<16x32xbf16>, vector<32x32xbf16>, vector<16x32xf32> -> vector<16x32xf32>
    %c0_25 = arith.constant 0 : index
    %c0_26 = arith.constant 0 : index
    %44 = vector.load %arg10[%c0_25, %c0_26] : memref<1x32xf32, #tpu.memory_space<vmem>>, vector<1x32xf32>
    %45 = vector.broadcast %44 : vector<1x32xf32> to vector<16x32xf32>
    %46 = arith.addf %43, %45 : vector<16x32xf32>
    %cst_27 = arith.constant 0.000000e+00 : f32
    %47 = vector.broadcast %cst_27 : f32 to vector<16x32xf32>
    %48 = arith.maximumf %46, %47 : vector<16x32xf32>
    %49 = arith.truncf %48 : vector<16x32xf32> to vector<16x32xbf16>
    %c0_28 = arith.constant 0 : index
    %c0_29 = arith.constant 0 : index
    %50 = vector.load %arg11[%c0_28, %c0_29] : memref<32x32xbf16, #tpu.memory_space<vmem>>, vector<32x32xbf16>
    %cst_30 = arith.constant dense<0.000000e+00> : vector<16x32xf32>
    %51 = tpu.matmul %49, %50, %cst_30 {dimension_numbers = #tpu.dot_dimension_numbers<[1], [0], [0], [1], [0, 0, 1, 1], [], []>} : vector<16x32xbf16>, vector<32x32xbf16>, vector<16x32xf32> -> vector<16x32xf32>
    %c0_31 = arith.constant 0 : index
    %c0_32 = arith.constant 0 : index
    %52 = vector.load %arg12[%c0_31, %c0_32] : memref<1x32xf32, #tpu.memory_space<vmem>>, vector<1x32xf32>
    %53 = vector.broadcast %52 : vector<1x32xf32> to vector<16x32xf32>
    %54 = arith.addf %51, %53 : vector<16x32xf32>
    %55 = arith.addf %54, %32 : vector<16x32xf32>
    %cst_33 = arith.constant dense<0.000000e+00> : vector<16xf32>
    %56 = vector.multi_reduction <add>, %55, %cst_33 [1] : vector<16x32xf32> to vector<16xf32>
    %57 = vector.shape_cast %56 : vector<16xf32> to vector<16x1xf32>
    %cst_34 = arith.constant 3.200000e+01 : f32
    %58 = vector.broadcast %cst_34 : f32 to vector<16x1xf32>
    %59 = arith.divf %57, %58 : vector<16x1xf32>
    %60 = vector.broadcast %59 : vector<16x1xf32> to vector<16x32xf32>
    %61 = arith.subf %55, %60 : vector<16x32xf32>
    %62 = arith.mulf %61, %61 : vector<16x32xf32>
    %cst_35 = arith.constant dense<0.000000e+00> : vector<16xf32>
    %63 = vector.multi_reduction <add>, %62, %cst_35 [1] : vector<16x32xf32> to vector<16xf32>
    %64 = vector.shape_cast %63 : vector<16xf32> to vector<16x1xf32>
    %cst_36 = arith.constant 3.200000e+01 : f32
    %65 = vector.broadcast %cst_36 : f32 to vector<16x1xf32>
    %66 = arith.divf %64, %65 : vector<16x1xf32>
    %67 = vector.broadcast %59 : vector<16x1xf32> to vector<16x32xf32>
    %68 = arith.subf %55, %67 : vector<16x32xf32>
    %cst_37 = arith.constant 9.99999974E-6 : f32
    %69 = vector.broadcast %cst_37 : f32 to vector<16x1xf32>
    %70 = arith.addf %66, %69 : vector<16x1xf32>
    %71 = math.rsqrt %70 : vector<16x1xf32>
    %72 = vector.broadcast %71 : vector<16x1xf32> to vector<16x32xf32>
    %73 = arith.mulf %68, %72 : vector<16x32xf32>
    %c0_38 = arith.constant 0 : index
    %c0_39 = arith.constant 0 : index
    %74 = vector.load %arg13[%c0_38, %c0_39] : memref<1x32xf32, #tpu.memory_space<vmem>>, vector<1x32xf32>
    %75 = vector.broadcast %74 : vector<1x32xf32> to vector<16x32xf32>
    %76 = arith.mulf %73, %75 : vector<16x32xf32>
    %c0_40 = arith.constant 0 : index
    %c0_41 = arith.constant 0 : index
    %77 = vector.load %arg14[%c0_40, %c0_41] : memref<1x32xf32, #tpu.memory_space<vmem>>, vector<1x32xf32>
    %78 = vector.broadcast %77 : vector<1x32xf32> to vector<16x32xf32>
    %79 = arith.addf %76, %78 : vector<16x32xf32>
    %c0_42 = arith.constant 0 : index
    %c0_43 = arith.constant 0 : index
    %80 = vector.load %arg15[%c0_42, %c0_43] : memref<16x32xf32, #tpu.memory_space<vmem>>, vector<16x32xf32>
    tpu.vector_store %arg15[%c0_42, %c0_43], %79 {strides = array<i32>} : memref<16x32xf32, #tpu.memory_space<vmem>>, vector<16x32xf32>,
    return
  }
  func.func @transform_0(%arg0: i32) -> (i32, i32) {
    %c0_i32 = arith.constant 0 : i32
    %c0_i32_0 = arith.constant 0 : i32
    return %arg0, %c0_i32 : i32, i32
  }
  func.func @transform_1(%arg0: i32) -> (i32, i32) {
    %c0_i32 = arith.constant 0 : i32
    %c0_i32_0 = arith.constant 0 : i32
    return %arg0, %c0_i32 : i32, i32
  }
  func.func @transform_2(%arg0: i32) -> (i32, i32) {
    %c0_i32 = arith.constant 0 : i32
    %c0_i32_0 = arith.constant 0 : i32
    %c0_i32_1 = arith.constant 0 : i32
    return %c0_i32, %c0_i32_0 : i32, i32
  }
  func.func @transform_3(%arg0: i32) -> (i32, i32) {
    %c0_i32 = arith.constant 0 : i32
    %c0_i32_0 = arith.constant 0 : i32
    %c0_i32_1 = arith.constant 0 : i32
    return %c0_i32, %c0_i32_0 : i32, i32
  }
  func.func @transform_4(%arg0: i32) -> (i32, i32) {
    %c0_i32 = arith.constant 0 : i32
    %c0_i32_0 = arith.constant 0 : i32
    %c0_i32_1 = arith.constant 0 : i32
    return %c0_i32, %c0_i32_0 : i32, i32
  }
  func.func @transform_5(%arg0: i32) -> (i32, i32) {
    %c0_i32 = arith.constant 0 : i32
    %c0_i32_0 = arith.constant 0 : i32
    %c0_i32_1 = arith.constant 0 : i32
    return %c0_i32, %c0_i32_0 : i32, i32
  }
  func.func @transform_6(%arg0: i32) -> (i32, i32) {
    %c0_i32 = arith.constant 0 : i32
    %c0_i32_0 = arith.constant 0 : i32
    %c0_i32_1 = arith.constant 0 : i32
    return %c0_i32, %c0_i32_0 : i32, i32
  }
  func.func @transform_7(%arg0: i32) -> (i32, i32) {
    %c0_i32 = arith.constant 0 : i32
    %c0_i32_0 = arith.constant 0 : i32
    %c0_i32_1 = arith.constant 0 : i32
    return %c0_i32, %c0_i32_0 : i32, i32
  }
  func.func @transform_8(%arg0: i32) -> (i32, i32) {
    %c0_i32 = arith.constant 0 : i32
    %c0_i32_0 = arith.constant 0 : i32
    %c0_i32_1 = arith.constant 0 : i32
    return %c0_i32, %c0_i32_0 : i32, i32
  }
  func.func @transform_9(%arg0: i32) -> (i32, i32) {
    %c0_i32 = arith.constant 0 : i32
    %c0_i32_0 = arith.constant 0 : i32
    %c0_i32_1 = arith.constant 0 : i32
    return %c0_i32, %c0_i32_0 : i32, i32
  }
  func.func @transform_10(%arg0: i32) -> (i32, i32) {
    %c0_i32 = arith.constant 0 : i32
    %c0_i32_0 = arith.constant 0 : i32
    %c0_i32_1 = arith.constant 0 : i32
    return %c0_i32, %c0_i32_0 : i32, i32
  }
  func.func @transform_11(%arg0: i32) -> (i32, i32) {
    %c0_i32 = arith.constant 0 : i32
    %c0_i32_0 = arith.constant 0 : i32
    %c0_i32_1 = arith.constant 0 : i32
    return %c0_i32, %c0_i32_0 : i32, i32
  }
  func.func @transform_12(%arg0: i32) -> (i32, i32) {
    %c0_i32 = arith.constant 0 : i32
    %c0_i32_0 = arith.constant 0 : i32
    %c0_i32_1 = arith.constant 0 : i32
    return %c0_i32, %c0_i32_0 : i32, i32
  }
  func.func @transform_13(%arg0: i32) -> (i32, i32) {
    %c0_i32 = arith.constant 0 : i32
    %c0_i32_0 = arith.constant 0 : i32
    %c0_i32_1 = arith.constant 0 : i32
    return %c0_i32, %c0_i32_0 : i32, i32
  }
  func.func @transform_14(%arg0: i32) -> (i32, i32) {
    %c0_i32 = arith.constant 0 : i32
    %c0_i32_0 = arith.constant 0 : i32
    return %arg0, %c0_i32 : i32, i32
  }
}

module attributes {stable_mosaic.version = 11 : i64} {
  func.func @_linear_kernel(%arg0: i32, %arg1: memref<16x32xf32, #tpu.memory_space<vmem>>, %arg2: memref<32x16xbf16, #tpu.memory_space<vmem>>, %arg3: memref<1x16xf32, #tpu.memory_space<vmem>>, %arg4: memref<16x16xf32, #tpu.memory_space<vmem>>) attributes {dimension_semantics = [#tpu.dimension_semantics<parallel>], iteration_bounds = array<i64: 1>, scalar_prefetch = 0 : i64, scratch_operands = 0 : i64, tpu.core_type = #tpu.core_type<tc>, window_params = [{transform_indices = @transform_0, window_bounds = array<i64: 16, 32>}, {pipeline_mode = #tpu.pipeline_mode<synchronous>, transform_indices = @transform_1, window_bounds = array<i64: 32, 16>}, {pipeline_mode = #tpu.pipeline_mode<synchronous>, transform_indices = @transform_2, window_bounds = array<i64: 1, 16>}, {transform_indices = @transform_3, window_bounds = array<i64: 16, 16>}]} {
    %c0 = arith.constant 0 : index
    %c0_0 = arith.constant 0 : index
    %0 = vector.load %arg1[%c0, %c0_0] : memref<16x32xf32, #tpu.memory_space<vmem>>, vector<16x32xf32>
    %1 = arith.truncf %0 : vector<16x32xf32> to vector<16x32xbf16>
    %c0_1 = arith.constant 0 : index
    %c0_2 = arith.constant 0 : index
    %2 = vector.load %arg2[%c0_1, %c0_2] : memref<32x16xbf16, #tpu.memory_space<vmem>>, vector<32x16xbf16>
    %cst = arith.constant dense<0.000000e+00> : vector<16x16xf32>
    %3 = tpu.matmul %1, %2, %cst {dimension_numbers = #tpu.dot_dimension_numbers<[1], [0], [0], [1], [0, 0, 1, 1], [], []>} : vector<16x32xbf16>, vector<32x16xbf16>, vector<16x16xf32> -> vector<16x16xf32>
    %c0_3 = arith.constant 0 : index
    %c0_4 = arith.constant 0 : index
    %4 = vector.load %arg3[%c0_3, %c0_4] : memref<1x16xf32, #tpu.memory_space<vmem>>, vector<1x16xf32>
    %5 = vector.broadcast %4 : vector<1x16xf32> to vector<16x16xf32>
    %6 = arith.addf %3, %5 : vector<16x16xf32>
    %c0_5 = arith.constant 0 : index
    %c0_6 = arith.constant 0 : index
    %7 = vector.load %arg4[%c0_5, %c0_6] : memref<16x16xf32, #tpu.memory_space<vmem>>, vector<16x16xf32>
    tpu.vector_store %arg4[%c0_5, %c0_6], %6 {strides = array<i32>} : memref<16x16xf32, #tpu.memory_space<vmem>>, vector<16x16xf32>,
    return
  }
  func.func @transform_0(%arg0: i32) -> (i32, i32) {
    %c0_i32 = arith.constant 0 : i32
    %c0_i32_0 = arith.constant 0 : i32
    return %arg0, %c0_i32 : i32, i32
  }
  func.func @transform_1(%arg0: i32) -> (i32, i32) {
    %c0_i32 = arith.constant 0 : i32
    %c0_i32_0 = arith.constant 0 : i32
    %c0_i32_1 = arith.constant 0 : i32
    return %c0_i32, %c0_i32_0 : i32, i32
  }
  func.func @transform_2(%arg0: i32) -> (i32, i32) {
    %c0_i32 = arith.constant 0 : i32
    %c0_i32_0 = arith.constant 0 : i32
    %c0_i32_1 = arith.constant 0 : i32
    return %c0_i32, %c0_i32_0 : i32, i32
  }
  func.func @transform_3(%arg0: i32) -> (i32, i32) {
    %c0_i32 = arith.constant 0 : i32
    %c0_i32_0 = arith.constant 0 : i32
    return %arg0, %c0_i32 : i32, i32
  }
}

module attributes {stable_mosaic.version = 11 : i64} {
  func.func @_node_update_kernel(%arg0: i32, %arg1: memref<16x256xf32, #tpu.memory_space<vmem>>, %arg2: memref<16x32xf32, #tpu.memory_space<vmem>>, %arg3: memref<256x32xbf16, #tpu.memory_space<vmem>>, %arg4: memref<1x32xf32, #tpu.memory_space<vmem>>, %arg5: memref<1x32xf32, #tpu.memory_space<vmem>>, %arg6: memref<1x32xf32, #tpu.memory_space<vmem>>, %arg7: memref<32x32xbf16, #tpu.memory_space<vmem>>, %arg8: memref<1x32xf32, #tpu.memory_space<vmem>>, %arg9: memref<32x32xbf16, #tpu.memory_space<vmem>>, %arg10: memref<1x32xf32, #tpu.memory_space<vmem>>, %arg11: memref<32x32xbf16, #tpu.memory_space<vmem>>, %arg12: memref<1x32xf32, #tpu.memory_space<vmem>>, %arg13: memref<1x32xf32, #tpu.memory_space<vmem>>, %arg14: memref<1x32xf32, #tpu.memory_space<vmem>>, %arg15: memref<16x32xf32, #tpu.memory_space<vmem>>) attributes {dimension_semantics = [#tpu.dimension_semantics<parallel>], iteration_bounds = array<i64: 1>, scalar_prefetch = 0 : i64, scratch_operands = 0 : i64, tpu.core_type = #tpu.core_type<tc>, window_params = [{transform_indices = @transform_0, window_bounds = array<i64: 16, 256>}, {transform_indices = @transform_1, window_bounds = array<i64: 16, 32>}, {pipeline_mode = #tpu.pipeline_mode<synchronous>, transform_indices = @transform_2, window_bounds = array<i64: 256, 32>}, {pipeline_mode = #tpu.pipeline_mode<synchronous>, transform_indices = @transform_3, window_bounds = array<i64: 1, 32>}, {pipeline_mode = #tpu.pipeline_mode<synchronous>, transform_indices = @transform_4, window_bounds = array<i64: 1, 32>}, {pipeline_mode = #tpu.pipeline_mode<synchronous>, transform_indices = @transform_5, window_bounds = array<i64: 1, 32>}, {pipeline_mode = #tpu.pipeline_mode<synchronous>, transform_indices = @transform_6, window_bounds = array<i64: 32, 32>}, {pipeline_mode = #tpu.pipeline_mode<synchronous>, transform_indices = @transform_7, window_bounds = array<i64: 1, 32>}, {pipeline_mode = #tpu.pipeline_mode<synchronous>, transform_indices = @transform_8, window_bounds = array<i64: 32, 32>}, {pipeline_mode = #tpu.pipeline_mode<synchronous>, transform_indices = @transform_9, window_bounds = array<i64: 1, 32>}, {pipeline_mode = #tpu.pipeline_mode<synchronous>, transform_indices = @transform_10, window_bounds = array<i64: 32, 32>}, {pipeline_mode = #tpu.pipeline_mode<synchronous>, transform_indices = @transform_11, window_bounds = array<i64: 1, 32>}, {pipeline_mode = #tpu.pipeline_mode<synchronous>, transform_indices = @transform_12, window_bounds = array<i64: 1, 32>}, {pipeline_mode = #tpu.pipeline_mode<synchronous>, transform_indices = @transform_13, window_bounds = array<i64: 1, 32>}, {transform_indices = @transform_14, window_bounds = array<i64: 16, 32>}]} {
    %c0 = arith.constant 0 : index
    %c0_0 = arith.constant 0 : index
    %0 = vector.load %arg1[%c0, %c0_0] : memref<16x256xf32, #tpu.memory_space<vmem>>, vector<16x256xf32>
    %1 = arith.truncf %0 : vector<16x256xf32> to vector<16x256xbf16>
    %c0_1 = arith.constant 0 : index
    %c0_2 = arith.constant 0 : index
    %2 = vector.load %arg3[%c0_1, %c0_2] : memref<256x32xbf16, #tpu.memory_space<vmem>>, vector<256x32xbf16>
    %cst = arith.constant dense<0.000000e+00> : vector<16x32xf32>
    %3 = tpu.matmul %1, %2, %cst {dimension_numbers = #tpu.dot_dimension_numbers<[1], [0], [0], [1], [0, 0, 1, 1], [], []>} : vector<16x256xbf16>, vector<256x32xbf16>, vector<16x32xf32> -> vector<16x32xf32>
    %c0_3 = arith.constant 0 : index
    %c0_4 = arith.constant 0 : index
    %4 = vector.load %arg4[%c0_3, %c0_4] : memref<1x32xf32, #tpu.memory_space<vmem>>, vector<1x32xf32>
    %5 = vector.broadcast %4 : vector<1x32xf32> to vector<16x32xf32>
    %6 = arith.addf %3, %5 : vector<16x32xf32>
    %c0_5 = arith.constant 0 : index
    %c0_6 = arith.constant 0 : index
    %7 = vector.load %arg2[%c0_5, %c0_6] : memref<16x32xf32, #tpu.memory_space<vmem>>, vector<16x32xf32>
    %8 = arith.addf %7, %6 : vector<16x32xf32>
    %cst_7 = arith.constant dense<0.000000e+00> : vector<16xf32>
    %9 = vector.multi_reduction <add>, %8, %cst_7 [1] : vector<16x32xf32> to vector<16xf32>
    %10 = vector.shape_cast %9 : vector<16xf32> to vector<16x1xf32>
    %cst_8 = arith.constant 3.200000e+01 : f32
    %11 = vector.broadcast %cst_8 : f32 to vector<16x1xf32>
    %12 = arith.divf %10, %11 : vector<16x1xf32>
    %13 = vector.broadcast %12 : vector<16x1xf32> to vector<16x32xf32>
    %14 = arith.subf %8, %13 : vector<16x32xf32>
    %15 = arith.mulf %14, %14 : vector<16x32xf32>
    %cst_9 = arith.constant dense<0.000000e+00> : vector<16xf32>
    %16 = vector.multi_reduction <add>, %15, %cst_9 [1] : vector<16x32xf32> to vector<16xf32>
    %17 = vector.shape_cast %16 : vector<16xf32> to vector<16x1xf32>
    %cst_10 = arith.constant 3.200000e+01 : f32
    %18 = vector.broadcast %cst_10 : f32 to vector<16x1xf32>
    %19 = arith.divf %17, %18 : vector<16x1xf32>
    %20 = vector.broadcast %12 : vector<16x1xf32> to vector<16x32xf32>
    %21 = arith.subf %8, %20 : vector<16x32xf32>
    %cst_11 = arith.constant 9.99999974E-6 : f32
    %22 = vector.broadcast %cst_11 : f32 to vector<16x1xf32>
    %23 = arith.addf %19, %22 : vector<16x1xf32>
    %24 = math.rsqrt %23 : vector<16x1xf32>
    %25 = vector.broadcast %24 : vector<16x1xf32> to vector<16x32xf32>
    %26 = arith.mulf %21, %25 : vector<16x32xf32>
    %c0_12 = arith.constant 0 : index
    %c0_13 = arith.constant 0 : index
    %27 = vector.load %arg5[%c0_12, %c0_13] : memref<1x32xf32, #tpu.memory_space<vmem>>, vector<1x32xf32>
    %28 = vector.broadcast %27 : vector<1x32xf32> to vector<16x32xf32>
    %29 = arith.mulf %26, %28 : vector<16x32xf32>
    %c0_14 = arith.constant 0 : index
    %c0_15 = arith.constant 0 : index
    %30 = vector.load %arg6[%c0_14, %c0_15] : memref<1x32xf32, #tpu.memory_space<vmem>>, vector<1x32xf32>
    %31 = vector.broadcast %30 : vector<1x32xf32> to vector<16x32xf32>
    %32 = arith.addf %29, %31 : vector<16x32xf32>
    %33 = arith.truncf %32 : vector<16x32xf32> to vector<16x32xbf16>
    %c0_16 = arith.constant 0 : index
    %c0_17 = arith.constant 0 : index
    %34 = vector.load %arg7[%c0_16, %c0_17] : memref<32x32xbf16, #tpu.memory_space<vmem>>, vector<32x32xbf16>
    %cst_18 = arith.constant dense<0.000000e+00> : vector<16x32xf32>
    %35 = tpu.matmul %33, %34, %cst_18 {dimension_numbers = #tpu.dot_dimension_numbers<[1], [0], [0], [1], [0, 0, 1, 1], [], []>} : vector<16x32xbf16>, vector<32x32xbf16>, vector<16x32xf32> -> vector<16x32xf32>
    %c0_19 = arith.constant 0 : index
    %c0_20 = arith.constant 0 : index
    %36 = vector.load %arg8[%c0_19, %c0_20] : memref<1x32xf32, #tpu.memory_space<vmem>>, vector<1x32xf32>
    %37 = vector.broadcast %36 : vector<1x32xf32> to vector<16x32xf32>
    %38 = arith.addf %35, %37 : vector<16x32xf32>
    %cst_21 = arith.constant 0.000000e+00 : f32
    %39 = vector.broadcast %cst_21 : f32 to vector<16x32xf32>
    %40 = arith.maximumf %38, %39 : vector<16x32xf32>
    %41 = arith.truncf %40 : vector<16x32xf32> to vector<16x32xbf16>
    %c0_22 = arith.constant 0 : index
    %c0_23 = arith.constant 0 : index
    %42 = vector.load %arg9[%c0_22, %c0_23] : memref<32x32xbf16, #tpu.memory_space<vmem>>, vector<32x32xbf16>
    %cst_24 = arith.constant dense<0.000000e+00> : vector<16x32xf32>
    %43 = tpu.matmul %41, %42, %cst_24 {dimension_numbers = #tpu.dot_dimension_numbers<[1], [0], [0], [1], [0, 0, 1, 1], [], []>} : vector<16x32xbf16>, vector<32x32xbf16>, vector<16x32xf32> -> vector<16x32xf32>
    %c0_25 = arith.constant 0 : index
    %c0_26 = arith.constant 0 : index
    %44 = vector.load %arg10[%c0_25, %c0_26] : memref<1x32xf32, #tpu.memory_space<vmem>>, vector<1x32xf32>
    %45 = vector.broadcast %44 : vector<1x32xf32> to vector<16x32xf32>
    %46 = arith.addf %43, %45 : vector<16x32xf32>
    %cst_27 = arith.constant 0.000000e+00 : f32
    %47 = vector.broadcast %cst_27 : f32 to vector<16x32xf32>
    %48 = arith.maximumf %46, %47 : vector<16x32xf32>
    %49 = arith.truncf %48 : vector<16x32xf32> to vector<16x32xbf16>
    %c0_28 = arith.constant 0 : index
    %c0_29 = arith.constant 0 : index
    %50 = vector.load %arg11[%c0_28, %c0_29] : memref<32x32xbf16, #tpu.memory_space<vmem>>, vector<32x32xbf16>
    %cst_30 = arith.constant dense<0.000000e+00> : vector<16x32xf32>
    %51 = tpu.matmul %49, %50, %cst_30 {dimension_numbers = #tpu.dot_dimension_numbers<[1], [0], [0], [1], [0, 0, 1, 1], [], []>} : vector<16x32xbf16>, vector<32x32xbf16>, vector<16x32xf32> -> vector<16x32xf32>
    %c0_31 = arith.constant 0 : index
    %c0_32 = arith.constant 0 : index
    %52 = vector.load %arg12[%c0_31, %c0_32] : memref<1x32xf32, #tpu.memory_space<vmem>>, vector<1x32xf32>
    %53 = vector.broadcast %52 : vector<1x32xf32> to vector<16x32xf32>
    %54 = arith.addf %51, %53 : vector<16x32xf32>
    %55 = arith.addf %54, %32 : vector<16x32xf32>
    %cst_33 = arith.constant dense<0.000000e+00> : vector<16xf32>
    %56 = vector.multi_reduction <add>, %55, %cst_33 [1] : vector<16x32xf32> to vector<16xf32>
    %57 = vector.shape_cast %56 : vector<16xf32> to vector<16x1xf32>
    %cst_34 = arith.constant 3.200000e+01 : f32
    %58 = vector.broadcast %cst_34 : f32 to vector<16x1xf32>
    %59 = arith.divf %57, %58 : vector<16x1xf32>
    %60 = vector.broadcast %59 : vector<16x1xf32> to vector<16x32xf32>
    %61 = arith.subf %55, %60 : vector<16x32xf32>
    %62 = arith.mulf %61, %61 : vector<16x32xf32>
    %cst_35 = arith.constant dense<0.000000e+00> : vector<16xf32>
    %63 = vector.multi_reduction <add>, %62, %cst_35 [1] : vector<16x32xf32> to vector<16xf32>
    %64 = vector.shape_cast %63 : vector<16xf32> to vector<16x1xf32>
    %cst_36 = arith.constant 3.200000e+01 : f32
    %65 = vector.broadcast %cst_36 : f32 to vector<16x1xf32>
    %66 = arith.divf %64, %65 : vector<16x1xf32>
    %67 = vector.broadcast %59 : vector<16x1xf32> to vector<16x32xf32>
    %68 = arith.subf %55, %67 : vector<16x32xf32>
    %cst_37 = arith.constant 9.99999974E-6 : f32
    %69 = vector.broadcast %cst_37 : f32 to vector<16x1xf32>
    %70 = arith.addf %66, %69 : vector<16x1xf32>
    %71 = math.rsqrt %70 : vector<16x1xf32>
    %72 = vector.broadcast %71 : vector<16x1xf32> to vector<16x32xf32>
    %73 = arith.mulf %68, %72 : vector<16x32xf32>
    %c0_38 = arith.constant 0 : index
    %c0_39 = arith.constant 0 : index
    %74 = vector.load %arg13[%c0_38, %c0_39] : memref<1x32xf32, #tpu.memory_space<vmem>>, vector<1x32xf32>
    %75 = vector.broadcast %74 : vector<1x32xf32> to vector<16x32xf32>
    %76 = arith.mulf %73, %75 : vector<16x32xf32>
    %c0_40 = arith.constant 0 : index
    %c0_41 = arith.constant 0 : index
    %77 = vector.load %arg14[%c0_40, %c0_41] : memref<1x32xf32, #tpu.memory_space<vmem>>, vector<1x32xf32>
    %78 = vector.broadcast %77 : vector<1x32xf32> to vector<16x32xf32>
    %79 = arith.addf %76, %78 : vector<16x32xf32>
    %c0_42 = arith.constant 0 : index
    %c0_43 = arith.constant 0 : index
    %80 = vector.load %arg15[%c0_42, %c0_43] : memref<16x32xf32, #tpu.memory_space<vmem>>, vector<16x32xf32>
    tpu.vector_store %arg15[%c0_42, %c0_43], %79 {strides = array<i32>} : memref<16x32xf32, #tpu.memory_space<vmem>>, vector<16x32xf32>,
    return
  }
  func.func @transform_0(%arg0: i32) -> (i32, i32) {
    %c0_i32 = arith.constant 0 : i32
    %c0_i32_0 = arith.constant 0 : i32
    return %arg0, %c0_i32 : i32, i32
  }
  func.func @transform_1(%arg0: i32) -> (i32, i32) {
    %c0_i32 = arith.constant 0 : i32
    %c0_i32_0 = arith.constant 0 : i32
    return %arg0, %c0_i32 : i32, i32
  }
  func.func @transform_2(%arg0: i32) -> (i32, i32) {
    %c0_i32 = arith.constant 0 : i32
    %c0_i32_0 = arith.constant 0 : i32
    %c0_i32_1 = arith.constant 0 : i32
    return %c0_i32, %c0_i32_0 : i32, i32
  }
  func.func @transform_3(%arg0: i32) -> (i32, i32) {
    %c0_i32 = arith.constant 0 : i32
    %c0_i32_0 = arith.constant 0 : i32
    %c0_i32_1 = arith.constant 0 : i32
    return %c0_i32, %c0_i32_0 : i32, i32
  }
  func.func @transform_4(%arg0: i32) -> (i32, i32) {
    %c0_i32 = arith.constant 0 : i32
    %c0_i32_0 = arith.constant 0 : i32
    %c0_i32_1 = arith.constant 0 : i32
    return %c0_i32, %c0_i32_0 : i32, i32
  }
  func.func @transform_5(%arg0: i32) -> (i32, i32) {
    %c0_i32 = arith.constant 0 : i32
    %c0_i32_0 = arith.constant 0 : i32
    %c0_i32_1 = arith.constant 0 : i32
    return %c0_i32, %c0_i32_0 : i32, i32
  }
  func.func @transform_6(%arg0: i32) -> (i32, i32) {
    %c0_i32 = arith.constant 0 : i32
    %c0_i32_0 = arith.constant 0 : i32
    %c0_i32_1 = arith.constant 0 : i32
    return %c0_i32, %c0_i32_0 : i32, i32
  }
  func.func @transform_7(%arg0: i32) -> (i32, i32) {
    %c0_i32 = arith.constant 0 : i32
    %c0_i32_0 = arith.constant 0 : i32
    %c0_i32_1 = arith.constant 0 : i32
    return %c0_i32, %c0_i32_0 : i32, i32
  }
  func.func @transform_8(%arg0: i32) -> (i32, i32) {
    %c0_i32 = arith.constant 0 : i32
    %c0_i32_0 = arith.constant 0 : i32
    %c0_i32_1 = arith.constant 0 : i32
    return %c0_i32, %c0_i32_0 : i32, i32
  }
  func.func @transform_9(%arg0: i32) -> (i32, i32) {
    %c0_i32 = arith.constant 0 : i32
    %c0_i32_0 = arith.constant 0 : i32
    %c0_i32_1 = arith.constant 0 : i32
    return %c0_i32, %c0_i32_0 : i32, i32
  }
  func.func @transform_10(%arg0: i32) -> (i32, i32) {
    %c0_i32 = arith.constant 0 : i32
    %c0_i32_0 = arith.constant 0 : i32
    %c0_i32_1 = arith.constant 0 : i32
    return %c0_i32, %c0_i32_0 : i32, i32
  }
  func.func @transform_11(%arg0: i32) -> (i32, i32) {
    %c0_i32 = arith.constant 0 : i32
    %c0_i32_0 = arith.constant 0 : i32
    %c0_i32_1 = arith.constant 0 : i32
    return %c0_i32, %c0_i32_0 : i32, i32
  }
  func.func @transform_12(%arg0: i32) -> (i32, i32) {
    %c0_i32 = arith.constant 0 : i32
    %c0_i32_0 = arith.constant 0 : i32
    %c0_i32_1 = arith.constant 0 : i32
    return %c0_i32, %c0_i32_0 : i32, i32
  }
  func.func @transform_13(%arg0: i32) -> (i32, i32) {
    %c0_i32 = arith.constant 0 : i32
    %c0_i32_0 = arith.constant 0 : i32
    %c0_i32_1 = arith.constant 0 : i32
    return %c0_i32, %c0_i32_0 : i32, i32
  }
  func.func @transform_14(%arg0: i32) -> (i32, i32) {
    %c0_i32 = arith.constant 0 : i32
    %c0_i32_0 = arith.constant 0 : i32
    return %arg0, %c0_i32 : i32, i32
  }
}

module attributes {stable_mosaic.version = 11 : i64} {
  func.func @_edge_transition_kernel(%arg0: i32, %arg1: i32, %arg2: memref<1x8x8x16xbf16, #tpu.memory_space<vmem>>, %arg3: memref<1x8x48xf32, #tpu.memory_space<vmem>>, %arg4: memref<1x8x48xf32, #tpu.memory_space<vmem>>, %arg5: memref<1x8x16xf32, #tpu.memory_space<vmem>>, %arg6: memref<1x8x16xf32, #tpu.memory_space<vmem>>, %arg7: memref<1x8x8xbf16, #tpu.memory_space<vmem>>, %arg8: memref<16x48xbf16, #tpu.memory_space<vmem>>, %arg9: memref<48x48xbf16, #tpu.memory_space<vmem>>, %arg10: memref<1x48xf32, #tpu.memory_space<vmem>>, %arg11: memref<48x16xbf16, #tpu.memory_space<vmem>>, %arg12: memref<16x16xbf16, #tpu.memory_space<vmem>>, %arg13: memref<1x16xf32, #tpu.memory_space<vmem>>, %arg14: memref<1x16xf32, #tpu.memory_space<vmem>>, %arg15: memref<1x8x8x16xbf16, #tpu.memory_space<vmem>>) attributes {dimension_semantics = [#tpu.dimension_semantics<parallel>, #tpu.dimension_semantics<parallel>], iteration_bounds = array<i64: 2, 1>, scalar_prefetch = 0 : i64, scratch_operands = 0 : i64, tpu.core_type = #tpu.core_type<tc>, window_params = [{transform_indices = @transform_0, window_bounds = array<i64: 1, 8, 8, 16>}, {transform_indices = @transform_1, window_bounds = array<i64: 1, 8, 48>}, {transform_indices = @transform_2, window_bounds = array<i64: 1, 8, 48>}, {transform_indices = @transform_3, window_bounds = array<i64: 1, 8, 16>}, {transform_indices = @transform_4, window_bounds = array<i64: 1, 8, 16>}, {transform_indices = @transform_5, window_bounds = array<i64: 1, 8, 8>}, {pipeline_mode = #tpu.pipeline_mode<synchronous>, transform_indices = @transform_6, window_bounds = array<i64: 16, 48>}, {pipeline_mode = #tpu.pipeline_mode<synchronous>, transform_indices = @transform_7, window_bounds = array<i64: 48, 48>}, {pipeline_mode = #tpu.pipeline_mode<synchronous>, transform_indices = @transform_8, window_bounds = array<i64: 1, 48>}, {pipeline_mode = #tpu.pipeline_mode<synchronous>, transform_indices = @transform_9, window_bounds = array<i64: 48, 16>}, {pipeline_mode = #tpu.pipeline_mode<synchronous>, transform_indices = @transform_10, window_bounds = array<i64: 16, 16>}, {pipeline_mode = #tpu.pipeline_mode<synchronous>, transform_indices = @transform_11, window_bounds = array<i64: 1, 16>}, {pipeline_mode = #tpu.pipeline_mode<synchronous>, transform_indices = @transform_12, window_bounds = array<i64: 1, 16>}, {transform_indices = @transform_13, window_bounds = array<i64: 1, 8, 8, 16>}]} {
    %c0 = arith.constant 0 : index
    %c0_0 = arith.constant 0 : index
    %c0_1 = arith.constant 0 : index
    %c0_2 = arith.constant 0 : index
    %0 = vector.load %arg2[%c0, %c0_0, %c0_1, %c0_2] : memref<1x8x8x16xbf16, #tpu.memory_space<vmem>>, vector<1x8x8x16xbf16>
    %1 = vector.shape_cast %0 : vector<1x8x8x16xbf16> to vector<8x8x16xbf16>
    %2 = vector.shape_cast %1 : vector<8x8x16xbf16> to vector<64x16xbf16>
    %c0_3 = arith.constant 0 : index
    %c0_4 = arith.constant 0 : index
    %3 = vector.load %arg8[%c0_3, %c0_4] : memref<16x48xbf16, #tpu.memory_space<vmem>>, vector<16x48xbf16>
    %cst = arith.constant dense<0.000000e+00> : vector<64x48xf32>
    %4 = tpu.matmul %2, %3, %cst {dimension_numbers = #tpu.dot_dimension_numbers<[1], [0], [0], [1], [0, 0, 1, 1], [], []>} : vector<64x16xbf16>, vector<16x48xbf16>, vector<64x48xf32> -> vector<64x48xf32>
    %5 = vector.shape_cast %4 : vector<64x48xf32> to vector<8x8x48xf32>
    %c0_5 = arith.constant 0 : index
    %c0_6 = arith.constant 0 : index
    %c0_7 = arith.constant 0 : index
    %6 = vector.load %arg3[%c0_5, %c0_6, %c0_7] : memref<1x8x48xf32, #tpu.memory_space<vmem>>, vector<1x8x48xf32>
    %7 = vector.shape_cast %6 : vector<1x8x48xf32> to vector<8x48xf32>
    %8 = vector.shape_cast %7 : vector<8x48xf32> to vector<8x1x48xf32>
    %9 = vector.broadcast %8 : vector<8x1x48xf32> to vector<8x8x48xf32>
    %10 = arith.addf %5, %9 : vector<8x8x48xf32>
    %c0_8 = arith.constant 0 : index
    %c0_9 = arith.constant 0 : index
    %c0_10 = arith.constant 0 : index
    %11 = vector.load %arg4[%c0_8, %c0_9, %c0_10] : memref<1x8x48xf32, #tpu.memory_space<vmem>>, vector<1x8x48xf32>
    %12 = vector.shape_cast %11 : vector<1x8x48xf32> to vector<8x48xf32>
    %13 = vector.shape_cast %12 : vector<8x48xf32> to vector<1x8x48xf32>
    %14 = vector.broadcast %13 : vector<1x8x48xf32> to vector<8x8x48xf32>
    %15 = arith.addf %10, %14 : vector<8x8x48xf32>
    %cst_11 = arith.constant 0.000000e+00 : f32
    %16 = vector.broadcast %cst_11 : f32 to vector<8x8x48xf32>
    %17 = arith.maximumf %15, %16 : vector<8x8x48xf32>
    %18 = vector.shape_cast %17 : vector<8x8x48xf32> to vector<64x48xf32>
    %19 = arith.truncf %18 : vector<64x48xf32> to vector<64x48xbf16>
    %c0_12 = arith.constant 0 : index
    %c0_13 = arith.constant 0 : index
    %20 = vector.load %arg9[%c0_12, %c0_13] : memref<48x48xbf16, #tpu.memory_space<vmem>>, vector<48x48xbf16>
    %cst_14 = arith.constant dense<0.000000e+00> : vector<64x48xf32>
    %21 = tpu.matmul %19, %20, %cst_14 {dimension_numbers = #tpu.dot_dimension_numbers<[1], [0], [0], [1], [0, 0, 1, 1], [], []>} : vector<64x48xbf16>, vector<48x48xbf16>, vector<64x48xf32> -> vector<64x48xf32>
    %c0_15 = arith.constant 0 : index
    %c0_16 = arith.constant 0 : index
    %22 = vector.load %arg10[%c0_15, %c0_16] : memref<1x48xf32, #tpu.memory_space<vmem>>, vector<1x48xf32>
    %23 = vector.broadcast %22 : vector<1x48xf32> to vector<64x48xf32>
    %24 = arith.addf %21, %23 : vector<64x48xf32>
    %cst_17 = arith.constant 0.000000e+00 : f32
    %25 = vector.broadcast %cst_17 : f32 to vector<64x48xf32>
    %26 = arith.maximumf %24, %25 : vector<64x48xf32>
    %27 = arith.truncf %26 : vector<64x48xf32> to vector<64x48xbf16>
    %c0_18 = arith.constant 0 : index
    %c0_19 = arith.constant 0 : index
    %28 = vector.load %arg11[%c0_18, %c0_19] : memref<48x16xbf16, #tpu.memory_space<vmem>>, vector<48x16xbf16>
    %cst_20 = arith.constant dense<0.000000e+00> : vector<64x16xf32>
    %29 = tpu.matmul %27, %28, %cst_20 {dimension_numbers = #tpu.dot_dimension_numbers<[1], [0], [0], [1], [0, 0, 1, 1], [], []>} : vector<64x48xbf16>, vector<48x16xbf16>, vector<64x16xf32> -> vector<64x16xf32>
    %c0_21 = arith.constant 0 : index
    %c0_22 = arith.constant 0 : index
    %30 = vector.load %arg12[%c0_21, %c0_22] : memref<16x16xbf16, #tpu.memory_space<vmem>>, vector<16x16xbf16>
    %cst_23 = arith.constant dense<0.000000e+00> : vector<64x16xf32>
    %31 = tpu.matmul %2, %30, %cst_23 {dimension_numbers = #tpu.dot_dimension_numbers<[1], [0], [0], [1], [0, 0, 1, 1], [], []>} : vector<64x16xbf16>, vector<16x16xbf16>, vector<64x16xf32> -> vector<64x16xf32>
    %32 = arith.addf %29, %31 : vector<64x16xf32>
    %33 = vector.shape_cast %32 : vector<64x16xf32> to vector<8x8x16xf32>
    %c0_24 = arith.constant 0 : index
    %c0_25 = arith.constant 0 : index
    %c0_26 = arith.constant 0 : index
    %34 = vector.load %arg5[%c0_24, %c0_25, %c0_26] : memref<1x8x16xf32, #tpu.memory_space<vmem>>, vector<1x8x16xf32>
    %35 = vector.shape_cast %34 : vector<1x8x16xf32> to vector<8x16xf32>
    %36 = vector.shape_cast %35 : vector<8x16xf32> to vector<8x1x16xf32>
    %37 = vector.broadcast %36 : vector<8x1x16xf32> to vector<8x8x16xf32>
    %38 = arith.addf %33, %37 : vector<8x8x16xf32>
    %c0_27 = arith.constant 0 : index
    %c0_28 = arith.constant 0 : index
    %c0_29 = arith.constant 0 : index
    %39 = vector.load %arg6[%c0_27, %c0_28, %c0_29] : memref<1x8x16xf32, #tpu.memory_space<vmem>>, vector<1x8x16xf32>
    %40 = vector.shape_cast %39 : vector<1x8x16xf32> to vector<8x16xf32>
    %41 = vector.shape_cast %40 : vector<8x16xf32> to vector<1x8x16xf32>
    %42 = vector.broadcast %41 : vector<1x8x16xf32> to vector<8x8x16xf32>
    %43 = arith.addf %38, %42 : vector<8x8x16xf32>
    %cst_30 = arith.constant dense<0.000000e+00> : vector<8x8xf32>
    %44 = vector.multi_reduction <add>, %43, %cst_30 [2] : vector<8x8x16xf32> to vector<8x8xf32>
    %45 = vector.shape_cast %44 : vector<8x8xf32> to vector<8x8x1xf32>
    %cst_31 = arith.constant 1.600000e+01 : f32
    %46 = vector.broadcast %cst_31 : f32 to vector<8x8x1xf32>
    %47 = arith.divf %45, %46 : vector<8x8x1xf32>
    %48 = vector.broadcast %47 : vector<8x8x1xf32> to vector<8x8x16xf32>
    %49 = arith.subf %43, %48 : vector<8x8x16xf32>
    %50 = arith.mulf %49, %49 : vector<8x8x16xf32>
    %cst_32 = arith.constant dense<0.000000e+00> : vector<8x8xf32>
    %51 = vector.multi_reduction <add>, %50, %cst_32 [2] : vector<8x8x16xf32> to vector<8x8xf32>
    %52 = vector.shape_cast %51 : vector<8x8xf32> to vector<8x8x1xf32>
    %cst_33 = arith.constant 1.600000e+01 : f32
    %53 = vector.broadcast %cst_33 : f32 to vector<8x8x1xf32>
    %54 = arith.divf %52, %53 : vector<8x8x1xf32>
    %55 = vector.broadcast %47 : vector<8x8x1xf32> to vector<8x8x16xf32>
    %56 = arith.subf %43, %55 : vector<8x8x16xf32>
    %cst_34 = arith.constant 9.99999974E-6 : f32
    %57 = vector.broadcast %cst_34 : f32 to vector<8x8x1xf32>
    %58 = arith.addf %54, %57 : vector<8x8x1xf32>
    %59 = math.rsqrt %58 : vector<8x8x1xf32>
    %60 = vector.broadcast %59 : vector<8x8x1xf32> to vector<8x8x16xf32>
    %61 = arith.mulf %56, %60 : vector<8x8x16xf32>
    %c0_35 = arith.constant 0 : index
    %c0_36 = arith.constant 0 : index
    %62 = vector.load %arg13[%c0_35, %c0_36] : memref<1x16xf32, #tpu.memory_space<vmem>>, vector<1x16xf32>
    %63 = vector.shape_cast %62 : vector<1x16xf32> to vector<1x1x16xf32>
    %64 = vector.broadcast %63 : vector<1x1x16xf32> to vector<8x8x16xf32>
    %65 = arith.mulf %61, %64 : vector<8x8x16xf32>
    %c0_37 = arith.constant 0 : index
    %c0_38 = arith.constant 0 : index
    %66 = vector.load %arg14[%c0_37, %c0_38] : memref<1x16xf32, #tpu.memory_space<vmem>>, vector<1x16xf32>
    %67 = vector.shape_cast %66 : vector<1x16xf32> to vector<1x1x16xf32>
    %68 = vector.broadcast %67 : vector<1x1x16xf32> to vector<8x8x16xf32>
    %69 = arith.addf %65, %68 : vector<8x8x16xf32>
    %c0_39 = arith.constant 0 : index
    %c0_40 = arith.constant 0 : index
    %c0_41 = arith.constant 0 : index
    %70 = vector.load %arg7[%c0_39, %c0_40, %c0_41] : memref<1x8x8xbf16, #tpu.memory_space<vmem>>, vector<1x8x8xbf16>
    %71 = vector.shape_cast %70 : vector<1x8x8xbf16> to vector<8x8xbf16>
    %72 = vector.shape_cast %71 : vector<8x8xbf16> to vector<8x8x1xbf16>
    %73 = arith.extf %72 : vector<8x8x1xbf16> to vector<8x8x1xf32>
    %74 = vector.broadcast %73 : vector<8x8x1xf32> to vector<8x8x16xf32>
    %75 = arith.mulf %69, %74 : vector<8x8x16xf32>
    %76 = arith.truncf %75 : vector<8x8x16xf32> to vector<8x8x16xbf16>
    %c0_42 = arith.constant 0 : index
    %c0_43 = arith.constant 0 : index
    %c0_44 = arith.constant 0 : index
    %c0_45 = arith.constant 0 : index
    %77 = vector.load %arg15[%c0_42, %c0_43, %c0_44, %c0_45] : memref<1x8x8x16xbf16, #tpu.memory_space<vmem>>, vector<1x8x8x16xbf16>
    %78 = vector.shape_cast %77 : vector<1x8x8x16xbf16> to vector<8x8x16xbf16>
    %79 = vector.shape_cast %76 : vector<8x8x16xbf16> to vector<1x8x8x16xbf16>
    tpu.vector_store %arg15[%c0_42, %c0_43, %c0_44, %c0_45], %79 {strides = array<i32>} : memref<1x8x8x16xbf16, #tpu.memory_space<vmem>>, vector<1x8x8x16xbf16>,
    return
  }
  func.func @transform_0(%arg0: i32, %arg1: i32) -> (i32, i32, i32, i32) {
    %c0_i32 = arith.constant 0 : i32
    %c0_i32_0 = arith.constant 0 : i32
    %c0_i32_1 = arith.constant 0 : i32
    return %arg0, %arg1, %c0_i32, %c0_i32_0 : i32, i32, i32, i32
  }
  func.func @transform_1(%arg0: i32, %arg1: i32) -> (i32, i32, i32) {
    %c0_i32 = arith.constant 0 : i32
    %c0_i32_0 = arith.constant 0 : i32
    return %arg0, %arg1, %c0_i32 : i32, i32, i32
  }
  func.func @transform_2(%arg0: i32, %arg1: i32) -> (i32, i32, i32) {
    %c0_i32 = arith.constant 0 : i32
    %c0_i32_0 = arith.constant 0 : i32
    %c0_i32_1 = arith.constant 0 : i32
    return %arg0, %c0_i32, %c0_i32_0 : i32, i32, i32
  }
  func.func @transform_3(%arg0: i32, %arg1: i32) -> (i32, i32, i32) {
    %c0_i32 = arith.constant 0 : i32
    %c0_i32_0 = arith.constant 0 : i32
    return %arg0, %arg1, %c0_i32 : i32, i32, i32
  }
  func.func @transform_4(%arg0: i32, %arg1: i32) -> (i32, i32, i32) {
    %c0_i32 = arith.constant 0 : i32
    %c0_i32_0 = arith.constant 0 : i32
    %c0_i32_1 = arith.constant 0 : i32
    return %arg0, %c0_i32, %c0_i32_0 : i32, i32, i32
  }
  func.func @transform_5(%arg0: i32, %arg1: i32) -> (i32, i32, i32) {
    %c0_i32 = arith.constant 0 : i32
    %c0_i32_0 = arith.constant 0 : i32
    return %arg0, %arg1, %c0_i32 : i32, i32, i32
  }
  func.func @transform_6(%arg0: i32, %arg1: i32) -> (i32, i32) {
    %c0_i32 = arith.constant 0 : i32
    %c0_i32_0 = arith.constant 0 : i32
    %c0_i32_1 = arith.constant 0 : i32
    return %c0_i32, %c0_i32_0 : i32, i32
  }
  func.func @transform_7(%arg0: i32, %arg1: i32) -> (i32, i32) {
    %c0_i32 = arith.constant 0 : i32
    %c0_i32_0 = arith.constant 0 : i32
    %c0_i32_1 = arith.constant 0 : i32
    return %c0_i32, %c0_i32_0 : i32, i32
  }
  func.func @transform_8(%arg0: i32, %arg1: i32) -> (i32, i32) {
    %c0_i32 = arith.constant 0 : i32
    %c0_i32_0 = arith.constant 0 : i32
    %c0_i32_1 = arith.constant 0 : i32
    return %c0_i32, %c0_i32_0 : i32, i32
  }
  func.func @transform_9(%arg0: i32, %arg1: i32) -> (i32, i32) {
    %c0_i32 = arith.constant 0 : i32
    %c0_i32_0 = arith.constant 0 : i32
    %c0_i32_1 = arith.constant 0 : i32
    return %c0_i32, %c0_i32_0 : i32, i32
  }
  func.func @transform_10(%arg0: i32, %arg1: i32) -> (i32, i32) {
    %c0_i32 = arith.constant 0 : i32
    %c0_i32_0 = arith.constant 0 : i32
    %c0_i32_1 = arith.constant 0 : i32
    return %c0_i32, %c0_i32_0 : i32, i32
  }
  func.func @transform_11(%arg0: i32, %arg1: i32) -> (i32, i32) {
    %c0_i32 = arith.constant 0 : i32
    %c0_i32_0 = arith.constant 0 : i32
    %c0_i32_1 = arith.constant 0 : i32
    return %c0_i32, %c0_i32_0 : i32, i32
  }
  func.func @transform_12(%arg0: i32, %arg1: i32) -> (i32, i32) {
    %c0_i32 = arith.constant 0 : i32
    %c0_i32_0 = arith.constant 0 : i32
    %c0_i32_1 = arith.constant 0 : i32
    return %c0_i32, %c0_i32_0 : i32, i32
  }
  func.func @transform_13(%arg0: i32, %arg1: i32) -> (i32, i32, i32, i32) {
    %c0_i32 = arith.constant 0 : i32
    %c0_i32_0 = arith.constant 0 : i32
    %c0_i32_1 = arith.constant 0 : i32
    return %arg0, %arg1, %c0_i32, %c0_i32_0 : i32, i32, i32, i32
  }
}

</mosaic_0001>

<llo_original>
// kernel: structure_update_forward.8
$region0: #{structure_update_forward.8}
  #allocation0 [shape = 'u32[]', space=smem, size = 0x4, offset = 0x4, fixed_abs, tag = 'smem constant byte address 0x4 - core index']
  #allocation1 [shape = 'u32[144,128]{1,0:T(1,128)}', space=vmem, size = 0x12000, scoped, tag = 'internal scratch']
  %s0 = inlined_call_operand.vmem [shape: f32[16,32], index: 0, kind: input, shape index: {}]
  %s1 = inlined_call_operand.vmem [shape: bf16[32,384], index: 1, kind: input, shape index: {}]
  %s2 = inlined_call_operand.vmem [shape: f32[1,384], index: 2, kind: input, shape index: {}]
  %s3 = inlined_call_operand.vmem [shape: f32[16,384], index: 3, kind: output, shape index: {}]
  %s4 = sld [smem:[#allocation0]]
  $region22: #{structure_update_forward.8} parent=0
    _
  %s6 = ssub.s32 1, %s4
  %s7 = scalar_select 0, %s6, %s4
  // Predicated region
  $region2: #{structure_update_forward.8} parent=0 // pred_check
    _
  $region3: #{structure_update_forward.8} parent=0 // pred_check_branch
    %9 = sbr.rel (0) target = $region5
  $region4: #{structure_update_forward.8} parent=0 // pred_region
    _
  $region5: #{structure_update_forward.8} parent=0 // pred_fallthru
    _
  // Predicated region
  $region6: #{structure_update_forward.8} parent=0 // pred_check
    _
  $region7: #{structure_update_forward.8} parent=0 // pred_check_branch
    %11 = sbr.rel (0) target = $region9
  $region8: #{structure_update_forward.8} parent=0 // pred_region
    _
  $region9: #{structure_update_forward.8} parent=0 // pred_fallthru
    _
  // Predicated region
  $region10: #{structure_update_forward.8} parent=0 // pred_check
    _
  $region11: #{structure_update_forward.8} parent=0 // pred_check_branch
    %13 = sbr.rel (0) target = $region13
  $region12: #{structure_update_forward.8} parent=0 // pred_region
    _
  $region13: #{structure_update_forward.8} parent=0 // pred_fallthru
    _
  %v15 = vld [vmem:[%s0] sm:$0xff]
  %v16 = vld [vmem:[%s0 + $0x8] sm:$0xff]
  %v17 = vpack.c.bf16 %v16, %v15
  %v18 = vld [vmem:[%s1] sm:$0xff]
  %v19 = vld [vmem:[%s1 + $0x8] sm:$0xf]
  %v20 = vld [vmem:[%s1 + $0xc] sm:$0xff]
  %v21 = vld [vmem:[%s1 + $0x14] sm:$0xf]
  %v22 = vld [vmem:[%s1 + $0x18] sm:$0xff]
  %v23 = vld [vmem:[%s1 + $0x20] sm:$0xf]
  %v24 = vld [vmem:[%s1 + $0x24] sm:$0xff]
  %v25 = vld [vmem:[%s1 + $0x2c] sm:$0xf]
  %v26 = vld [vmem:[%s2] sm:$0x7]
  %v28 = vlaneseq
  %v29 = vshrl.u32 %v28, 7
  %v30 = vsub.s32 0, %v29
  %v31 = vrot.slane %v26, %v30
  %v32 = vlaneseq
  %v33 = vshrl.u32 %v32, 7
  %v34 = vsub.s32 1, %v33
  %v35 = vrot.slane %v26, %v34
  %v36 = vlaneseq
  %v37 = vshrl.u32 %v36, 7
  %v38 = vsub.s32 2, %v37
  %v39 = vrot.slane %v26, %v38
  %v51 = vunpack.c.l.b16 %v18
  %v52 = vunpack.c.h.b16 %v18
  %v53 = vunpack.c.l.b16 %v19
  %v54 = vunpack.c.l.b16 %v20
  %v55 = vunpack.c.h.b16 %v20
  %v56 = vunpack.c.l.b16 %v21
  %v57 = vunpack.c.l.b16 %v22
  %v58 = vunpack.c.h.b16 %v22
  %v59 = vunpack.c.l.b16 %v23
  %v60 = vunpack.c.l.b16 %v24
  %v61 = vunpack.c.h.b16 %v24
  %v62 = vunpack.c.l.b16 %v25
  %v63 = vpack.c.b16 %v54, %v51
  %v64 = vpack.c.b16 %v55, %v52
  %v65 = vpack.c.b16 %v56, %v53
  %v66 = vpack.c.b16 %v60, %v57
  %v67 = vpack.c.b16 %v61, %v58
  %v68 = vpack.c.b16 %v62, %v59
  %vm75 = vcmask 261120
  %v77 = vsel %vm75, %v17, 0
  %79 = vmatprep.subr.bf16.mxu0 %v64
  %80 = vmatpush1.bf16.msra.mxu0 %v63
  %81 = vmatprep.subr.bf16.mxu0 %v67
  %82 = vmatpush1.bf16.msra.mxu0 %v66
  %83 = vmatprep.subr.bf16.mxu0 0
  %84 = vmatpush1.bf16.msra.mxu0 0
  %85 = vmatprep.subr.bf16.mxu0 0
  %86 = vmatpush1.bf16.msra.mxu0 0
  %87 = vmatprep.subr.bf16.mxu0 0
  %88 = vmatpush1.bf16.msra.mxu0 0
  %89 = vmatprep.subr.bf16.mxu0 0
  %90 = vmatpush1.bf16.msra.mxu0 0
  %91 = vmatprep.subr.bf16.mxu0 0
  %92 = vmatpush1.bf16.msra.mxu0 0
  %93 = vmatprep.subr.bf16.mxu0 0
  %94 = vmatpush1.bf16.msra.mxu0 0
  %95 = vmatprep.subr.bf16.mxu0 0
  %96 = vmatpush1.bf16.msra.mxu0 0
  %97 = vmatprep.subr.bf16.mxu0 0
  %98 = vmatpush1.bf16.msra.mxu0 0
  %99 = vmatprep.subr.bf16.mxu0 0
  %100 = vmatpush1.bf16.msra.mxu0 0
  %101 = vmatprep.subr.bf16.mxu0 0
  %102 = vmatpush1.bf16.msra.mxu0 0
  %103 = vmatprep.subr.bf16.mxu0 0
  %104 = vmatpush1.bf16.msra.mxu0 0
  %105 = vmatprep.subr.bf16.mxu0 0
  %106 = vmatpush1.bf16.msra.mxu0 0
  %107 = vmatprep.subr.bf16.mxu0 0
  %108 = vmatpush1.bf16.msra.mxu0 0
  %109 = vmatprep.subr.bf16.mxu0 0
  %110 = vmatpush1.bf16.msra.mxu0 0
  %111 = vmatprep.mubr.bf16.mxu0 0
  %112 = vmatmul.mubr.bf16.gmra.mrb[0].mxu0 %v77
  %v113 = vpop.f32.mrb[0].mxu0
  %v114 = vadd.f32 %v31, %v113
  %v115 = vpop.f32.mrb[0].mxu0
  %v116 = vadd.f32 %v35, %v115
  %v117 = vpop.f32.mrb[0].mxu0
  %v118 = vadd.f32 %v31, %v117
  %v119 = vpop.f32.mrb[0].mxu0
  %v120 = vadd.f32 %v35, %v119
  %121 = vdwg.mxu0
  %122 = vmatprep.subr.bf16.mxu0 0
  %123 = vmatpush1.bf16.msra.mxu0 %v65
  %124 = vmatprep.subr.bf16.mxu0 0
  %125 = vmatpush1.bf16.msra.mxu0 %v68
  %126 = vmatprep.subr.bf16.mxu0 0
  %127 = vmatpush1.bf16.msra.mxu0 0
  %128 = vmatprep.subr.bf16.mxu0 0
  %129 = vmatpush1.bf16.msra.mxu0 0
  %130 = vmatprep.subr.bf16.mxu0 0
  %131 = vmatpush1.bf16.msra.mxu0 0
  %132 = vmatprep.subr.bf16.mxu0 0
  %133 = vmatpush1.bf16.msra.mxu0 0
  %134 = vmatprep.subr.bf16.mxu0 0
  %135 = vmatpush1.bf16.msra.mxu0 0
  %136 = vmatprep.subr.bf16.mxu0 0
  %137 = vmatpush1.bf16.msra.mxu0 0
  %138 = vmatprep.subr.bf16.mxu0 0
  %139 = vmatpush1.bf16.msra.mxu0 0
  %140 = vmatprep.subr.bf16.mxu0 0
  %141 = vmatpush1.bf16.msra.mxu0 0
  %142 = vmatprep.subr.bf16.mxu0 0
  %143 = vmatpush1.bf16.msra.mxu0 0
  %144 = vmatprep.subr.bf16.mxu0 0
  %145 = vmatpush1.bf16.msra.mxu0 0
  %146 = vmatprep.subr.bf16.mxu0 0
  %147 = vmatpush1.bf16.msra.mxu0 0
  %148 = vmatprep.subr.bf16.mxu0 0
  %149 = vmatpush1.bf16.msra.mxu0 0
  %150 = vmatprep.subr.bf16.mxu0 0
  %151 = vmatpush1.bf16.msra.mxu0 0
  %152 = vmatprep.subr.bf16.mxu0 0
  %153 = vmatpush1.bf16.msra.mxu0 0
  %154 = vmatprep.mubr.bf16.mxu0 0
  %155 = vmatmul.mubr.bf16.gmra.mrb[0].mxu0 %v77
  %v156 = vpop.f32.mrb[0].mxu0
  %v157 = vadd.f32 %v39, %v156
  %v158 = vpop.f32.mrb[0].mxu0
  %v159 = vpop.f32.mrb[0].mxu0
  %v160 = vadd.f32 %v39, %v159
  %v161 = vpop.f32.mrb[0].mxu0
  %162 = vdwg.mxu0
  %163 = vst [vmem:[%s3] sm:$0xff] %v114
  %164 = vst [vmem:[%s3 + $0x8] sm:$0xff] %v116
  %165 = vst [vmem:[%s3 + $0x10] sm:$0xff] %v157
  %166 = vst [vmem:[%s3 + $0x18] sm:$0xff] %v118
  %167 = vst [vmem:[%s3 + $0x20] sm:$0xff] %v120
  %168 = vst [vmem:[%s3 + $0x28] sm:$0xff] %v160
  // Predicated region
  $region14: #{structure_update_forward.8} parent=0 // pred_check
    _
  $region15: #{structure_update_forward.8} parent=0 // pred_check_branch
    %170 = sbr.rel (0) target = $region17
  $region16: #{structure_update_forward.8} parent=0 // pred_region
    _
  $region17: #{structure_update_forward.8} parent=0 // pred_fallthru
    _
  // Predicated region
  $region18: #{structure_update_forward.8} parent=0 // pred_check
    _
  $region19: #{structure_update_forward.8} parent=0 // pred_check_branch
    %172 = sbr.rel (0) target = $region21
  $region20: #{structure_update_forward.8} parent=0 // pred_region
    _
  $region21: #{structure_update_forward.8} parent=0 // pred_fallthru
    _

// kernel: structure_update_forward.9
$region0: #{structure_update_forward.9}
  #allocation0 [shape = 'u32[]', space=smem, size = 0x4, offset = 0x4, fixed_abs, tag = 'smem constant byte address 0x4 - core index']
  #allocation1 [shape = 'u32[144,128]{1,0:T(1,128)}', space=vmem, size = 0x12000, scoped, tag = 'internal scratch']
  %s0 = inlined_call_operand.vmem [shape: bf16[2,4,8,29], index: 0, kind: input, shape index: {}]
  %s1 = inlined_call_operand.vmem [shape: bf16[2,4,8,29], index: 1, kind: input, shape index: {}]
  %s2 = inlined_call_operand.vmem [shape: bf16[2,4,8,40], index: 2, kind: input, shape index: {}]
  %s3 = inlined_call_operand.vmem [shape: bf16[2,8,8], index: 3, kind: input, shape index: {}]
  %s4 = inlined_call_operand.vmem [shape: bf16[2,8,8,16], index: 4, kind: input, shape index: {}]
  %s5 = inlined_call_operand.vmem [shape: bf16[4,16], index: 5, kind: input, shape index: {}]
  %s6 = inlined_call_operand.vmem [shape: f32[2,4,8,40], index: 6, kind: output, shape index: {0}]
  %s7 = inlined_call_operand.vmem [shape: f32[2,8,4,16], index: 7, kind: output, shape index: {1}]
  %8 = xla_tuple %s6, %s7
  %s9 = sld [smem:[#allocation0]]
  $region65: #{structure_update_forward.9} parent=0
    _
  %s11 = ssub.s32 1, %s9
  %s12 = scalar_select 0, %s11, %s9
  loop: start=0, step=1, limit=4
  $region2: #{structure_update_forward.9} parent=0 // loop_pre_header
    _
  $region3: #{structure_update_forward.9} parent=0 // loop_header
    %s14 = sphi 0, %s18
    %p15 = scmp.ge.s32.totalorder %s14, 4
    %s21 = sphi 0, %s33
    %s22 = sphi 0, %s29
    %s23 = sphi 0, %s21
    %s24 = sphi 0, %s22
    %s25 = sphi 0, %s23
    %s26 = sphi 0, %s24
    %s38 = sphi 0, %s40
    %s41 = sphi 0, %s38
    %s42 = sphi 0, %s41
    %s58 = sphi 0, %s42
    %s64 = sphi 0, %s66
    %s67 = sphi 0, %s64
    %s68 = sphi 0, %s67
    %s84 = sphi 0, %s68
    %s90 = sphi 0, %s92
    %s93 = sphi 0, %s90
    %s94 = sphi 0, %s93
    %s110 = sphi 0, %s94
    %s118 = sphi 0, %s120
    %s121 = sphi 0, %s118
    %s122 = sphi 0, %s121
    %s138 = sphi 0, %s122
    %s146 = sphi 0, %s148
    %s149 = sphi 0, %s146
    %s150 = sphi 0, %s149
    %s166 = sphi 0, %s150
    %s170 = sphi 0, %s170
    %s172 = sphi 0, %s170
    %s173 = sphi 0, %s172
    %s187 = sphi 0, %s173
    %s195 = sphi 0, %s197
    %s198 = sphi 0, %s195
    %s199 = sphi 0, %s198
    %s215 = sphi 0, %s199
    %s223 = sphi 0, %s225
    %s226 = sphi 0, %s223
    %s227 = sphi 0, %s226
    %s243 = sphi 0, %s227
  $region4: #{structure_update_forward.9} parent=0 // loop_header_branch
    %17 = sbr.rel (%p15) target = $region8
  $region5: #{structure_update_forward.9} parent=0 // loop_body
    %s19 = ssub.s32 %s14, 1
    %s20 = ssub.s32 %s14, 2
    %s27 = sadd.s32 1, %s22
    %p28 = scmp.ge.s32.totalorder %s27, 1
    %s29 = scalar_select %p28, 0, %s27
    %s30 = sadd.s32 1, %s21
    %s31 = scalar_select %p28, %s30, %s21
    %p32 = scmp.ge.s32.totalorder %s31, 2
    %s33 = scalar_select %p32, 0, %s31
    %s34 = ssub.s32 %s21, %s33
    %s35 = ssub.s32 %s22, %s29
    %s36 = sor.u32 %s34, %s35
    %p37 = scmp.eq.s32.totalorder %s36, 0
    %s39 = sadd.s32 %s38, 1
    %s40 = scalar_select %p37, %s38, %s39
    %p43 = pneg %p37
    %p44 = scmp.eq.s32.totalorder %s14, 1
    %p45 = por %p43, %p44
    %p46 = scmp.ne.s32.totalorder %s38, %s41
    %p47 = scmp.eq.s32.totalorder %s14, 0
    %p48 = por %p46, %p47
    %p49 = scmp.ne.s32.totalorder %s38, %s41
    %p50 = scmp.eq.s32.totalorder %s19, 1
    %p51 = por %p49, %p50
    %p52 = scmp.ne.s32.totalorder %s41, %s42
    %p53 = scmp.eq.s32.totalorder %s19, 0
    %p54 = por %p52, %p53
    %p55 = scmp.ne.s32.totalorder %s41, %s42
    %p56 = scmp.eq.s32.totalorder %s20, 1
    %p57 = por %p55, %p56
    %p59 = scmp.ne.s32.totalorder %s42, %s58
    %p60 = scmp.eq.s32.totalorder %s20, 0
    %p61 = por %p59, %p60
    %s62 = ssub.s32 %s21, %s33
    %p63 = scmp.eq.s32.totalorder %s62, 0
    %s65 = sadd.s32 %s64, 1
    %s66 = scalar_select %p63, %s64, %s65
    %p69 = pneg %p63
    %p70 = scmp.eq.s32.totalorder %s14, 1
    %p71 = por %p69, %p70
    %p72 = scmp.ne.s32.totalorder %s64, %s67
    %p73 = scmp.eq.s32.totalorder %s14, 0
    %p74 = por %p72, %p73
    %p75 = scmp.ne.s32.totalorder %s64, %s67
    %p76 = scmp.eq.s32.totalorder %s19, 1
    %p77 = por %p75, %p76
    %p78 = scmp.ne.s32.totalorder %s67, %s68
    %p79 = scmp.eq.s32.totalorder %s19, 0
    %p80 = por %p78, %p79
    %p81 = scmp.ne.s32.totalorder %s67, %s68
    %p82 = scmp.eq.s32.totalorder %s20, 1
    %p83 = por %p81, %p82
    %p85 = scmp.ne.s32.totalorder %s68, %s84
    %p86 = scmp.eq.s32.totalorder %s20, 0
    %p87 = por %p85, %p86
    %s88 = ssub.s32 %s21, %s33
    %p89 = scmp.eq.s32.totalorder %s88, 0
    %s91 = sadd.s32 %s90, 1
    %s92 = scalar_select %p89, %s90, %s91
    %p95 = pneg %p89
    %p96 = scmp.eq.s32.totalorder %s14, 1
    %p97 = por %p95, %p96
    %p98 = scmp.ne.s32.totalorder %s90, %s93
    %p99 = scmp.eq.s32.totalorder %s14, 0
    %p100 = por %p98, %p99
    %p101 = scmp.ne.s32.totalorder %s90, %s93
    %p102 = scmp.eq.s32.totalorder %s19, 1
    %p103 = por %p101, %p102
    %p104 = scmp.ne.s32.totalorder %s93, %s94
    %p105 = scmp.eq.s32.totalorder %s19, 0
    %p106 = por %p104, %p105
    %p107 = scmp.ne.s32.totalorder %s93, %s94
    %p108 = scmp.eq.s32.totalorder %s20, 1
    %p109 = por %p107, %p108
    %p111 = scmp.ne.s32.totalorder %s94, %s110
    %p112 = scmp.eq.s32.totalorder %s20, 0
    %p113 = por %p111, %p112
    %s114 = ssub.s32 %s21, %s33
    %s115 = ssub.s32 %s22, %s29
    %s116 = sor.u32 %s114, %s115
    %p117 = scmp.eq.s32.totalorder %s116, 0
    %s119 = sadd.s32 %s118, 1
    %s120 = scalar_select %p117, %s118, %s119
    %p123 = pneg %p117
    %p124 = scmp.eq.s32.totalorder %s14, 1
    %p125 = por %p123, %p124
    %p126 = scmp.ne.s32.totalorder %s118, %s121
    %p127 = scmp.eq.s32.totalorder %s14, 0
    %p128 = por %p126, %p127
    %p129 = scmp.ne.s32.totalorder %s118, %s121
    %p130 = scmp.eq.s32.totalorder %s19, 1
    %p131 = por %p129, %p130
    %p132 = scmp.ne.s32.totalorder %s121, %s122
    %p133 = scmp.eq.s32.totalorder %s19, 0
    %p134 = por %p132, %p133
    %p135 = scmp.ne.s32.totalorder %s121, %s122
    %p136 = scmp.eq.s32.totalorder %s20, 1
    %p137 = por %p135, %p136
    %p139 = scmp.ne.s32.totalorder %s122, %s138
    %p140 = scmp.eq.s32.totalorder %s20, 0
    %p141 = por %p139, %p140
    %s142 = ssub.s32 %s21, %s33
    %s143 = ssub.s32 %s22, %s29
    %s144 = sor.u32 %s142, %s143
    %p145 = scmp.eq.s32.totalorder %s144, 0
    %s147 = sadd.s32 %s146, 1
    %s148 = scalar_select %p145, %s146, %s147
    %p151 = pneg %p145
    %p152 = scmp.eq.s32.totalorder %s14, 1
    %p153 = por %p151, %p152
    %p154 = scmp.ne.s32.totalorder %s146, %s149
    %p155 = scmp.eq.s32.totalorder %s14, 0
    %p156 = por %p154, %p155
    %p157 = scmp.ne.s32.totalorder %s146, %s149
    %p158 = scmp.eq.s32.totalorder %s19, 1
    %p159 = por %p157, %p158
    %p160 = scmp.ne.s32.totalorder %s149, %s150
    %p161 = scmp.eq.s32.totalorder %s19, 0
    %p162 = por %p160, %p161
    %p163 = scmp.ne.s32.totalorder %s149, %s150
    %p164 = scmp.eq.s32.totalorder %s20, 1
    %p165 = por %p163, %p164
    %p167 = scmp.ne.s32.totalorder %s150, %s166
    %p168 = scmp.eq.s32.totalorder %s20, 0
    %p169 = por %p167, %p168
    %s171 = sadd.s32 %s170, 1
    %p174 = scmp.eq.s32.totalorder %s14, 1
    %p175 = scmp.ne.s32.totalorder %s170, %s172
    %p176 = scmp.eq.s32.totalorder %s14, 0
    %p177 = por %p175, %p176
    %p178 = scmp.ne.s32.totalorder %s170, %s172
    %p179 = scmp.eq.s32.totalorder %s19, 1
    %p180 = por %p178, %p179
    %p181 = scmp.ne.s32.totalorder %s172, %s173
    %p182 = scmp.eq.s32.totalorder %s19, 0
    %p183 = por %p181, %p182
    %p184 = scmp.ne.s32.totalorder %s172, %s173
    %p185 = scmp.eq.s32.totalorder %s20, 1
    %p186 = por %p184, %p185
    %p188 = scmp.ne.s32.totalorder %s173, %s187
    %p189 = scmp.eq.s32.totalorder %s20, 0
    %p190 = por %p188, %p189
    %s191 = ssub.s32 %s21, %s33
    %s192 = ssub.s32 %s22, %s29
    %s193 = sor.u32 %s191, %s192
    %p194 = scmp.eq.s32.totalorder %s193, 0
    %s196 = sadd.s32 %s195, 1
    %s197 = scalar_select %p194, %s195, %s196
    %p200 = pneg %p194
    %p201 = scmp.eq.s32.totalorder %s14, 1
    %p202 = por %p200, %p201
    %p203 = scmp.ne.s32.totalorder %s195, %s198
    %p204 = scmp.eq.s32.totalorder %s14, 0
    %p205 = por %p203, %p204
    %p206 = scmp.ne.s32.totalorder %s195, %s198
    %p207 = scmp.eq.s32.totalorder %s19, 1
    %p208 = por %p206, %p207
    %p209 = scmp.ne.s32.totalorder %s198, %s199
    %p210 = scmp.eq.s32.totalorder %s19, 0
    %p211 = por %p209, %p210
    %p212 = scmp.ne.s32.totalorder %s198, %s199
    %p213 = scmp.eq.s32.totalorder %s20, 1
    %p214 = por %p212, %p213
    %p216 = scmp.ne.s32.totalorder %s199, %s215
    %p217 = scmp.eq.s32.totalorder %s20, 0
    %p218 = por %p216, %p217
    %s219 = ssub.s32 %s21, %s33
    %s220 = ssub.s32 %s22, %s29
    %s221 = sor.u32 %s219, %s220
    %p222 = scmp.eq.s32.totalorder %s221, 0
    %s224 = sadd.s32 %s223, 1
    %s225 = scalar_select %p222, %s223, %s224
    %p228 = pneg %p222
    %p229 = scmp.eq.s32.totalorder %s14, 1
    %p230 = por %p228, %p229
    %p231 = scmp.ne.s32.totalorder %s223, %s226
    %p232 = scmp.eq.s32.totalorder %s14, 0
    %p233 = por %p231, %p232
    %p234 = scmp.ne.s32.totalorder %s223, %s226
    %p235 = scmp.eq.s32.totalorder %s19, 1
    %p236 = por %p234, %p235
    %p237 = scmp.ne.s32.totalorder %s226, %s227
    %p238 = scmp.eq.s32.totalorder %s19, 0
    %p239 = por %p237, %p238
    %p240 = scmp.ne.s32.totalorder %s226, %s227
    %p241 = scmp.eq.s32.totalorder %s20, 1
    %p242 = por %p240, %p241
    %p244 = scmp.ne.s32.totalorder %s227, %s243
    %p245 = scmp.eq.s32.totalorder %s20, 0
    %p246 = por %p244, %p245
    %p247 = scmp.le.s32.totalorder 1, %s14
    %p248 = scmp.lt.s32.totalorder %s14, 3
    %p249 = pnand %p247, %p248
    %p250 = pneg %p249
    // Predicated region
    $region9: #{structure_update_forward.9} parent=5 // pred_check
      _
    $region10: #{structure_update_forward.9} parent=5 // pred_check_branch
      %252 = sbr.rel (%p249) target = $region12
    $region11: #{structure_update_forward.9} parent=5 // pred_region
      %s253 = ssub.s32 %s14, 1
      // Predicated region
      $region13: #{structure_update_forward.9} parent=11 // pred_check
        %p254 = pneg %p183
      $region14: #{structure_update_forward.9} parent=11 // pred_check_branch
        %256 = sbr.rel (%p254) target = $region16
      $region15: #{structure_update_forward.9} parent=11 // pred_region
        _
      $region16: #{structure_update_forward.9} parent=11 // pred_fallthru
        _
    $region12: #{structure_update_forward.9} parent=5 // pred_fallthru
      _
    %p257 = scmp.lt.s32.totalorder %s14, 2
    // Predicated region
    $region17: #{structure_update_forward.9} parent=5 // pred_check
      %p258 = pneg %p257
    $region18: #{structure_update_forward.9} parent=5 // pred_check_branch
      %260 = sbr.rel (%p258) target = $region20
    $region19: #{structure_update_forward.9} parent=5 // pred_region
      // Predicated region
      $region21: #{structure_update_forward.9} parent=19 // pred_check
        %p261 = pneg %p48
      $region22: #{structure_update_forward.9} parent=19 // pred_check_branch
        %263 = sbr.rel (%p261) target = $region24
      $region23: #{structure_update_forward.9} parent=19 // pred_region
        %p264 = scmp.lt.s32.totalorder %s21, 1
        %s265 = scalar_select %p264, %s21, 1
        %p266 = scmp.lt.s32.totalorder %s22, 0
        %s267 = scalar_select %p266, %s22, 0
        %s268 = smul.addr %s265, 4
        %s269 = sadd.s32 %s267, %s268
        %s270 = smul.addr %s269, 4
        %s271 = scalar_lea.vmem %s0, %s270
      $region24: #{structure_update_forward.9} parent=19 // pred_fallthru
        _
      // Predicated region
      $region25: #{structure_update_forward.9} parent=19 // pred_check
        %p272 = pneg %p74
      $region26: #{structure_update_forward.9} parent=19 // pred_check_branch
        %274 = sbr.rel (%p272) target = $region28
      $region27: #{structure_update_forward.9} parent=19 // pred_region
        %p275 = scmp.lt.s32.totalorder %s21, 1
        %s276 = scalar_select %p275, %s21, 1
        %s277 = smul.addr %s276, 4
        %s278 = smul.addr %s277, 4
        %s279 = scalar_lea.vmem %s1, %s278
      $region28: #{structure_update_forward.9} parent=19 // pred_fallthru
        _
      // Predicated region
      $region29: #{structure_update_forward.9} parent=19 // pred_check
        %p280 = pneg %p100
      $region30: #{structure_update_forward.9} parent=19 // pred_check_branch
        %282 = sbr.rel (%p280) target = $region32
      $region31: #{structure_update_forward.9} parent=19 // pred_region
        %p283 = scmp.lt.s32.totalorder %s21, 1
        %s284 = scalar_select %p283, %s21, 1
        %s285 = smul.addr %s284, 4
        %s286 = smul.addr %s285, 4
        %s287 = scalar_lea.vmem %s2, %s286
      $region32: #{structure_update_forward.9} parent=19 // pred_fallthru
        _
      // Predicated region
      $region33: #{structure_update_forward.9} parent=19 // pred_check
        %p288 = pneg %p128
      $region34: #{structure_update_forward.9} parent=19 // pred_check_branch
        %290 = sbr.rel (%p288) target = $region36
      $region35: #{structure_update_forward.9} parent=19 // pred_region
        %p291 = scmp.lt.s32.totalorder %s21, 1
        %s292 = scalar_select %p291, %s21, 1
        %p293 = scmp.lt.s32.totalorder %s22, 0
        %s294 = scalar_select %p293, %s22, 0
        %s295 = sadd.s32 %s294, %s292
        %s296 = smul.addr %s295, 4
        %s297 = scalar_lea.vmem %s3, %s296
      $region36: #{structure_update_forward.9} parent=19 // pred_fallthru
        _
      // Predicated region
      $region37: #{structure_update_forward.9} parent=19 // pred_check
        %p298 = pneg %p156
      $region38: #{structure_update_forward.9} parent=19 // pred_check_branch
        %300 = sbr.rel (%p298) target = $region40
      $region39: #{structure_update_forward.9} parent=19 // pred_region
        %s301 = smul.u32 8, %s22
        %p302 = scmp.lt.s32.totalorder %s21, 1
        %s303 = scalar_select %p302, %s21, 1
        %p304 = scmp.lt.s32.totalorder %s301, 7
        %s305 = scalar_select %p304, %s301, 7
        %s306 = smul.addr %s303, 8
        %s307 = sadd.s32 %s305, %s306
        %s308 = smul.addr %s307, 4
        %s309 = scalar_lea.vmem %s4, %s308
        %s310 = smul.u32 8, %s22
      $region40: #{structure_update_forward.9} parent=19 // pred_fallthru
        _
    $region20: #{structure_update_forward.9} parent=5 // pred_fallthru
      _
    %p311 = scmp.le.s32.totalorder 1, %s14
    %p312 = scmp.lt.s32.totalorder %s14, 3
    %p313 = pnand %p311, %p312
    %p314 = pneg %p313
    // Predicated region
    $region41: #{structure_update_forward.9} parent=5 // pred_check
      _
    $region42: #{structure_update_forward.9} parent=5 // pred_check_branch
      %316 = sbr.rel (%p313) target = $region44
    $region43: #{structure_update_forward.9} parent=5 // pred_region
      %s317 = ssub.s32 %s14, 1
      %p318 = scmp.lt.s32.totalorder %s23, 1
      %s319 = scalar_select %p318, %s23, 1
      %p320 = scmp.lt.s32.totalorder %s24, 0
      %s321 = scalar_select %p320, %s24, 0
      %s322 = smul.addr %s319, 4
      %s323 = sadd.s32 %s321, %s322
      %s324 = smul.addr %s323, 4
      %s325 = scalar_lea.vmem %s0, %s324
      %p326 = pneg %p54
      %p327 = pneg %p51
      %p328 = scmp.lt.s32.totalorder %s23, 1
      %s329 = scalar_select %p328, %s23, 1
      %s330 = smul.addr %s329, 4
      %s331 = smul.addr %s330, 4
      %s332 = scalar_lea.vmem %s1, %s331
      %p333 = pneg %p80
      %p334 = pneg %p77
      %p335 = scmp.lt.s32.totalorder %s23, 1
      %s336 = scalar_select %p335, %s23, 1
      %s337 = smul.addr %s336, 4
      %s338 = smul.addr %s337, 4
      %s339 = scalar_lea.vmem %s2, %s338
      %p340 = pneg %p106
      %p341 = pneg %p103
      %p342 = scmp.lt.s32.totalorder %s23, 1
      %s343 = scalar_select %p342, %s23, 1
      %p344 = scmp.lt.s32.totalorder %s24, 0
      %s345 = scalar_select %p344, %s24, 0
      %s346 = sadd.s32 %s345, %s343
      %s347 = smul.addr %s346, 4
      %s348 = scalar_lea.vmem %s3, %s347
      %p349 = pneg %p134
      %p350 = pneg %p131
      %s351 = smul.u32 8, %s24
      %p352 = scmp.lt.s32.totalorder %s23, 1
      %s353 = scalar_select %p352, %s23, 1
      %p354 = scmp.lt.s32.totalorder %s351, 7
      %s355 = scalar_select %p354, %s351, 7
      %s356 = smul.addr %s353, 8
      %s357 = sadd.s32 %s355, %s356
      %s358 = smul.addr %s357, 4
      %s359 = scalar_lea.vmem %s4, %s358
      %p360 = pneg %p162
      %p361 = pneg %p159
      %p362 = pneg %p183
      %p363 = pneg %p180
      %p364 = pneg %p211
      %p365 = pneg %p208
      %p366 = scmp.lt.s32.totalorder %s23, 1
      %s367 = scalar_select %p366, %s23, 1
      %p368 = scmp.lt.s32.totalorder %s24, 0
      %s369 = scalar_select %p368, %s24, 0
      %s370 = smul.addr %s367, 4
      %s371 = sadd.s32 %s369, %s370
      %s372 = smul.addr %s371, 8
      %s373 = scalar_lea.vmem %s6, %s372
      %p374 = pneg %p239
      %p375 = pneg %p236
      %s376 = smul.u32 8, %s24
      %p377 = scmp.lt.s32.totalorder %s23, 1
      %s378 = scalar_select %p377, %s23, 1
      %p379 = scmp.lt.s32.totalorder %s376, 7
      %s380 = scalar_select %p379, %s376, 7
      %s381 = smul.addr %s378, 8
      %s382 = sadd.s32 %s380, %s381
      %s383 = smul.addr %s382, 4
      %s384 = scalar_lea.vmem %s7, %s383
      %p385 = scmp.lt.s32.totalorder %s23, 1
      %s386 = scalar_select %p385, %s23, 1
      %p387 = scmp.lt.s32.totalorder %s24, 0
      %s388 = scalar_select %p387, %s24, 0
      %s389 = smul.addr %s386, 4
      %s390 = sadd.s32 %s388, %s389
      %s391 = smul.addr %s390, 4
      %s392 = scalar_lea.vmem %s0, %s391
      %p393 = scmp.lt.s32.totalorder %s23, 1
      %s394 = scalar_select %p393, %s23, 1
      %s395 = smul.addr %s394, 4
      %s396 = smul.addr %s395, 4
      %s397 = scalar_lea.vmem %s1, %s396
      %p398 = scmp.lt.s32.totalorder %s23, 1
      %s399 = scalar_select %p398, %s23, 1
      %s400 = smul.addr %s399, 4
      %s401 = smul.addr %s400, 4
      %s402 = scalar_lea.vmem %s2, %s401
      %p403 = scmp.lt.s32.totalorder %s23, 1
      %s404 = scalar_select %p403, %s23, 1
      %p405 = scmp.lt.s32.totalorder %s24, 0
      %s406 = scalar_select %p405, %s24, 0
      %s407 = sadd.s32 %s406, %s404
      %s408 = smul.addr %s407, 4
      %s409 = scalar_lea.vmem %s3, %s408
      %s410 = smul.u32 8, %s24
      %p411 = scmp.lt.s32.totalorder %s23, 1
      %s412 = scalar_select %p411, %s23, 1
      %p413 = scmp.lt.s32.totalorder %s410, 7
      %s414 = scalar_select %p413, %s410, 7
      %s415 = smul.addr %s412, 8
      %s416 = sadd.s32 %s414, %s415
      %s417 = smul.addr %s416, 4
      %s418 = scalar_lea.vmem %s4, %s417
      %s419 = smul.u32 8, %s24
      %p420 = scmp.lt.s32.totalorder %s23, 1
      %s421 = scalar_select %p420, %s23, 1
      %p422 = scmp.lt.s32.totalorder %s24, 0
      %s423 = scalar_select %p422, %s24, 0
      %s424 = smul.addr %s421, 4
      %s425 = sadd.s32 %s423, %s424
      %s426 = smul.addr %s425, 8
      %s427 = scalar_lea.vmem %s6, %s426
      %s428 = smul.u32 8, %s24
      %p429 = scmp.lt.s32.totalorder %s23, 1
      %s430 = scalar_select %p429, %s23, 1
      %p431 = scmp.lt.s32.totalorder %s428, 7
      %s432 = scalar_select %p431, %s428, 7
      %s433 = smul.addr %s430, 8
      %s434 = sadd.s32 %s432, %s433
      %s435 = smul.addr %s434, 4
      %s436 = scalar_lea.vmem %s7, %s435
      %s437 = smul.u32 8, %s24
      %v439 = vld [vmem:[%s392] sm:$0xf]
      %v440 = vld [vmem:[%s392 + $0x4] sm:$0xf]
      %v441 = vld [vmem:[%s392 + $0x8] sm:$0xf]
      %v442 = vld [vmem:[%s392 + $0xc] sm:$0xf]
      %v443 = vld [vmem:[%s397] sm:$0xf]
      %v444 = vld [vmem:[%s397 + $0x4] sm:$0xf]
      %v445 = vld [vmem:[%s397 + $0x8] sm:$0xf]
      %v446 = vld [vmem:[%s397 + $0xc] sm:$0xf]
      %v447 = vld [vmem:[%s418] sm:$0xf]
      %v448 = vld [vmem:[%s418 + $0x4] sm:$0xf]
      %v449 = vld [vmem:[%s418 + $0x8] sm:$0xf]
      %v450 = vld [vmem:[%s418 + $0xc] sm:$0xf]
      %v451 = vld [vmem:[%s418 + $0x10] sm:$0xf]
      %v452 = vld [vmem:[%s418 + $0x14] sm:$0xf]
      %v453 = vld [vmem:[%s418 + $0x18] sm:$0xf]
      %v454 = vld [vmem:[%s418 + $0x1c] sm:$0xf]
      %v455 = vld [vmem:[%s5] sm:$0x3]
      %vm456 = vcmask 130048
      %v458 = vsel %vm456, %v455, 0
      %v461 = vsel %vm456, %v447, 0
      %463 = vmatprep.subr.bf16.mxu0 0
      %464 = vmatpush1.bf16.xpose.msra.mxu0 %v461
      %465 = vmatprep.subr.bf16.mxu0 0
      %466 = vmatpush1.bf16.xpose.msra.mxu0 0
      %467 = vmatprep.subr.bf16.mxu0 0
      %468 = vmatpush1.bf16.xpose.msra.mxu0 0
      %469 = vmatprep.subr.bf16.mxu0 0
      %470 = vmatpush1.bf16.xpose.msra.mxu0 0
      %471 = vmatprep.subr.bf16.mxu0 0
      %472 = vmatpush1.bf16.xpose.msra.mxu0 0
      %473 = vmatprep.subr.bf16.mxu0 0
      %474 = vmatpush1.bf16.xpose.msra.mxu0 0
      %475 = vmatprep.subr.bf16.mxu0 0
      %476 = vmatpush1.bf16.xpose.msra.mxu0 0
      %477 = vmatprep.subr.bf16.mxu0 0
      %478 = vmatpush1.bf16.xpose.msra.mxu0 0
      %479 = vmatprep.subr.bf16.mxu0 0
      %480 = vmatpush1.bf16.xpose.msra.mxu0 0
      %481 = vmatprep.subr.bf16.mxu0 0
      %482 = vmatpush1.bf16.xpose.msra.mxu0 0
      %483 = vmatprep.subr.bf16.mxu0 0
      %484 = vmatpush1.bf16.xpose.msra.mxu0 0
      %485 = vmatprep.subr.bf16.mxu0 0
      %486 = vmatpush1.bf16.xpose.msra.mxu0 0
      %487 = vmatprep.subr.bf16.mxu0 0
      %488 = vmatpush1.bf16.xpose.msra.mxu0 0
      %489 = vmatprep.subr.bf16.mxu0 0
      %490 = vmatpush1.bf16.xpose.msra.mxu0 0
      %491 = vmatprep.subr.bf16.mxu0 0
      %492 = vmatpush1.bf16.xpose.msra.mxu0 0
      %493 = vmatprep.subr.bf16.mxu0 0
      %494 = vmatpush1.bf16.xpose.msra.mxu0 0
      %495 = vmatprep.mubr.bf16.mxu0 0
      %496 = vmatmul.mubr.bf16.gmra.mrb[0].mxu0 %v458
      %v497 = vpop.f32.mrb[0].mxu0
      %v498 = vadd.f32 0.0, %v497
      %v499 = vpop.f32.mrb[0].mxu0
      %v500 = vpop.f32.mrb[0].mxu0
      %v501 = vpop.f32.mrb[0].mxu0
      %502 = vdwg.mxu0
      %v504 = vsel %vm456, %v448, 0
      %506 = vmatprep.subr.bf16.mxu0 0
      %507 = vmatpush1.bf16.xpose.msra.mxu0 %v504
      %508 = vmatprep.subr.bf16.mxu0 0
      %509 = vmatpush1.bf16.xpose.msra.mxu0 0
      %510 = vmatprep.subr.bf16.mxu0 0
      %511 = vmatpush1.bf16.xpose.msra.mxu0 0
      %512 = vmatprep.subr.bf16.mxu0 0
      %513 = vmatpush1.bf16.xpose.msra.mxu0 0
      %514 = vmatprep.subr.bf16.mxu0 0
      %515 = vmatpush1.bf16.xpose.msra.mxu0 0
      %516 = vmatprep.subr.bf16.mxu0 0
      %517 = vmatpush1.bf16.xpose.msra.mxu0 0
      %518 = vmatprep.subr.bf16.mxu0 0
      %519 = vmatpush1.bf16.xpose.msra.mxu0 0
      %520 = vmatprep.subr.bf16.mxu0 0
      %521 = vmatpush1.bf16.xpose.msra.mxu0 0
      %522 = vmatprep.subr.bf16.mxu0 0
      %523 = vmatpush1.bf16.xpose.msra.mxu0 0
      %524 = vmatprep.subr.bf16.mxu0 0
      %525 = vmatpush1.bf16.xpose.msra.mxu0 0
      %526 = vmatprep.subr.bf16.mxu0 0
      %527 = vmatpush1.bf16.xpose.msra.mxu0 0
      %528 = vmatprep.subr.bf16.mxu0 0
      %529 = vmatpush1.bf16.xpose.msra.mxu0 0
      %530 = vmatprep.subr.bf16.mxu0 0
      %531 = vmatpush1.bf16.xpose.msra.mxu0 0
      %532 = vmatprep.subr.bf16.mxu0 0
      %533 = vmatpush1.bf16.xpose.msra.mxu0 0
      %534 = vmatprep.subr.bf16.mxu0 0
      %535 = vmatpush1.bf16.xpose.msra.mxu0 0
      %536 = vmatprep.subr.bf16.mxu0 0
      %537 = vmatpush1.bf16.xpose.msra.mxu0 0
      %538 = vmatprep.mubr.bf16.mxu0 0
      %539 = vmatmul.mubr.bf16.gmra.mrb[0].mxu0 %v458
      %v540 = vpop.f32.mrb[0].mxu0
      %v541 = vadd.f32 0.0, %v540
      %v542 = vpop.f32.mrb[0].mxu0
      %v543 = vpop.f32.mrb[0].mxu0
      %v544 = vpop.f32.mrb[0].mxu0
      %545 = vdwg.mxu0
      %v547 = vsel %vm456, %v449, 0
      %549 = vmatprep.subr.bf16.mxu0 0
      %550 = vmatpush1.bf16.xpose.msra.mxu0 %v547
      %551 = vmatprep.subr.bf16.mxu0 0
      %552 = vmatpush1.bf16.xpose.msra.mxu0 0
      %553 = vmatprep.subr.bf16.mxu0 0
      %554 = vmatpush1.bf16.xpose.msra.mxu0 0
      %555 = vmatprep.subr.bf16.mxu0 0
      %556 = vmatpush1.bf16.xpose.msra.mxu0 0
      %557 = vmatprep.subr.bf16.mxu0 0
      %558 = vmatpush1.bf16.xpose.msra.mxu0 0
      %559 = vmatprep.subr.bf16.mxu0 0
      %560 = vmatpush1.bf16.xpose.msra.mxu0 0
      %561 = vmatprep.subr.bf16.mxu0 0
      %562 = vmatpush1.bf16.xpose.msra.mxu0 0
      %563 = vmatprep.subr.bf16.mxu0 0
      %564 = vmatpush1.bf16.xpose.msra.mxu0 0
      %565 = vmatprep.subr.bf16.mxu0 0
      %566 = vmatpush1.bf16.xpose.msra.mxu0 0
      %567 = vmatprep.subr.bf16.mxu0 0
      %568 = vmatpush1.bf16.xpose.msra.mxu0 0
      %569 = vmatprep.subr.bf16.mxu0 0
      %570 = vmatpush1.bf16.xpose.msra.mxu0 0
      %571 = vmatprep.subr.bf16.mxu0 0
      %572 = vmatpush1.bf16.xpose.msra.mxu0 0
      %573 = vmatprep.subr.bf16.mxu0 0
      %574 = vmatpush1.bf16.xpose.msra.mxu0 0
      %575 = vmatprep.subr.bf16.mxu0 0
      %576 = vmatpush1.bf16.xpose.msra.mxu0 0
      %577 = vmatprep.subr.bf16.mxu0 0
      %578 = vmatpush1.bf16.xpose.msra.mxu0 0
      %579 = vmatprep.subr.bf16.mxu0 0
      %580 = vmatpush1.bf16.xpose.msra.mxu0 0
      %581 = vmatprep.mubr.bf16.mxu0 0
      %582 = vmatmul.mubr.bf16.gmra.mrb[0].mxu0 %v458
      %v583 = vpop.f32.mrb[0].mxu0
      %v584 = vadd.f32 0.0, %v583
      %v585 = vpop.f32.mrb[0].mxu0
      %v586 = vpop.f32.mrb[0].mxu0
      %v587 = vpop.f32.mrb[0].mxu0
      %588 = vdwg.mxu0
      %v590 = vsel %vm456, %v450, 0
      %592 = vmatprep.subr.bf16.mxu0 0
      %593 = vmatpush1.bf16.xpose.msra.mxu0 %v590
      %594 = vmatprep.subr.bf16.mxu0 0
      %595 = vmatpush1.bf16.xpose.msra.mxu0 0
      %596 = vmatprep.subr.bf16.mxu0 0
      %597 = vmatpush1.bf16.xpose.msra.mxu0 0
      %598 = vmatprep.subr.bf16.mxu0 0
      %599 = vmatpush1.bf16.xpose.msra.mxu0 0
      %600 = vmatprep.subr.bf16.mxu0 0
      %601 = vmatpush1.bf16.xpose.msra.mxu0 0
      %602 = vmatprep.subr.bf16.mxu0 0
      %603 = vmatpush1.bf16.xpose.msra.mxu0 0
      %604 = vmatprep.subr.bf16.mxu0 0
      %605 = vmatpush1.bf16.xpose.msra.mxu0 0
      %606 = vmatprep.subr.bf16.mxu0 0
      %607 = vmatpush1.bf16.xpose.msra.mxu0 0
      %608 = vmatprep.subr.bf16.mxu0 0
      %609 = vmatpush1.bf16.xpose.msra.mxu0 0
      %610 = vmatprep.subr.bf16.mxu0 0
      %611 = vmatpush1.bf16.xpose.msra.mxu0 0
      %612 = vmatprep.subr.bf16.mxu0 0
      %613 = vmatpush1.bf16.xpose.msra.mxu0 0
      %614 = vmatprep.subr.bf16.mxu0 0
      %615 = vmatpush1.bf16.xpose.msra.mxu0 0
      %616 = vmatprep.subr.bf16.mxu0 0
      %617 = vmatpush1.bf16.xpose.msra.mxu0 0
      %618 = vmatprep.subr.bf16.mxu0 0
      %619 = vmatpush1.bf16.xpose.msra.mxu0 0
      %620 = vmatprep.subr.bf16.mxu0 0
      %621 = vmatpush1.bf16.xpose.msra.mxu0 0
      %622 = vmatprep.subr.bf16.mxu0 0
      %623 = vmatpush1.bf16.xpose.msra.mxu0 0
      %624 = vmatprep.mubr.bf16.mxu0 0
      %625 = vmatmul.mubr.bf16.gmra.mrb[0].mxu0 %v458
      %v626 = vpop.f32.mrb[0].mxu0
      %v627 = vadd.f32 0.0, %v626
      %v628 = vpop.f32.mrb[0].mxu0
      %v629 = vpop.f32.mrb[0].mxu0
      %v630 = vpop.f32.mrb[0].mxu0
      %631 = vdwg.mxu0
      %v633 = vsel %vm456, %v451, 0
      %635 = vmatprep.subr.bf16.mxu0 0
      %636 = vmatpush1.bf16.xpose.msra.mxu0 %v633
      %637 = vmatprep.subr.bf16.mxu0 0
      %638 = vmatpush1.bf16.xpose.msra.mxu0 0
      %639 = vmatprep.subr.bf16.mxu0 0
      %640 = vmatpush1.bf16.xpose.msra.mxu0 0
      %641 = vmatprep.subr.bf16.mxu0 0
      %642 = vmatpush1.bf16.xpose.msra.mxu0 0
      %643 = vmatprep.subr.bf16.mxu0 0
      %644 = vmatpush1.bf16.xpose.msra.mxu0 0
      %645 = vmatprep.subr.bf16.mxu0 0
      %646 = vmatpush1.bf16.xpose.msra.mxu0 0
      %647 = vmatprep.subr.bf16.mxu0 0
      %648 = vmatpush1.bf16.xpose.msra.mxu0 0
      %649 = vmatprep.subr.bf16.mxu0 0
      %650 = vmatpush1.bf16.xpose.msra.mxu0 0
      %651 = vmatprep.subr.bf16.mxu0 0
      %652 = vmatpush1.bf16.xpose.msra.mxu0 0
      %653 = vmatprep.subr.bf16.mxu0 0
      %654 = vmatpush1.bf16.xpose.msra.mxu0 0
      %655 = vmatprep.subr.bf16.mxu0 0
      %656 = vmatpush1.bf16.xpose.msra.mxu0 0
      %657 = vmatprep.subr.bf16.mxu0 0
      %658 = vmatpush1.bf16.xpose.msra.mxu0 0
      %659 = vmatprep.subr.bf16.mxu0 0
      %660 = vmatpush1.bf16.xpose.msra.mxu0 0
      %661 = vmatprep.subr.bf16.mxu0 0
      %662 = vmatpush1.bf16.xpose.msra.mxu0 0
      %663 = vmatprep.subr.bf16.mxu0 0
      %664 = vmatpush1.bf16.xpose.msra.mxu0 0
      %665 = vmatprep.subr.bf16.mxu0 0
      %666 = vmatpush1.bf16.xpose.msra.mxu0 0
      %667 = vmatprep.mubr.bf16.mxu0 0
      %668 = vmatmul.mubr.bf16.gmra.mrb[0].mxu0 %v458
      %v669 = vpop.f32.mrb[0].mxu0
      %v670 = vadd.f32 0.0, %v669
      %v671 = vpop.f32.mrb[0].mxu0
      %v672 = vpop.f32.mrb[0].mxu0
      %v673 = vpop.f32.mrb[0].mxu0
      %674 = vdwg.mxu0
      %v676 = vsel %vm456, %v452, 0
      %678 = vmatprep.subr.bf16.mxu0 0
      %679 = vmatpush1.bf16.xpose.msra.mxu0 %v676
      %680 = vmatprep.subr.bf16.mxu0 0
      %681 = vmatpush1.bf16.xpose.msra.mxu0 0
      %682 = vmatprep.subr.bf16.mxu0 0
      %683 = vmatpush1.bf16.xpose.msra.mxu0 0
      %684 = vmatprep.subr.bf16.mxu0 0
      %685 = vmatpush1.bf16.xpose.msra.mxu0 0
      %686 = vmatprep.subr.bf16.mxu0 0
      %687 = vmatpush1.bf16.xpose.msra.mxu0 0
      %688 = vmatprep.subr.bf16.mxu0 0
      %689 = vmatpush1.bf16.xpose.msra.mxu0 0
      %690 = vmatprep.subr.bf16.mxu0 0
      %691 = vmatpush1.bf16.xpose.msra.mxu0 0
      %692 = vmatprep.subr.bf16.mxu0 0
      %693 = vmatpush1.bf16.xpose.msra.mxu0 0
      %694 = vmatprep.subr.bf16.mxu0 0
      %695 = vmatpush1.bf16.xpose.msra.mxu0 0
      %696 = vmatprep.subr.bf16.mxu0 0
      %697 = vmatpush1.bf16.xpose.msra.mxu0 0
      %698 = vmatprep.subr.bf16.mxu0 0
      %699 = vmatpush1.bf16.xpose.msra.mxu0 0
      %700 = vmatprep.subr.bf16.mxu0 0
      %701 = vmatpush1.bf16.xpose.msra.mxu0 0
      %702 = vmatprep.subr.bf16.mxu0 0
      %703 = vmatpush1.bf16.xpose.msra.mxu0 0
      %704 = vmatprep.subr.bf16.mxu0 0
      %705 = vmatpush1.bf16.xpose.msra.mxu0 0
      %706 = vmatprep.subr.bf16.mxu0 0
      %707 = vmatpush1.bf16.xpose.msra.mxu0 0
      %708 = vmatprep.subr.bf16.mxu0 0
      %709 = vmatpush1.bf16.xpose.msra.mxu0 0
      %710 = vmatprep.mubr.bf16.mxu0 0
      %711 = vmatmul.mubr.bf16.gmra.mrb[0].mxu0 %v458
      %v712 = vpop.f32.mrb[0].mxu0
      %v713 = vadd.f32 0.0, %v712
      %v714 = vpop.f32.mrb[0].mxu0
      %v715 = vpop.f32.mrb[0].mxu0
      %v716 = vpop.f32.mrb[0].mxu0
      %717 = vdwg.mxu0
      %v719 = vsel %vm456, %v453, 0
      %721 = vmatprep.subr.bf16.mxu0 0
      %722 = vmatpush1.bf16.xpose.msra.mxu0 %v719
      %723 = vmatprep.subr.bf16.mxu0 0
      %724 = vmatpush1.bf16.xpose.msra.mxu0 0
      %725 = vmatprep.subr.bf16.mxu0 0
      %726 = vmatpush1.bf16.xpose.msra.mxu0 0
      %727 = vmatprep.subr.bf16.mxu0 0
      %728 = vmatpush1.bf16.xpose.msra.mxu0 0
      %729 = vmatprep.subr.bf16.mxu0 0
      %730 = vmatpush1.bf16.xpose.msra.mxu0 0
      %731 = vmatprep.subr.bf16.mxu0 0
      %732 = vmatpush1.bf16.xpose.msra.mxu0 0
      %733 = vmatprep.subr.bf16.mxu0 0
      %734 = vmatpush1.bf16.xpose.msra.mxu0 0
      %735 = vmatprep.subr.bf16.mxu0 0
      %736 = vmatpush1.bf16.xpose.msra.mxu0 0
      %737 = vmatprep.subr.bf16.mxu0 0
      %738 = vmatpush1.bf16.xpose.msra.mxu0 0
      %739 = vmatprep.subr.bf16.mxu0 0
      %740 = vmatpush1.bf16.xpose.msra.mxu0 0
      %741 = vmatprep.subr.bf16.mxu0 0
      %742 = vmatpush1.bf16.xpose.msra.mxu0 0
      %743 = vmatprep.subr.bf16.mxu0 0
      %744 = vmatpush1.bf16.xpose.msra.mxu0 0
      %745 = vmatprep.subr.bf16.mxu0 0
      %746 = vmatpush1.bf16.xpose.msra.mxu0 0
      %747 = vmatprep.subr.bf16.mxu0 0
      %748 = vmatpush1.bf16.xpose.msra.mxu0 0
      %749 = vmatprep.subr.bf16.mxu0 0
      %750 = vmatpush1.bf16.xpose.msra.mxu0 0
      %751 = vmatprep.subr.bf16.mxu0 0
      %752 = vmatpush1.bf16.xpose.msra.mxu0 0
      %753 = vmatprep.mubr.bf16.mxu0 0
      %754 = vmatmul.mubr.bf16.gmra.mrb[0].mxu0 %v458
      %v755 = vpop.f32.mrb[0].mxu0
      %v756 = vadd.f32 0.0, %v755
      %v757 = vpop.f32.mrb[0].mxu0
      %v758 = vpop.f32.mrb[0].mxu0
      %v759 = vpop.f32.mrb[0].mxu0
      %760 = vdwg.mxu0
      %v762 = vsel %vm456, %v454, 0
      %764 = vmatprep.subr.bf16.mxu0 0
      %765 = vmatpush1.bf16.xpose.msra.mxu0 %v762
      %766 = vmatprep.subr.bf16.mxu0 0
      %767 = vmatpush1.bf16.xpose.msra.mxu0 0
      %768 = vmatprep.subr.bf16.mxu0 0
      %769 = vmatpush1.bf16.xpose.msra.mxu0 0
      %770 = vmatprep.subr.bf16.mxu0 0
      %771 = vmatpush1.bf16.xpose.msra.mxu0 0
      %772 = vmatprep.subr.bf16.mxu0 0
      %773 = vmatpush1.bf16.xpose.msra.mxu0 0
      %774 = vmatprep.subr.bf16.mxu0 0
      %775 = vmatpush1.bf16.xpose.msra.mxu0 0
      %776 = vmatprep.subr.bf16.mxu0 0
      %777 = vmatpush1.bf16.xpose.msra.mxu0 0
      %778 = vmatprep.subr.bf16.mxu0 0
      %779 = vmatpush1.bf16.xpose.msra.mxu0 0
      %780 = vmatprep.subr.bf16.mxu0 0
      %781 = vmatpush1.bf16.xpose.msra.mxu0 0
      %782 = vmatprep.subr.bf16.mxu0 0
      %783 = vmatpush1.bf16.xpose.msra.mxu0 0
      %784 = vmatprep.subr.bf16.mxu0 0
      %785 = vmatpush1.bf16.xpose.msra.mxu0 0
      %786 = vmatprep.subr.bf16.mxu0 0
      %787 = vmatpush1.bf16.xpose.msra.mxu0 0
      %788 = vmatprep.subr.bf16.mxu0 0
      %789 = vmatpush1.bf16.xpose.msra.mxu0 0
      %790 = vmatprep.subr.bf16.mxu0 0
      %791 = vmatpush1.bf16.xpose.msra.mxu0 0
      %792 = vmatprep.subr.bf16.mxu0 0
      %793 = vmatpush1.bf16.xpose.msra.mxu0 0
      %794 = vmatprep.subr.bf16.mxu0 0
      %795 = vmatpush1.bf16.xpose.msra.mxu0 0
      %796 = vmatprep.mubr.bf16.mxu0 0
      %797 = vmatmul.mubr.bf16.gmra.mrb[0].mxu0 %v458
      %v798 = vpop.f32.mrb[0].mxu0
      %v799 = vadd.f32 0.0, %v798
      %v800 = vpop.f32.mrb[0].mxu0
      %v801 = vpop.f32.mrb[0].mxu0
      %v802 = vpop.f32.mrb[0].mxu0
      %803 = vdwg.mxu0
      %v812 = vrot.slane %v498, 1
      %v813 = vrot.slane %v541, 1
      %v814 = vrot.slane %v584, 1
      %v815 = vrot.slane %v627, 1
      %v816 = vrot.slane %v670, 1
      %v817 = vrot.slane %v713, 1
      %v818 = vrot.slane %v756, 1
      %v819 = vrot.slane %v799, 1
      %v820 = vrot.slane %v498, 2
      %v821 = vrot.slane %v541, 2
      %v822 = vrot.slane %v584, 2
      %v823 = vrot.slane %v627, 2
      %v824 = vrot.slane %v670, 2
      %v825 = vrot.slane %v713, 2
      %v826 = vrot.slane %v756, 2
      %v827 = vrot.slane %v799, 2
      %v828 = vrot.slane %v498, 3
      %v829 = vrot.slane %v541, 3
      %v830 = vrot.slane %v584, 3
      %v831 = vrot.slane %v627, 3
      %v832 = vrot.slane %v670, 3
      %v833 = vrot.slane %v713, 3
      %v834 = vrot.slane %v756, 3
      %v835 = vrot.slane %v799, 3
      %v836 = vrot.slane %v541, 7
      %vm837 = vcmask 1041409
      %v838 = vsel %vm837, %v836, %v498
      %v839 = vrot.slane %v584, 6
      %vm840 = vcmask 1042434
      %v841 = vsel %vm840, %v839, %v838
      %v842 = vrot.slane %v627, 5
      %vm843 = vcmask 1043459
      %v844 = vsel %vm843, %v842, %v841
      %v845 = vrot.slane %v670, 4
      %vm846 = vcmask 1044484
      %v847 = vsel %vm846, %v845, %v844
      %vm848 = vcmask 1045509
      %v849 = vsel %vm848, %v833, %v847
      %vm850 = vcmask 1046534
      %v851 = vsel %vm850, %v826, %v849
      %vm852 = vcmask 1047559
      %v853 = vsel %vm852, %v819, %v851
      %vm855 = vcmask 236544
      %v857 = vsel %vm855, %v439, 0
      %v860 = vsel %vm855, %v443, 0
      %862 = vmatprep.subr.bf16.mxu0 0
      %863 = vmatpush1.bf16.xpose.msra.mxu0 %v860
      %864 = vmatprep.subr.bf16.mxu0 0
      %865 = vmatpush1.bf16.xpose.msra.mxu0 0
      %866 = vmatprep.subr.bf16.mxu0 0
      %867 = vmatpush1.bf16.xpose.msra.mxu0 0
      %868 = vmatprep.subr.bf16.mxu0 0
      %869 = vmatpush1.bf16.xpose.msra.mxu0 0
      %870 = vmatprep.subr.bf16.mxu0 0
      %871 = vmatpush1.bf16.xpose.msra.mxu0 0
      %872 = vmatprep.subr.bf16.mxu0 0
      %873 = vmatpush1.bf16.xpose.msra.mxu0 0
      %874 = vmatprep.subr.bf16.mxu0 0
      %875 = vmatpush1.bf16.xpose.msra.mxu0 0
      %876 = vmatprep.subr.bf16.mxu0 0
      %877 = vmatpush1.bf16.xpose.msra.mxu0 0
      %878 = vmatprep.subr.bf16.mxu0 0
      %879 = vmatpush1.bf16.xpose.msra.mxu0 0
      %880 = vmatprep.subr.bf16.mxu0 0
      %881 = vmatpush1.bf16.xpose.msra.mxu0 0
      %882 = vmatprep.subr.bf16.mxu0 0
      %883 = vmatpush1.bf16.xpose.msra.mxu0 0
      %884 = vmatprep.subr.bf16.mxu0 0
      %885 = vmatpush1.bf16.xpose.msra.mxu0 0
      %886 = vmatprep.subr.bf16.mxu0 0
      %887 = vmatpush1.bf16.xpose.msra.mxu0 0
      %888 = vmatprep.subr.bf16.mxu0 0
      %889 = vmatpush1.bf16.xpose.msra.mxu0 0
      %890 = vmatprep.subr.bf16.mxu0 0
      %891 = vmatpush1.bf16.xpose.msra.mxu0 0
      %892 = vmatprep.subr.bf16.mxu0 0
      %893 = vmatpush1.bf16.xpose.msra.mxu0 0
      %894 = vmatprep.mubr.bf16.mxu0 0
      %895 = vmatmul.mubr.bf16.gmra.mrb[0].mxu0 %v857
      %v896 = vpop.f32.mrb[0].mxu0
      %v897 = vadd.f32 %v853, %v896
      %v898 = vpop.f32.mrb[0].mxu0
      %v899 = vpop.f32.mrb[0].mxu0
      %v900 = vpop.f32.mrb[0].mxu0
      %901 = vdwg.mxu0
      %v902 = vrot.slane %v813, 7
      %v903 = vsel %vm837, %v902, %v812
      %v904 = vrot.slane %v814, 6
      %v905 = vsel %vm840, %v904, %v903
      %v906 = vrot.slane %v815, 5
      %v907 = vsel %vm843, %v906, %v905
      %v908 = vrot.slane %v816, 4
      %v909 = vsel %vm846, %v908, %v907
      %v910 = vrot.slane %v817, 3
      %v911 = vsel %vm848, %v910, %v909
      %v912 = vrot.slane %v818, 2
      %v913 = vsel %vm850, %v912, %v911
      %v914 = vrot.slane %v819, 1
      %v915 = vsel %vm852, %v914, %v913
      %v918 = vsel %vm855, %v440, 0
      %v921 = vsel %vm855, %v444, 0
      %923 = vmatprep.subr.bf16.mxu0 0
      %924 = vmatpush1.bf16.xpose.msra.mxu0 %v921
      %925 = vmatprep.subr.bf16.mxu0 0
      %926 = vmatpush1.bf16.xpose.msra.mxu0 0
      %927 = vmatprep.subr.bf16.mxu0 0
      %928 = vmatpush1.bf16.xpose.msra.mxu0 0
      %929 = vmatprep.subr.bf16.mxu0 0
      %930 = vmatpush1.bf16.xpose.msra.mxu0 0
      %931 = vmatprep.subr.bf16.mxu0 0
      %932 = vmatpush1.bf16.xpose.msra.mxu0 0
      %933 = vmatprep.subr.bf16.mxu0 0
      %934 = vmatpush1.bf16.xpose.msra.mxu0 0
      %935 = vmatprep.subr.bf16.mxu0 0
      %936 = vmatpush1.bf16.xpose.msra.mxu0 0
      %937 = vmatprep.subr.bf16.mxu0 0
      %938 = vmatpush1.bf16.xpose.msra.mxu0 0
      %939 = vmatprep.subr.bf16.mxu0 0
      %940 = vmatpush1.bf16.xpose.msra.mxu0 0
      %941 = vmatprep.subr.bf16.mxu0 0
      %942 = vmatpush1.bf16.xpose.msra.mxu0 0
      %943 = vmatprep.subr.bf16.mxu0 0
      %944 = vmatpush1.bf16.xpose.msra.mxu0 0
      %945 = vmatprep.subr.bf16.mxu0 0
      %946 = vmatpush1.bf16.xpose.msra.mxu0 0
      %947 = vmatprep.subr.bf16.mxu0 0
      %948 = vmatpush1.bf16.xpose.msra.mxu0 0
      %949 = vmatprep.subr.bf16.mxu0 0
      %950 = vmatpush1.bf16.xpose.msra.mxu0 0
      %951 = vmatprep.subr.bf16.mxu0 0
      %952 = vmatpush1.bf16.xpose.msra.mxu0 0
      %953 = vmatprep.subr.bf16.mxu0 0
      %954 = vmatpush1.bf16.xpose.msra.mxu0 0
      %955 = vmatprep.mubr.bf16.mxu0 0
      %956 = vmatmul.mubr.bf16.gmra.mrb[0].mxu0 %v918
      %v957 = vpop.f32.mrb[0].mxu0
      %v958 = vadd.f32 %v915, %v957
      %v959 = vpop.f32.mrb[0].mxu0
      %v960 = vpop.f32.mrb[0].mxu0
      %v961 = vpop.f32.mrb[0].mxu0
      %962 = vdwg.mxu0
      %v963 = vrot.slane %v821, 7
      %v964 = vsel %vm837, %v963, %v820
      %v965 = vrot.slane %v822, 6
      %v966 = vsel %vm840, %v965, %v964
      %v967 = vrot.slane %v823, 5
      %v968 = vsel %vm843, %v967, %v966
      %v969 = vrot.slane %v824, 4
      %v970 = vsel %vm846, %v969, %v968
      %v971 = vrot.slane %v825, 3
      %v972 = vsel %vm848, %v971, %v970
      %v973 = vrot.slane %v826, 2
      %v974 = vsel %vm850, %v973, %v972
      %v975 = vrot.slane %v827, 1
      %v976 = vsel %vm852, %v975, %v974
      %v979 = vsel %vm855, %v441, 0
      %v982 = vsel %vm855, %v445, 0
      %984 = vmatprep.subr.bf16.mxu0 0
      %985 = vmatpush1.bf16.xpose.msra.mxu0 %v982
      %986 = vmatprep.subr.bf16.mxu0 0
      %987 = vmatpush1.bf16.xpose.msra.mxu0 0
      %988 = vmatprep.subr.bf16.mxu0 0
      %989 = vmatpush1.bf16.xpose.msra.mxu0 0
      %990 = vmatprep.subr.bf16.mxu0 0
      %991 = vmatpush1.bf16.xpose.msra.mxu0 0
      %992 = vmatprep.subr.bf16.mxu0 0
      %993 = vmatpush1.bf16.xpose.msra.mxu0 0
      %994 = vmatprep.subr.bf16.mxu0 0
      %995 = vmatpush1.bf16.xpose.msra.mxu0 0
      %996 = vmatprep.subr.bf16.mxu0 0
      %997 = vmatpush1.bf16.xpose.msra.mxu0 0
      %998 = vmatprep.subr.bf16.mxu0 0
      %999 = vmatpush1.bf16.xpose.msra.mxu0 0
      %1000 = vmatprep.subr.bf16.mxu0 0
      %1001 = vmatpush1.bf16.xpose.msra.mxu0 0
      %1002 = vmatprep.subr.bf16.mxu0 0
      %1003 = vmatpush1.bf16.xpose.msra.mxu0 0
      %1004 = vmatprep.subr.bf16.mxu0 0
      %1005 = vmatpush1.bf16.xpose.msra.mxu0 0
      %1006 = vmatprep.subr.bf16.mxu0 0
      %1007 = vmatpush1.bf16.xpose.msra.mxu0 0
      %1008 = vmatprep.subr.bf16.mxu0 0
      %1009 = vmatpush1.bf16.xpose.msra.mxu0 0
      %1010 = vmatprep.subr.bf16.mxu0 0
      %1011 = vmatpush1.bf16.xpose.msra.mxu0 0
      %1012 = vmatprep.subr.bf16.mxu0 0
      %1013 = vmatpush1.bf16.xpose.msra.mxu0 0
      %1014 = vmatprep.subr.bf16.mxu0 0
      %1015 = vmatpush1.bf16.xpose.msra.mxu0 0
      %1016 = vmatprep.mubr.bf16.mxu0 0
      %1017 = vmatmul.mubr.bf16.gmra.mrb[0].mxu0 %v979
      %v1018 = vpop.f32.mrb[0].mxu0
      %v1019 = vadd.f32 %v976, %v1018
      %v1020 = vpop.f32.mrb[0].mxu0
      %v1021 = vpop.f32.mrb[0].mxu0
      %v1022 = vpop.f32.mrb[0].mxu0
      %1023 = vdwg.mxu0
      %v1024 = vrot.slane %v829, 7
      %v1025 = vsel %vm837, %v1024, %v828
      %v1026 = vrot.slane %v830, 6
      %v1027 = vsel %vm840, %v1026, %v1025
      %v1028 = vrot.slane %v831, 5
      %v1029 = vsel %vm843, %v1028, %v1027
      %v1030 = vrot.slane %v832, 4
      %v1031 = vsel %vm846, %v1030, %v1029
      %v1032 = vrot.slane %v833, 3
      %v1033 = vsel %vm848, %v1032, %v1031
      %v1034 = vrot.slane %v834, 2
      %v1035 = vsel %vm850, %v1034, %v1033
      %v1036 = vrot.slane %v835, 1
      %v1037 = vsel %vm852, %v1036, %v1035
      %v1040 = vsel %vm855, %v442, 0
      %v1043 = vsel %vm855, %v446, 0
      %1045 = vmatprep.subr.bf16.mxu0 0
      %1046 = vmatpush1.bf16.xpose.msra.mxu0 %v1043
      %1047 = vmatprep.subr.bf16.mxu0 0
      %1048 = vmatpush1.bf16.xpose.msra.mxu0 0
      %1049 = vmatprep.subr.bf16.mxu0 0
      %1050 = vmatpush1.bf16.xpose.msra.mxu0 0
      %1051 = vmatprep.subr.bf16.mxu0 0
      %1052 = vmatpush1.bf16.xpose.msra.mxu0 0
      %1053 = vmatprep.subr.bf16.mxu0 0
      %1054 = vmatpush1.bf16.xpose.msra.mxu0 0
      %1055 = vmatprep.subr.bf16.mxu0 0
      %1056 = vmatpush1.bf16.xpose.msra.mxu0 0
      %1057 = vmatprep.subr.bf16.mxu0 0
      %1058 = vmatpush1.bf16.xpose.msra.mxu0 0
      %1059 = vmatprep.subr.bf16.mxu0 0
      %1060 = vmatpush1.bf16.xpose.msra.mxu0 0
      %1061 = vmatprep.subr.bf16.mxu0 0
      %1062 = vmatpush1.bf16.xpose.msra.mxu0 0
      %1063 = vmatprep.subr.bf16.mxu0 0
      %1064 = vmatpush1.bf16.xpose.msra.mxu0 0
      %1065 = vmatprep.subr.bf16.mxu0 0
      %1066 = vmatpush1.bf16.xpose.msra.mxu0 0
      %1067 = vmatprep.subr.bf16.mxu0 0
      %1068 = vmatpush1.bf16.xpose.msra.mxu0 0
      %1069 = vmatprep.subr.bf16.mxu0 0
      %1070 = vmatpush1.bf16.xpose.msra.mxu0 0
      %1071 = vmatprep.subr.bf16.mxu0 0
      %1072 = vmatpush1.bf16.xpose.msra.mxu0 0
      %1073 = vmatprep.subr.bf16.mxu0 0
      %1074 = vmatpush1.bf16.xpose.msra.mxu0 0
      %1075 = vmatprep.subr.bf16.mxu0 0
      %1076 = vmatpush1.bf16.xpose.msra.mxu0 0
      %1077 = vmatprep.mubr.bf16.mxu0 0
      %1078 = vmatmul.mubr.bf16.gmra.mrb[0].mxu0 %v1040
      %v1079 = vpop.f32.mrb[0].mxu0
      %v1080 = vadd.f32 %v1037, %v1079
      %v1081 = vpop.f32.mrb[0].mxu0
      %v1082 = vpop.f32.mrb[0].mxu0
      %v1083 = vpop.f32.mrb[0].mxu0
      %1084 = vdwg.mxu0
      %v1085 = vld [vmem:[%s409] sm:$0xf]
      %v1086 = vunpack.c.l.bf16 %v1085
      %v1087 = vadd.f32 %v897, %v1086
      %v1088 = vadd.f32 %v958, %v1086
      %v1089 = vadd.f32 %v1019, %v1086
      %v1090 = vadd.f32 %v1080, %v1086
      %vm1091 = vcmask 64512
      %v1092 = vsel %vm1091, %v1087, -inf
      %1093 = vmax.xlane.f32.xlu0 %v1092
      %v1094 = vpop.xlane.xlu0 %1093
      %v1095 = vsel %vm1091, %v1088, -inf
      %1096 = vmax.xlane.f32.xlu0 %v1095
      %v1097 = vpop.xlane.xlu0 %1096
      %v1098 = vsel %vm1091, %v1089, -inf
      %1099 = vmax.xlane.f32.xlu0 %v1098
      %v1100 = vpop.xlane.xlu0 %1099
      %v1101 = vsel %vm1091, %v1090, -inf
      %1102 = vmax.xlane.f32.xlu0 %v1101
      %v1103 = vpop.xlane.xlu0 %1102
      %v1104 = vsub.f32 %v1087, %v1094
      %v1105 = vsub.f32 %v1088, %v1097
      %v1106 = vsub.f32 %v1089, %v1100
      %v1107 = vsub.f32 %v1090, %v1103
      %v1108 = vmul.f32 %v1104, 1.442695
      %v1109 = vpow.pop %v1108
      %v1110 = vmul.f32 %v1105, 1.442695
      %v1111 = vpow.pop %v1110
      %v1112 = vmul.f32 %v1106, 1.442695
      %v1113 = vpow.pop %v1112
      %v1114 = vmul.f32 %v1107, 1.442695
      %v1115 = vpow.pop %v1114
      %v1116 = vsel %vm1091, %v1109, 0.0
      %1117 = vadd.xlane.f32.xlu0 %v1116
      %v1118 = vpop.xlane.xlu0 %1117
      %v1119 = vsel %vm1091, %v1111, 0.0
      %1120 = vadd.xlane.f32.xlu0 %v1119
      %v1121 = vpop.xlane.xlu0 %1120
      %v1122 = vsel %vm1091, %v1113, 0.0
      %1123 = vadd.xlane.f32.xlu0 %v1122
      %v1124 = vpop.xlane.xlu0 %1123
      %v1125 = vsel %vm1091, %v1115, 0.0
      %1126 = vadd.xlane.f32.xlu0 %v1125
      %v1127 = vpop.xlane.xlu0 %1126
      %v1128 = vrcp.pop %v1118
      %v1129 = vrcp.pop %v1121
      %v1130 = vrcp.pop %v1124
      %v1131 = vrcp.pop %v1127
      %v1132 = vmul.f32 %v1109, %v1128
      %v1133 = vmul.f32 %v1111, %v1129
      %v1134 = vmul.f32 %v1113, %v1130
      %v1135 = vmul.f32 %v1115, %v1131
      %v1136 = vpack.c.bf16 %v1132, %v1132
      %v1137 = vpack.c.bf16 %v1133, %v1133
      %v1138 = vpack.c.bf16 %v1134, %v1134
      %v1139 = vpack.c.bf16 %v1135, %v1135
      %v1140 = vld [vmem:[%s402] sm:$0xf]
      %v1141 = vld [vmem:[%s402 + $0x4] sm:$0xf]
      %v1142 = vld [vmem:[%s402 + $0x8] sm:$0xf]
      %v1143 = vld [vmem:[%s402 + $0xc] sm:$0xf]
      %v1145 = vsel %vm1091, %v1136, 0
      %vm1147 = vcmask 1043456
      %v1149 = vsel %vm1147, %v1140, 0
      %1151 = vmatprep.subr.bf16.mxu0 0
      %1152 = vmatpush1.bf16.msra.mxu0 %v1149
      %1153 = vmatprep.subr.bf16.mxu0 0
      %1154 = vmatpush1.bf16.msra.mxu0 0
      %1155 = vmatprep.subr.bf16.mxu0 0
      %1156 = vmatpush1.bf16.msra.mxu0 0
      %1157 = vmatprep.subr.bf16.mxu0 0
      %1158 = vmatpush1.bf16.msra.mxu0 0
      %1159 = vmatprep.subr.bf16.mxu0 0
      %1160 = vmatpush1.bf16.msra.mxu0 0
      %1161 = vmatprep.subr.bf16.mxu0 0
      %1162 = vmatpush1.bf16.msra.mxu0 0
      %1163 = vmatprep.subr.bf16.mxu0 0
      %1164 = vmatpush1.bf16.msra.mxu0 0
      %1165 = vmatprep.subr.bf16.mxu0 0
      %1166 = vmatpush1.bf16.msra.mxu0 0
      %1167 = vmatprep.subr.bf16.mxu0 0
      %1168 = vmatpush1.bf16.msra.mxu0 0
      %1169 = vmatprep.subr.bf16.mxu0 0
      %1170 = vmatpush1.bf16.msra.mxu0 0
      %1171 = vmatprep.subr.bf16.mxu0 0
      %1172 = vmatpush1.bf16.msra.mxu0 0
      %1173 = vmatprep.subr.bf16.mxu0 0
      %1174 = vmatpush1.bf16.msra.mxu0 0
      %1175 = vmatprep.subr.bf16.mxu0 0
      %1176 = vmatpush1.bf16.msra.mxu0 0
      %1177 = vmatprep.subr.bf16.mxu0 0
      %1178 = vmatpush1.bf16.msra.mxu0 0
      %1179 = vmatprep.subr.bf16.mxu0 0
      %1180 = vmatpush1.bf16.msra.mxu0 0
      %1181 = vmatprep.subr.bf16.mxu0 0
      %1182 = vmatpush1.bf16.msra.mxu0 0
      %1183 = vmatprep.mubr.bf16.mxu0 0
      %1184 = vmatmul.mubr.bf16.gmra.mrb[0].mxu0 %v1145
      %v1185 = vpop.f32.mrb[0].mxu0
      %v1186 = vadd.f32 0.0, %v1185
      %v1187 = vpop.f32.mrb[0].mxu0
      %v1188 = vpop.f32.mrb[0].mxu0
      %v1189 = vpop.f32.mrb[0].mxu0
      %1190 = vdwg.mxu0
      %v1192 = vsel %vm1091, %v1137, 0
      %v1195 = vsel %vm1147, %v1141, 0
      %1197 = vmatprep.subr.bf16.mxu0 0
      %1198 = vmatpush1.bf16.msra.mxu0 %v1195
      %1199 = vmatprep.subr.bf16.mxu0 0
      %1200 = vmatpush1.bf16.msra.mxu0 0
      %1201 = vmatprep.subr.bf16.mxu0 0
      %1202 = vmatpush1.bf16.msra.mxu0 0
      %1203 = vmatprep.subr.bf16.mxu0 0
      %1204 = vmatpush1.bf16.msra.mxu0 0
      %1205 = vmatprep.subr.bf16.mxu0 0
      %1206 = vmatpush1.bf16.msra.mxu0 0
      %1207 = vmatprep.subr.bf16.mxu0 0
      %1208 = vmatpush1.bf16.msra.mxu0 0
      %1209 = vmatprep.subr.bf16.mxu0 0
      %1210 = vmatpush1.bf16.msra.mxu0 0
      %1211 = vmatprep.subr.bf16.mxu0 0
      %1212 = vmatpush1.bf16.msra.mxu0 0
      %1213 = vmatprep.subr.bf16.mxu0 0
      %1214 = vmatpush1.bf16.msra.mxu0 0
      %1215 = vmatprep.subr.bf16.mxu0 0
      %1216 = vmatpush1.bf16.msra.mxu0 0
      %1217 = vmatprep.subr.bf16.mxu0 0
      %1218 = vmatpush1.bf16.msra.mxu0 0
      %1219 = vmatprep.subr.bf16.mxu0 0
      %1220 = vmatpush1.bf16.msra.mxu0 0
      %1221 = vmatprep.subr.bf16.mxu0 0
      %1222 = vmatpush1.bf16.msra.mxu0 0
      %1223 = vmatprep.subr.bf16.mxu0 0
      %1224 = vmatpush1.bf16.msra.mxu0 0
      %1225 = vmatprep.subr.bf16.mxu0 0
      %1226 = vmatpush1.bf16.msra.mxu0 0
      %1227 = vmatprep.subr.bf16.mxu0 0
      %1228 = vmatpush1.bf16.msra.mxu0 0
      %1229 = vmatprep.mubr.bf16.mxu0 0
      %1230 = vmatmul.mubr.bf16.gmra.mrb[0].mxu0 %v1192
      %v1231 = vpop.f32.mrb[0].mxu0
      %v1232 = vadd.f32 0.0, %v1231
      %v1233 = vpop.f32.mrb[0].mxu0
      %v1234 = vpop.f32.mrb[0].mxu0
      %v1235 = vpop.f32.mrb[0].mxu0
      %1236 = vdwg.mxu0
      %v1238 = vsel %vm1091, %v1138, 0
      %v1241 = vsel %vm1147, %v1142, 0
      %1243 = vmatprep.subr.bf16.mxu0 0
      %1244 = vmatpush1.bf16.msra.mxu0 %v1241
      %1245 = vmatprep.subr.bf16.mxu0 0
      %1246 = vmatpush1.bf16.msra.mxu0 0
      %1247 = vmatprep.subr.bf16.mxu0 0
      %1248 = vmatpush1.bf16.msra.mxu0 0
      %1249 = vmatprep.subr.bf16.mxu0 0
      %1250 = vmatpush1.bf16.msra.mxu0 0
      %1251 = vmatprep.subr.bf16.mxu0 0
      %1252 = vmatpush1.bf16.msra.mxu0 0
      %1253 = vmatprep.subr.bf16.mxu0 0
      %1254 = vmatpush1.bf16.msra.mxu0 0
      %1255 = vmatprep.subr.bf16.mxu0 0
      %1256 = vmatpush1.bf16.msra.mxu0 0
      %1257 = vmatprep.subr.bf16.mxu0 0
      %1258 = vmatpush1.bf16.msra.mxu0 0
      %1259 = vmatprep.subr.bf16.mxu0 0
      %1260 = vmatpush1.bf16.msra.mxu0 0
      %1261 = vmatprep.subr.bf16.mxu0 0
      %1262 = vmatpush1.bf16.msra.mxu0 0
      %1263 = vmatprep.subr.bf16.mxu0 0
      %1264 = vmatpush1.bf16.msra.mxu0 0
      %1265 = vmatprep.subr.bf16.mxu0 0
      %1266 = vmatpush1.bf16.msra.mxu0 0
      %1267 = vmatprep.subr.bf16.mxu0 0
      %1268 = vmatpush1.bf16.msra.mxu0 0
      %1269 = vmatprep.subr.bf16.mxu0 0
      %1270 = vmatpush1.bf16.msra.mxu0 0
      %1271 = vmatprep.subr.bf16.mxu0 0
      %1272 = vmatpush1.bf16.msra.mxu0 0
      %1273 = vmatprep.subr.bf16.mxu0 0
      %1274 = vmatpush1.bf16.msra.mxu0 0
      %1275 = vmatprep.mubr.bf16.mxu0 0
      %1276 = vmatmul.mubr.bf16.gmra.mrb[0].mxu0 %v1238
      %v1277 = vpop.f32.mrb[0].mxu0
      %v1278 = vadd.f32 0.0, %v1277
      %v1279 = vpop.f32.mrb[0].mxu0
      %v1280 = vpop.f32.mrb[0].mxu0
      %v1281 = vpop.f32.mrb[0].mxu0
      %1282 = vdwg.mxu0
      %v1284 = vsel %vm1091, %v1139, 0
      %v1287 = vsel %vm1147, %v1143, 0
      %1289 = vmatprep.subr.bf16.mxu0 0
      %1290 = vmatpush1.bf16.msra.mxu0 %v1287
      %1291 = vmatprep.subr.bf16.mxu0 0
      %1292 = vmatpush1.bf16.msra.mxu0 0
      %1293 = vmatprep.subr.bf16.mxu0 0
      %1294 = vmatpush1.bf16.msra.mxu0 0
      %1295 = vmatprep.subr.bf16.mxu0 0
      %1296 = vmatpush1.bf16.msra.mxu0 0
      %1297 = vmatprep.subr.bf16.mxu0 0
      %1298 = vmatpush1.bf16.msra.mxu0 0
      %1299 = vmatprep.subr.bf16.mxu0 0
      %1300 = vmatpush1.bf16.msra.mxu0 0
      %1301 = vmatprep.subr.bf16.mxu0 0
      %1302 = vmatpush1.bf16.msra.mxu0 0
      %1303 = vmatprep.subr.bf16.mxu0 0
      %1304 = vmatpush1.bf16.msra.mxu0 0
      %1305 = vmatprep.subr.bf16.mxu0 0
      %1306 = vmatpush1.bf16.msra.mxu0 0
      %1307 = vmatprep.subr.bf16.mxu0 0
      %1308 = vmatpush1.bf16.msra.mxu0 0
      %1309 = vmatprep.subr.bf16.mxu0 0
      %1310 = vmatpush1.bf16.msra.mxu0 0
      %1311 = vmatprep.subr.bf16.mxu0 0
      %1312 = vmatpush1.bf16.msra.mxu0 0
      %1313 = vmatprep.subr.bf16.mxu0 0
      %1314 = vmatpush1.bf16.msra.mxu0 0
      %1315 = vmatprep.subr.bf16.mxu0 0
      %1316 = vmatpush1.bf16.msra.mxu0 0
      %1317 = vmatprep.subr.bf16.mxu0 0
      %1318 = vmatpush1.bf16.msra.mxu0 0
      %1319 = vmatprep.subr.bf16.mxu0 0
      %1320 = vmatpush1.bf16.msra.mxu0 0
      %1321 = vmatprep.mubr.bf16.mxu0 0
      %1322 = vmatmul.mubr.bf16.gmra.mrb[0].mxu0 %v1284
      %v1323 = vpop.f32.mrb[0].mxu0
      %v1324 = vadd.f32 0.0, %v1323
      %v1325 = vpop.f32.mrb[0].mxu0
      %v1326 = vpop.f32.mrb[0].mxu0
      %v1327 = vpop.f32.mrb[0].mxu0
      %1328 = vdwg.mxu0
      %vm1329 = vcmask 326656
      %1330 = vst.msk [vmem:[%s427] sm:$0xff] %vm1329, %v1186
      %1331 = vst.msk [vmem:[%s427 + $0x8] sm:$0xff] %vm1329, %v1232
      %1332 = vst.msk [vmem:[%s427 + $0x10] sm:$0xff] %vm1329, %v1278
      %1333 = vst.msk [vmem:[%s427 + $0x18] sm:$0xff] %vm1329, %v1324
      %v1336 = vunpack.c.l.s4 1966171168
      %v1337 = vunpack.c.0.s8 %v1336
      %v1338 = vlaneseq
      %v1339 = vshrl.u32 %v1338, 7
      %v1340 = vsub.s32 %v1337, %v1339
      %v1341 = vrot.slane %v1136, %v1340
      %v1342 = vcombine.high %v1341, %v1341
      %v1344 = vunpack.c.l.s4 1966171168
      %v1345 = vunpack.c.0.s8 %v1344
      %v1346 = vlaneseq
      %v1347 = vshrl.u32 %v1346, 7
      %v1348 = vsub.s32 %v1345, %v1347
      %v1349 = vrot.slane %v1341, %v1348
      %v1351 = vunpack.c.l.s4 1966171168
      %v1352 = vunpack.c.0.s8 %v1351
      %v1353 = vlaneseq
      %v1354 = vshrl.u32 %v1353, 7
      %v1355 = vsub.s32 %v1352, %v1354
      %v1356 = vrot.slane %v1342, %v1355
      %v1357 = vcombine.high %v1349, %v1349
      %v1358 = vcombine.high %v1356, %v1356
      %v1359 = vunpack.i.l.s16 %v1349
      %v1360 = vunpack.i.h.s16 %v1349
      %v1361 = vunpack.i.l.s16 %v1356
      %v1362 = vunpack.i.h.s16 %v1356
      %v1363 = vunpack.i.l.s16 %v1357
      %v1364 = vunpack.i.h.s16 %v1357
      %v1365 = vunpack.i.l.s16 %v1358
      %v1366 = vunpack.i.h.s16 %v1358
      %v1369 = vunpack.c.l.s4 1966171168
      %v1370 = vunpack.c.0.s8 %v1369
      %v1371 = vlaneseq
      %v1372 = vshrl.u32 %v1371, 7
      %v1373 = vsub.s32 %v1370, %v1372
      %v1374 = vrot.slane %v1137, %v1373
      %v1375 = vcombine.high %v1374, %v1374
      %v1377 = vunpack.c.l.s4 1966171168
      %v1378 = vunpack.c.0.s8 %v1377
      %v1379 = vlaneseq
      %v1380 = vshrl.u32 %v1379, 7
      %v1381 = vsub.s32 %v1378, %v1380
      %v1382 = vrot.slane %v1374, %v1381
      %v1384 = vunpack.c.l.s4 1966171168
      %v1385 = vunpack.c.0.s8 %v1384
      %v1386 = vlaneseq
      %v1387 = vshrl.u32 %v1386, 7
      %v1388 = vsub.s32 %v1385, %v1387
      %v1389 = vrot.slane %v1375, %v1388
      %v1390 = vcombine.high %v1382, %v1382
      %v1391 = vcombine.high %v1389, %v1389
      %v1392 = vunpack.i.l.s16 %v1382
      %v1393 = vunpack.i.h.s16 %v1382
      %v1394 = vunpack.i.l.s16 %v1389
      %v1395 = vunpack.i.h.s16 %v1389
      %v1396 = vunpack.i.l.s16 %v1390
      %v1397 = vunpack.i.h.s16 %v1390
      %v1398 = vunpack.i.l.s16 %v1391
      %v1399 = vunpack.i.h.s16 %v1391
      %v1402 = vunpack.c.l.s4 1966171168
      %v1403 = vunpack.c.0.s8 %v1402
      %v1404 = vlaneseq
      %v1405 = vshrl.u32 %v1404, 7
      %v1406 = vsub.s32 %v1403, %v1405
      %v1407 = vrot.slane %v1138, %v1406
      %v1408 = vcombine.high %v1407, %v1407
      %v1410 = vunpack.c.l.s4 1966171168
      %v1411 = vunpack.c.0.s8 %v1410
      %v1412 = vlaneseq
      %v1413 = vshrl.u32 %v1412, 7
      %v1414 = vsub.s32 %v1411, %v1413
      %v1415 = vrot.slane %v1407, %v1414
      %v1417 = vunpack.c.l.s4 1966171168
      %v1418 = vunpack.c.0.s8 %v1417
      %v1419 = vlaneseq
      %v1420 = vshrl.u32 %v1419, 7
      %v1421 = vsub.s32 %v1418, %v1420
      %v1422 = vrot.slane %v1408, %v1421
      %v1423 = vcombine.high %v1415, %v1415
      %v1424 = vcombine.high %v1422, %v1422
      %v1425 = vunpack.i.l.s16 %v1415
      %v1426 = vunpack.i.h.s16 %v1415
      %v1427 = vunpack.i.l.s16 %v1422
      %v1428 = vunpack.i.h.s16 %v1422
      %v1429 = vunpack.i.l.s16 %v1423
      %v1430 = vunpack.i.h.s16 %v1423
      %v1431 = vunpack.i.l.s16 %v1424
      %v1432 = vunpack.i.h.s16 %v1424
      %v1435 = vunpack.c.l.s4 1966171168
      %v1436 = vunpack.c.0.s8 %v1435
      %v1437 = vlaneseq
      %v1438 = vshrl.u32 %v1437, 7
      %v1439 = vsub.s32 %v1436, %v1438
      %v1440 = vrot.slane %v1139, %v1439
      %v1441 = vcombine.high %v1440, %v1440
      %v1443 = vunpack.c.l.s4 1966171168
      %v1444 = vunpack.c.0.s8 %v1443
      %v1445 = vlaneseq
      %v1446 = vshrl.u32 %v1445, 7
      %v1447 = vsub.s32 %v1444, %v1446
      %v1448 = vrot.slane %v1440, %v1447
      %v1450 = vunpack.c.l.s4 1966171168
      %v1451 = vunpack.c.0.s8 %v1450
      %v1452 = vlaneseq
      %v1453 = vshrl.u32 %v1452, 7
      %v1454 = vsub.s32 %v1451, %v1453
      %v1455 = vrot.slane %v1441, %v1454
      %v1456 = vcombine.high %v1448, %v1448
      %v1457 = vcombine.high %v1455, %v1455
      %v1458 = vunpack.i.l.s16 %v1448
      %v1459 = vunpack.i.h.s16 %v1448
      %v1460 = vunpack.i.l.s16 %v1455
      %v1461 = vunpack.i.h.s16 %v1455
      %v1462 = vunpack.i.l.s16 %v1456
      %v1463 = vunpack.i.h.s16 %v1456
      %v1464 = vunpack.i.l.s16 %v1457
      %v1465 = vunpack.i.h.s16 %v1457
      %v1466 = vpack.i.b16 %v1359, %v1359
      %v1467 = vpack.i.b16 %v1360, %v1360
      %v1468 = vpack.i.b16 %v1361, %v1361
      %v1469 = vpack.i.b16 %v1362, %v1362
      %v1470 = vpack.i.b16 %v1363, %v1363
      %v1471 = vpack.i.b16 %v1364, %v1364
      %v1472 = vpack.i.b16 %v1365, %v1365
      %v1473 = vpack.i.b16 %v1366, %v1366
      %v1474 = vlaneseq
      %v1475 = vshrl.u32 %v1474, 7
      %v1476 = vsub.s32 0, %v1475
      %v1477 = vrot.slane %v1466, %v1476
      %v1478 = vlaneseq
      %v1479 = vshrl.u32 %v1478, 7
      %v1480 = vsub.s32 0, %v1479
      %v1481 = vrot.slane %v1467, %v1480
      %v1482 = vlaneseq
      %v1483 = vshrl.u32 %v1482, 7
      %v1484 = vsub.s32 0, %v1483
      %v1485 = vrot.slane %v1468, %v1484
      %v1486 = vlaneseq
      %v1487 = vshrl.u32 %v1486, 7
      %v1488 = vsub.s32 0, %v1487
      %v1489 = vrot.slane %v1469, %v1488
      %v1490 = vlaneseq
      %v1491 = vshrl.u32 %v1490, 7
      %v1492 = vsub.s32 0, %v1491
      %v1493 = vrot.slane %v1470, %v1492
      %v1494 = vlaneseq
      %v1495 = vshrl.u32 %v1494, 7
      %v1496 = vsub.s32 0, %v1495
      %v1497 = vrot.slane %v1471, %v1496
      %v1498 = vlaneseq
      %v1499 = vshrl.u32 %v1498, 7
      %v1500 = vsub.s32 0, %v1499
      %v1501 = vrot.slane %v1472, %v1500
      %v1502 = vlaneseq
      %v1503 = vshrl.u32 %v1502, 7
      %v1504 = vsub.s32 0, %v1503
      %v1505 = vrot.slane %v1473, %v1504
      %v1514 = vpack.i.b16 %v1392, %v1392
      %v1515 = vpack.i.b16 %v1393, %v1393
      %v1516 = vpack.i.b16 %v1394, %v1394
      %v1517 = vpack.i.b16 %v1395, %v1395
      %v1518 = vpack.i.b16 %v1396, %v1396
      %v1519 = vpack.i.b16 %v1397, %v1397
      %v1520 = vpack.i.b16 %v1398, %v1398
      %v1521 = vpack.i.b16 %v1399, %v1399
      %v1522 = vlaneseq
      %v1523 = vshrl.u32 %v1522, 7
      %v1524 = vsub.s32 0, %v1523
      %v1525 = vrot.slane %v1514, %v1524
      %v1526 = vlaneseq
      %v1527 = vshrl.u32 %v1526, 7
      %v1528 = vsub.s32 0, %v1527
      %v1529 = vrot.slane %v1515, %v1528
      %v1530 = vlaneseq
      %v1531 = vshrl.u32 %v1530, 7
      %v1532 = vsub.s32 0, %v1531
      %v1533 = vrot.slane %v1516, %v1532
      %v1534 = vlaneseq
      %v1535 = vshrl.u32 %v1534, 7
      %v1536 = vsub.s32 0, %v1535
      %v1537 = vrot.slane %v1517, %v1536
      %v1538 = vlaneseq
      %v1539 = vshrl.u32 %v1538, 7
      %v1540 = vsub.s32 0, %v1539
      %v1541 = vrot.slane %v1518, %v1540
      %v1542 = vlaneseq
      %v1543 = vshrl.u32 %v1542, 7
      %v1544 = vsub.s32 0, %v1543
      %v1545 = vrot.slane %v1519, %v1544
      %v1546 = vlaneseq
      %v1547 = vshrl.u32 %v1546, 7
      %v1548 = vsub.s32 0, %v1547
      %v1549 = vrot.slane %v1520, %v1548
      %v1550 = vlaneseq
      %v1551 = vshrl.u32 %v1550, 7
      %v1552 = vsub.s32 0, %v1551
      %v1553 = vrot.slane %v1521, %v1552
      %v1562 = vpack.i.b16 %v1425, %v1425
      %v1563 = vpack.i.b16 %v1426, %v1426
      %v1564 = vpack.i.b16 %v1427, %v1427
      %v1565 = vpack.i.b16 %v1428, %v1428
      %v1566 = vpack.i.b16 %v1429, %v1429
      %v1567 = vpack.i.b16 %v1430, %v1430
      %v1568 = vpack.i.b16 %v1431, %v1431
      %v1569 = vpack.i.b16 %v1432, %v1432
      %v1570 = vlaneseq
      %v1571 = vshrl.u32 %v1570, 7
      %v1572 = vsub.s32 0, %v1571
      %v1573 = vrot.slane %v1562, %v1572
      %v1574 = vlaneseq
      %v1575 = vshrl.u32 %v1574, 7
      %v1576 = vsub.s32 0, %v1575
      %v1577 = vrot.slane %v1563, %v1576
      %v1578 = vlaneseq
      %v1579 = vshrl.u32 %v1578, 7
      %v1580 = vsub.s32 0, %v1579
      %v1581 = vrot.slane %v1564, %v1580
      %v1582 = vlaneseq
      %v1583 = vshrl.u32 %v1582, 7
      %v1584 = vsub.s32 0, %v1583
      %v1585 = vrot.slane %v1565, %v1584
      %v1586 = vlaneseq
      %v1587 = vshrl.u32 %v1586, 7
      %v1588 = vsub.s32 0, %v1587
      %v1589 = vrot.slane %v1566, %v1588
      %v1590 = vlaneseq
      %v1591 = vshrl.u32 %v1590, 7
      %v1592 = vsub.s32 0, %v1591
      %v1593 = vrot.slane %v1567, %v1592
      %v1594 = vlaneseq
      %v1595 = vshrl.u32 %v1594, 7
      %v1596 = vsub.s32 0, %v1595
      %v1597 = vrot.slane %v1568, %v1596
      %v1598 = vlaneseq
      %v1599 = vshrl.u32 %v1598, 7
      %v1600 = vsub.s32 0, %v1599
      %v1601 = vrot.slane %v1569, %v1600
      %v1602 = vpack.i.b16 %v1458, %v1458
      %v1603 = vpack.i.b16 %v1459, %v1459
      %v1604 = vpack.i.b16 %v1460, %v1460
      %v1605 = vpack.i.b16 %v1461, %v1461
      %v1606 = vpack.i.b16 %v1462, %v1462
      %v1607 = vpack.i.b16 %v1463, %v1463
      %v1608 = vpack.i.b16 %v1464, %v1464
      %v1609 = vpack.i.b16 %v1465, %v1465
      %v1610 = vlaneseq
      %v1611 = vshrl.u32 %v1610, 7
      %v1612 = vsub.s32 0, %v1611
      %v1613 = vrot.slane %v1602, %v1612
      %v1614 = vlaneseq
      %v1615 = vshrl.u32 %v1614, 7
      %v1616 = vsub.s32 0, %v1615
      %v1617 = vrot.slane %v1603, %v1616
      %v1618 = vlaneseq
      %v1619 = vshrl.u32 %v1618, 7
      %v1620 = vsub.s32 0, %v1619
      %v1621 = vrot.slane %v1604, %v1620
      %v1622 = vlaneseq
      %v1623 = vshrl.u32 %v1622, 7
      %v1624 = vsub.s32 0, %v1623
      %v1625 = vrot.slane %v1605, %v1624
      %v1626 = vlaneseq
      %v1627 = vshrl.u32 %v1626, 7
      %v1628 = vsub.s32 0, %v1627
      %v1629 = vrot.slane %v1606, %v1628
      %v1630 = vlaneseq
      %v1631 = vshrl.u32 %v1630, 7
      %v1632 = vsub.s32 0, %v1631
      %v1633 = vrot.slane %v1607, %v1632
      %v1634 = vlaneseq
      %v1635 = vshrl.u32 %v1634, 7
      %v1636 = vsub.s32 0, %v1635
      %v1637 = vrot.slane %v1608, %v1636
      %v1638 = vlaneseq
      %v1639 = vshrl.u32 %v1638, 7
      %v1640 = vsub.s32 0, %v1639
      %v1641 = vrot.slane %v1609, %v1640
      %vm1650 = vcmask 1040384
      %vm1651 = vsmask.f32 256
      %vm1652 = vmand %vm1650, %vm1651
      %v1653 = vsel %vm1652, %v1477, %v1525
      %v1654 = vsel %vm1652, %v1481, %v1529
      %v1655 = vsel %vm1652, %v1485, %v1533
      %v1656 = vsel %vm1652, %v1489, %v1537
      %v1657 = vsel %vm1652, %v1493, %v1541
      %v1658 = vsel %vm1652, %v1497, %v1545
      %v1659 = vsel %vm1652, %v1501, %v1549
      %v1660 = vsel %vm1652, %v1505, %v1553
      %vm1661 = vcmask 1040384
      %v1664 = vsel %vm1661, %v1653, %v1573
      %v1668 = vsel %vm1661, %v1654, %v1577
      %v1672 = vsel %vm1661, %v1655, %v1581
      %v1676 = vsel %vm1661, %v1656, %v1585
      %v1680 = vsel %vm1661, %v1657, %v1589
      %v1684 = vsel %vm1661, %v1658, %v1593
      %v1688 = vsel %vm1661, %v1659, %v1597
      %v1692 = vsel %vm1661, %v1660, %v1601
      %vm1694 = vcmask 1041408
      %vm1695 = vsmask.f32 1280
      %vm1696 = vmand %vm1694, %vm1695
      %v1697 = vsel %vm1696, %v1664, %v1613
      %v1698 = vsel %vm1696, %v1668, %v1617
      %v1699 = vsel %vm1696, %v1672, %v1621
      %v1700 = vsel %vm1696, %v1676, %v1625
      %v1701 = vsel %vm1696, %v1680, %v1629
      %v1702 = vsel %vm1696, %v1684, %v1633
      %v1703 = vsel %vm1696, %v1688, %v1637
      %v1704 = vsel %vm1696, %v1692, %v1641
      %v1706 = vsel %vm1091, %v1697, 0
      %v1708 = vsel %vm1147, %v447, 0
      %1710 = vmatprep.subr.bf16.mxu0 0
      %1711 = vmatpush1.bf16.msra.mxu0 %v1708
      %1712 = vmatprep.subr.bf16.mxu0 0
      %1713 = vmatpush1.bf16.msra.mxu0 0
      %1714 = vmatprep.subr.bf16.mxu0 0
      %1715 = vmatpush1.bf16.msra.mxu0 0
      %1716 = vmatprep.subr.bf16.mxu0 0
      %1717 = vmatpush1.bf16.msra.mxu0 0
      %1718 = vmatprep.subr.bf16.mxu0 0
      %1719 = vmatpush1.bf16.msra.mxu0 0
      %1720 = vmatprep.subr.bf16.mxu0 0
      %1721 = vmatpush1.bf16.msra.mxu0 0
      %1722 = vmatprep.subr.bf16.mxu0 0
      %1723 = vmatpush1.bf16.msra.mxu0 0
      %1724 = vmatprep.subr.bf16.mxu0 0
      %1725 = vmatpush1.bf16.msra.mxu0 0
      %1726 = vmatprep.subr.bf16.mxu0 0
      %1727 = vmatpush1.bf16.msra.mxu0 0
      %1728 = vmatprep.subr.bf16.mxu0 0
      %1729 = vmatpush1.bf16.msra.mxu0 0
      %1730 = vmatprep.subr.bf16.mxu0 0
      %1731 = vmatpush1.bf16.msra.mxu0 0
      %1732 = vmatprep.subr.bf16.mxu0 0
      %1733 = vmatpush1.bf16.msra.mxu0 0
      %1734 = vmatprep.subr.bf16.mxu0 0
      %1735 = vmatpush1.bf16.msra.mxu0 0
      %1736 = vmatprep.subr.bf16.mxu0 0
      %1737 = vmatpush1.bf16.msra.mxu0 0
      %1738 = vmatprep.subr.bf16.mxu0 0
      %1739 = vmatpush1.bf16.msra.mxu0 0
      %1740 = vmatprep.subr.bf16.mxu0 0
      %1741 = vmatpush1.bf16.msra.mxu0 0
      %1742 = vmatprep.mubr.bf16.mxu0 0
      %1743 = vmatmul.mubr.bf16.gmra.mrb[0].mxu0 %v1706
      %v1744 = vpop.f32.mrb[0].mxu0
      %v1745 = vadd.f32 0.0, %v1744
      %v1746 = vpop.f32.mrb[0].mxu0
      %v1747 = vpop.f32.mrb[0].mxu0
      %v1748 = vpop.f32.mrb[0].mxu0
      %1749 = vdwg.mxu0
      %v1751 = vsel %vm1091, %v1698, 0
      %v1753 = vsel %vm1147, %v448, 0
      %1755 = vmatprep.subr.bf16.mxu0 0
      %1756 = vmatpush1.bf16.msra.mxu0 %v1753
      %1757 = vmatprep.subr.bf16.mxu0 0
      %1758 = vmatpush1.bf16.msra.mxu0 0
      %1759 = vmatprep.subr.bf16.mxu0 0
      %1760 = vmatpush1.bf16.msra.mxu0 0
      %1761 = vmatprep.subr.bf16.mxu0 0
      %1762 = vmatpush1.bf16.msra.mxu0 0
      %1763 = vmatprep.subr.bf16.mxu0 0
      %1764 = vmatpush1.bf16.msra.mxu0 0
      %1765 = vmatprep.subr.bf16.mxu0 0
      %1766 = vmatpush1.bf16.msra.mxu0 0
      %1767 = vmatprep.subr.bf16.mxu0 0
      %1768 = vmatpush1.bf16.msra.mxu0 0
      %1769 = vmatprep.subr.bf16.mxu0 0
      %1770 = vmatpush1.bf16.msra.mxu0 0
      %1771 = vmatprep.subr.bf16.mxu0 0
      %1772 = vmatpush1.bf16.msra.mxu0 0
      %1773 = vmatprep.subr.bf16.mxu0 0
      %1774 = vmatpush1.bf16.msra.mxu0 0
      %1775 = vmatprep.subr.bf16.mxu0 0
      %1776 = vmatpush1.bf16.msra.mxu0 0
      %1777 = vmatprep.subr.bf16.mxu0 0
      %1778 = vmatpush1.bf16.msra.mxu0 0
      %1779 = vmatprep.subr.bf16.mxu0 0
      %1780 = vmatpush1.bf16.msra.mxu0 0
      %1781 = vmatprep.subr.bf16.mxu0 0
      %1782 = vmatpush1.bf16.msra.mxu0 0
      %1783 = vmatprep.subr.bf16.mxu0 0
      %1784 = vmatpush1.bf16.msra.mxu0 0
      %1785 = vmatprep.subr.bf16.mxu0 0
      %1786 = vmatpush1.bf16.msra.mxu0 0
      %1787 = vmatprep.mubr.bf16.mxu0 0
      %1788 = vmatmul.mubr.bf16.gmra.mrb[0].mxu0 %v1751
      %v1789 = vpop.f32.mrb[0].mxu0
      %v1790 = vadd.f32 0.0, %v1789
      %v1791 = vpop.f32.mrb[0].mxu0
      %v1792 = vpop.f32.mrb[0].mxu0
      %v1793 = vpop.f32.mrb[0].mxu0
      %1794 = vdwg.mxu0
      %v1796 = vsel %vm1091, %v1699, 0
      %v1798 = vsel %vm1147, %v449, 0
      %1800 = vmatprep.subr.bf16.mxu0 0
      %1801 = vmatpush1.bf16.msra.mxu0 %v1798
      %1802 = vmatprep.subr.bf16.mxu0 0
      %1803 = vmatpush1.bf16.msra.mxu0 0
      %1804 = vmatprep.subr.bf16.mxu0 0
      %1805 = vmatpush1.bf16.msra.mxu0 0
      %1806 = vmatprep.subr.bf16.mxu0 0
      %1807 = vmatpush1.bf16.msra.mxu0 0
      %1808 = vmatprep.subr.bf16.mxu0 0
      %1809 = vmatpush1.bf16.msra.mxu0 0
      %1810 = vmatprep.subr.bf16.mxu0 0
      %1811 = vmatpush1.bf16.msra.mxu0 0
      %1812 = vmatprep.subr.bf16.mxu0 0
      %1813 = vmatpush1.bf16.msra.mxu0 0
      %1814 = vmatprep.subr.bf16.mxu0 0
      %1815 = vmatpush1.bf16.msra.mxu0 0
      %1816 = vmatprep.subr.bf16.mxu0 0
      %1817 = vmatpush1.bf16.msra.mxu0 0
      %1818 = vmatprep.subr.bf16.mxu0 0
      %1819 = vmatpush1.bf16.msra.mxu0 0
      %1820 = vmatprep.subr.bf16.mxu0 0
      %1821 = vmatpush1.bf16.msra.mxu0 0
      %1822 = vmatprep.subr.bf16.mxu0 0
      %1823 = vmatpush1.bf16.msra.mxu0 0
      %1824 = vmatprep.subr.bf16.mxu0 0
      %1825 = vmatpush1.bf16.msra.mxu0 0
      %1826 = vmatprep.subr.bf16.mxu0 0
      %1827 = vmatpush1.bf16.msra.mxu0 0
      %1828 = vmatprep.subr.bf16.mxu0 0
      %1829 = vmatpush1.bf16.msra.mxu0 0
      %1830 = vmatprep.subr.bf16.mxu0 0
      %1831 = vmatpush1.bf16.msra.mxu0 0
      %1832 = vmatprep.mubr.bf16.mxu0 0
      %1833 = vmatmul.mubr.bf16.gmra.mrb[0].mxu0 %v1796
      %v1834 = vpop.f32.mrb[0].mxu0
      %v1835 = vadd.f32 0.0, %v1834
      %v1836 = vpop.f32.mrb[0].mxu0
      %v1837 = vpop.f32.mrb[0].mxu0
      %v1838 = vpop.f32.mrb[0].mxu0
      %1839 = vdwg.mxu0
      %v1841 = vsel %vm1091, %v1700, 0
      %v1843 = vsel %vm1147, %v450, 0
      %1845 = vmatprep.subr.bf16.mxu0 0
      %1846 = vmatpush1.bf16.msra.mxu0 %v1843
      %1847 = vmatprep.subr.bf16.mxu0 0
      %1848 = vmatpush1.bf16.msra.mxu0 0
      %1849 = vmatprep.subr.bf16.mxu0 0
      %1850 = vmatpush1.bf16.msra.mxu0 0
      %1851 = vmatprep.subr.bf16.mxu0 0
      %1852 = vmatpush1.bf16.msra.mxu0 0
      %1853 = vmatprep.subr.bf16.mxu0 0
      %1854 = vmatpush1.bf16.msra.mxu0 0
      %1855 = vmatprep.subr.bf16.mxu0 0
      %1856 = vmatpush1.bf16.msra.mxu0 0
      %1857 = vmatprep.subr.bf16.mxu0 0
      %1858 = vmatpush1.bf16.msra.mxu0 0
      %1859 = vmatprep.subr.bf16.mxu0 0
      %1860 = vmatpush1.bf16.msra.mxu0 0
      %1861 = vmatprep.subr.bf16.mxu0 0
      %1862 = vmatpush1.bf16.msra.mxu0 0
      %1863 = vmatprep.subr.bf16.mxu0 0
      %1864 = vmatpush1.bf16.msra.mxu0 0
      %1865 = vmatprep.subr.bf16.mxu0 0
      %1866 = vmatpush1.bf16.msra.mxu0 0
      %1867 = vmatprep.subr.bf16.mxu0 0
      %1868 = vmatpush1.bf16.msra.mxu0 0
      %1869 = vmatprep.subr.bf16.mxu0 0
      %1870 = vmatpush1.bf16.msra.mxu0 0
      %1871 = vmatprep.subr.bf16.mxu0 0
      %1872 = vmatpush1.bf16.msra.mxu0 0
      %1873 = vmatprep.subr.bf16.mxu0 0
      %1874 = vmatpush1.bf16.msra.mxu0 0
      %1875 = vmatprep.subr.bf16.mxu0 0
      %1876 = vmatpush1.bf16.msra.mxu0 0
      %1877 = vmatprep.mubr.bf16.mxu0 0
      %1878 = vmatmul.mubr.bf16.gmra.mrb[0].mxu0 %v1841
      %v1879 = vpop.f32.mrb[0].mxu0
      %v1880 = vadd.f32 0.0, %v1879
      %v1881 = vpop.f32.mrb[0].mxu0
      %v1882 = vpop.f32.mrb[0].mxu0
      %v1883 = vpop.f32.mrb[0].mxu0
      %1884 = vdwg.mxu0
      %v1886 = vsel %vm1091, %v1701, 0
      %v1888 = vsel %vm1147, %v451, 0
      %1890 = vmatprep.subr.bf16.mxu0 0
      %1891 = vmatpush1.bf16.msra.mxu0 %v1888
      %1892 = vmatprep.subr.bf16.mxu0 0
      %1893 = vmatpush1.bf16.msra.mxu0 0
      %1894 = vmatprep.subr.bf16.mxu0 0
      %1895 = vmatpush1.bf16.msra.mxu0 0
      %1896 = vmatprep.subr.bf16.mxu0 0
      %1897 = vmatpush1.bf16.msra.mxu0 0
      %1898 = vmatprep.subr.bf16.mxu0 0
      %1899 = vmatpush1.bf16.msra.mxu0 0
      %1900 = vmatprep.subr.bf16.mxu0 0
      %1901 = vmatpush1.bf16.msra.mxu0 0
      %1902 = vmatprep.subr.bf16.mxu0 0
      %1903 = vmatpush1.bf16.msra.mxu0 0
      %1904 = vmatprep.subr.bf16.mxu0 0
      %1905 = vmatpush1.bf16.msra.mxu0 0
      %1906 = vmatprep.subr.bf16.mxu0 0
      %1907 = vmatpush1.bf16.msra.mxu0 0
      %1908 = vmatprep.subr.bf16.mxu0 0
      %1909 = vmatpush1.bf16.msra.mxu0 0
      %1910 = vmatprep.subr.bf16.mxu0 0
      %1911 = vmatpush1.bf16.msra.mxu0 0
      %1912 = vmatprep.subr.bf16.mxu0 0
      %1913 = vmatpush1.bf16.msra.mxu0 0
      %1914 = vmatprep.subr.bf16.mxu0 0
      %1915 = vmatpush1.bf16.msra.mxu0 0
      %1916 = vmatprep.subr.bf16.mxu0 0
      %1917 = vmatpush1.bf16.msra.mxu0 0
      %1918 = vmatprep.subr.bf16.mxu0 0
      %1919 = vmatpush1.bf16.msra.mxu0 0
      %1920 = vmatprep.subr.bf16.mxu0 0
      %1921 = vmatpush1.bf16.msra.mxu0 0
      %1922 = vmatprep.mubr.bf16.mxu0 0
      %1923 = vmatmul.mubr.bf16.gmra.mrb[0].mxu0 %v1886
      %v1924 = vpop.f32.mrb[0].mxu0
      %v1925 = vadd.f32 0.0, %v1924
      %v1926 = vpop.f32.mrb[0].mxu0
      %v1927 = vpop.f32.mrb[0].mxu0
      %v1928 = vpop.f32.mrb[0].mxu0
      %1929 = vdwg.mxu0
      %v1931 = vsel %vm1091, %v1702, 0
      %v1933 = vsel %vm1147, %v452, 0
      %1935 = vmatprep.subr.bf16.mxu0 0
      %1936 = vmatpush1.bf16.msra.mxu0 %v1933
      %1937 = vmatprep.subr.bf16.mxu0 0
      %1938 = vmatpush1.bf16.msra.mxu0 0
      %1939 = vmatprep.subr.bf16.mxu0 0
      %1940 = vmatpush1.bf16.msra.mxu0 0
      %1941 = vmatprep.subr.bf16.mxu0 0
      %1942 = vmatpush1.bf16.msra.mxu0 0
      %1943 = vmatprep.subr.bf16.mxu0 0
      %1944 = vmatpush1.bf16.msra.mxu0 0
      %1945 = vmatprep.subr.bf16.mxu0 0
      %1946 = vmatpush1.bf16.msra.mxu0 0
      %1947 = vmatprep.subr.bf16.mxu0 0
      %1948 = vmatpush1.bf16.msra.mxu0 0
      %1949 = vmatprep.subr.bf16.mxu0 0
      %1950 = vmatpush1.bf16.msra.mxu0 0
      %1951 = vmatprep.subr.bf16.mxu0 0
      %1952 = vmatpush1.bf16.msra.mxu0 0
      %1953 = vmatprep.subr.bf16.mxu0 0
      %1954 = vmatpush1.bf16.msra.mxu0 0
      %1955 = vmatprep.subr.bf16.mxu0 0
      %1956 = vmatpush1.bf16.msra.mxu0 0
      %1957 = vmatprep.subr.bf16.mxu0 0
      %1958 = vmatpush1.bf16.msra.mxu0 0
      %1959 = vmatprep.subr.bf16.mxu0 0
      %1960 = vmatpush1.bf16.msra.mxu0 0
      %1961 = vmatprep.subr.bf16.mxu0 0
      %1962 = vmatpush1.bf16.msra.mxu0 0
      %1963 = vmatprep.subr.bf16.mxu0 0
      %1964 = vmatpush1.bf16.msra.mxu0 0
      %1965 = vmatprep.subr.bf16.mxu0 0
      %1966 = vmatpush1.bf16.msra.mxu0 0
      %1967 = vmatprep.mubr.bf16.mxu0 0
      %1968 = vmatmul.mubr.bf16.gmra.mrb[0].mxu0 %v1931
      %v1969 = vpop.f32.mrb[0].mxu0
      %v1970 = vadd.f32 0.0, %v1969
      %v1971 = vpop.f32.mrb[0].mxu0
      %v1972 = vpop.f32.mrb[0].mxu0
      %v1973 = vpop.f32.mrb[0].mxu0
      %1974 = vdwg.mxu0
      %v1976 = vsel %vm1091, %v1703, 0
      %v1978 = vsel %vm1147, %v453, 0
      %1980 = vmatprep.subr.bf16.mxu0 0
      %1981 = vmatpush1.bf16.msra.mxu0 %v1978
      %1982 = vmatprep.subr.bf16.mxu0 0
      %1983 = vmatpush1.bf16.msra.mxu0 0
      %1984 = vmatprep.subr.bf16.mxu0 0
      %1985 = vmatpush1.bf16.msra.mxu0 0
      %1986 = vmatprep.subr.bf16.mxu0 0
      %1987 = vmatpush1.bf16.msra.mxu0 0
      %1988 = vmatprep.subr.bf16.mxu0 0
      %1989 = vmatpush1.bf16.msra.mxu0 0
      %1990 = vmatprep.subr.bf16.mxu0 0
      %1991 = vmatpush1.bf16.msra.mxu0 0
      %1992 = vmatprep.subr.bf16.mxu0 0
      %1993 = vmatpush1.bf16.msra.mxu0 0
      %1994 = vmatprep.subr.bf16.mxu0 0
      %1995 = vmatpush1.bf16.msra.mxu0 0
      %1996 = vmatprep.subr.bf16.mxu0 0
      %1997 = vmatpush1.bf16.msra.mxu0 0
      %1998 = vmatprep.subr.bf16.mxu0 0
      %1999 = vmatpush1.bf16.msra.mxu0 0
      %2000 = vmatprep.subr.bf16.mxu0 0
      %2001 = vmatpush1.bf16.msra.mxu0 0
      %2002 = vmatprep.subr.bf16.mxu0 0
      %2003 = vmatpush1.bf16.msra.mxu0 0
      %2004 = vmatprep.subr.bf16.mxu0 0
      %2005 = vmatpush1.bf16.msra.mxu0 0
      %2006 = vmatprep.subr.bf16.mxu0 0
      %2007 = vmatpush1.bf16.msra.mxu0 0
      %2008 = vmatprep.subr.bf16.mxu0 0
      %2009 = vmatpush1.bf16.msra.mxu0 0
      %2010 = vmatprep.subr.bf16.mxu0 0
      %2011 = vmatpush1.bf16.msra.mxu0 0
      %2012 = vmatprep.mubr.bf16.mxu0 0
      %2013 = vmatmul.mubr.bf16.gmra.mrb[0].mxu0 %v1976
      %v2014 = vpop.f32.mrb[0].mxu0
      %v2015 = vadd.f32 0.0, %v2014
      %v2016 = vpop.f32.mrb[0].mxu0
      %v2017 = vpop.f32.mrb[0].mxu0
      %v2018 = vpop.f32.mrb[0].mxu0
      %2019 = vdwg.mxu0
      %v2021 = vsel %vm1091, %v1704, 0
      %v2023 = vsel %vm1147, %v454, 0
      %2025 = vmatprep.subr.bf16.mxu0 0
      %2026 = vmatpush1.bf16.msra.mxu0 %v2023
      %2027 = vmatprep.subr.bf16.mxu0 0
      %2028 = vmatpush1.bf16.msra.mxu0 0
      %2029 = vmatprep.subr.bf16.mxu0 0
      %2030 = vmatpush1.bf16.msra.mxu0 0
      %2031 = vmatprep.subr.bf16.mxu0 0
      %2032 = vmatpush1.bf16.msra.mxu0 0
      %2033 = vmatprep.subr.bf16.mxu0 0
      %2034 = vmatpush1.bf16.msra.mxu0 0
      %2035 = vmatprep.subr.bf16.mxu0 0
      %2036 = vmatpush1.bf16.msra.mxu0 0
      %2037 = vmatprep.subr.bf16.mxu0 0
      %2038 = vmatpush1.bf16.msra.mxu0 0
      %2039 = vmatprep.subr.bf16.mxu0 0
      %2040 = vmatpush1.bf16.msra.mxu0 0
      %2041 = vmatprep.subr.bf16.mxu0 0
      %2042 = vmatpush1.bf16.msra.mxu0 0
      %2043 = vmatprep.subr.bf16.mxu0 0
      %2044 = vmatpush1.bf16.msra.mxu0 0
      %2045 = vmatprep.subr.bf16.mxu0 0
      %2046 = vmatpush1.bf16.msra.mxu0 0
      %2047 = vmatprep.subr.bf16.mxu0 0
      %2048 = vmatpush1.bf16.msra.mxu0 0
      %2049 = vmatprep.subr.bf16.mxu0 0
      %2050 = vmatpush1.bf16.msra.mxu0 0
      %2051 = vmatprep.subr.bf16.mxu0 0
      %2052 = vmatpush1.bf16.msra.mxu0 0
      %2053 = vmatprep.subr.bf16.mxu0 0
      %2054 = vmatpush1.bf16.msra.mxu0 0
      %2055 = vmatprep.subr.bf16.mxu0 0
      %2056 = vmatpush1.bf16.msra.mxu0 0
      %2057 = vmatprep.mubr.bf16.mxu0 0
      %2058 = vmatmul.mubr.bf16.gmra.mrb[0].mxu0 %v2021
      %v2059 = vpop.f32.mrb[0].mxu0
      %v2060 = vadd.f32 0.0, %v2059
      %v2061 = vpop.f32.mrb[0].mxu0
      %v2062 = vpop.f32.mrb[0].mxu0
      %v2063 = vpop.f32.mrb[0].mxu0
      %2064 = vdwg.mxu0
      %vm2065 = vcmask 125952
      %2066 = vst.msk [vmem:[%s436] sm:$0xf] %vm2065, %v1745
      %2067 = vst.msk [vmem:[%s436 + $0x4] sm:$0xf] %vm2065, %v1790
      %2068 = vst.msk [vmem:[%s436 + $0x8] sm:$0xf] %vm2065, %v1835
      %2069 = vst.msk [vmem:[%s436 + $0xc] sm:$0xf] %vm2065, %v1880
      %2070 = vst.msk [vmem:[%s436 + $0x10] sm:$0xf] %vm2065, %v1925
      %2071 = vst.msk [vmem:[%s436 + $0x14] sm:$0xf] %vm2065, %v1970
      %2072 = vst.msk [vmem:[%s436 + $0x18] sm:$0xf] %vm2065, %v2015
      %2073 = vst.msk [vmem:[%s436 + $0x1c] sm:$0xf] %vm2065, %v2060
      %p2074 = scmp.lt.s32.totalorder %s23, 1
      %s2075 = scalar_select %p2074, %s23, 1
      %p2076 = scmp.lt.s32.totalorder %s24, 0
      %s2077 = scalar_select %p2076, %s24, 0
      %s2078 = smul.addr %s2075, 4
      %s2079 = sadd.s32 %s2077, %s2078
      %s2080 = smul.addr %s2079, 8
      %s2081 = scalar_lea.vmem %s6, %s2080
      %s2082 = smul.u32 8, %s24
      %p2083 = scmp.lt.s32.totalorder %s23, 1
      %s2084 = scalar_select %p2083, %s23, 1
      %p2085 = scmp.lt.s32.totalorder %s2082, 7
      %s2086 = scalar_select %p2085, %s2082, 7
      %s2087 = smul.addr %s2084, 8
      %s2088 = sadd.s32 %s2086, %s2087
      %s2089 = smul.addr %s2088, 4
      %s2090 = scalar_lea.vmem %s7, %s2089
      // Predicated region
      $region45: #{structure_update_forward.9} parent=43 // pred_check
        %p2091 = pneg %p208
      $region46: #{structure_update_forward.9} parent=43 // pred_check_branch
        %2093 = sbr.rel (%p2091) target = $region48
      $region47: #{structure_update_forward.9} parent=43 // pred_region
        _
      $region48: #{structure_update_forward.9} parent=43 // pred_fallthru
        _
      // Predicated region
      $region49: #{structure_update_forward.9} parent=43 // pred_check
        %p2094 = pneg %p236
      $region50: #{structure_update_forward.9} parent=43 // pred_check_branch
        %2096 = sbr.rel (%p2094) target = $region52
      $region51: #{structure_update_forward.9} parent=43 // pred_region
        %s2097 = smul.u32 8, %s24
      $region52: #{structure_update_forward.9} parent=43 // pred_fallthru
        _
    $region44: #{structure_update_forward.9} parent=5 // pred_fallthru
      _
    %p2098 = scmp.le.s32.totalorder 2, %s14
    // Predicated region
    $region53: #{structure_update_forward.9} parent=5 // pred_check
      %p2099 = pneg %p2098
    $region54: #{structure_update_forward.9} parent=5 // pred_check_branch
      %2101 = sbr.rel (%p2099) target = $region56
    $region55: #{structure_update_forward.9} parent=5 // pred_region
      %s2102 = ssub.s32 %s14, 2
      // Predicated region
      $region57: #{structure_update_forward.9} parent=55 // pred_check
        %p2103 = pneg %p214
      $region58: #{structure_update_forward.9} parent=55 // pred_check_branch
        %2105 = sbr.rel (%p2103) target = $region60
      $region59: #{structure_update_forward.9} parent=55 // pred_region
        %p2106 = scmp.lt.s32.totalorder %s25, 1
        %s2107 = scalar_select %p2106, %s25, 1
        %p2108 = scmp.lt.s32.totalorder %s26, 0
        %s2109 = scalar_select %p2108, %s26, 0
        %s2110 = smul.addr %s2107, 4
        %s2111 = sadd.s32 %s2109, %s2110
        %s2112 = smul.addr %s2111, 8
        %s2113 = scalar_lea.vmem %s6, %s2112
      $region60: #{structure_update_forward.9} parent=55 // pred_fallthru
        _
      // Predicated region
      $region61: #{structure_update_forward.9} parent=55 // pred_check
        %p2114 = pneg %p242
      $region62: #{structure_update_forward.9} parent=55 // pred_check_branch
        %2116 = sbr.rel (%p2114) target = $region64
      $region63: #{structure_update_forward.9} parent=55 // pred_region
        %s2117 = smul.u32 8, %s26
        %p2118 = scmp.lt.s32.totalorder %s25, 1
        %s2119 = scalar_select %p2118, %s25, 1
        %p2120 = scmp.lt.s32.totalorder %s2117, 7
        %s2121 = scalar_select %p2120, %s2117, 7
        %s2122 = smul.addr %s2119, 8
        %s2123 = sadd.s32 %s2121, %s2122
        %s2124 = smul.addr %s2123, 4
        %s2125 = scalar_lea.vmem %s7, %s2124
      $region64: #{structure_update_forward.9} parent=55 // pred_fallthru
        _
    $region56: #{structure_update_forward.9} parent=5 // pred_fallthru
      _
  $region6: #{structure_update_forward.9} parent=0 // loop_footer
    %s18 = sadd.s32 1, %s14
  $region7: #{structure_update_forward.9} parent=0 // loop_footer_branch
    %13 = sbr.rel target = $region3
  $region8: #{structure_update_forward.9} parent=0 // loop_exit
    _

// kernel: structure_update_forward.11
$region0: #{structure_update_forward.11}
  #allocation0 [shape = 'u32[]', space=smem, size = 0x4, offset = 0x4, fixed_abs, tag = 'smem constant byte address 0x4 - core index']
  #allocation1 [shape = 'u32[144,128]{1,0:T(1,128)}', space=vmem, size = 0x12000, scoped, tag = 'internal scratch']
  %s0 = inlined_call_operand.vmem [shape: f32[16,32], index: 0, kind: input, shape index: {}]
  %s1 = inlined_call_operand.vmem [shape: bf16[32,16], index: 1, kind: input, shape index: {}]
  %s2 = inlined_call_operand.vmem [shape: f32[1,16], index: 2, kind: input, shape index: {}]
  %s3 = inlined_call_operand.vmem [shape: f32[16,16], index: 3, kind: output, shape index: {}]
  %s4 = sld [smem:[#allocation0]]
  $region22: #{structure_update_forward.11} parent=0
    _
  %s6 = ssub.s32 1, %s4
  %s7 = scalar_select 0, %s6, %s4
  // Predicated region
  $region2: #{structure_update_forward.11} parent=0 // pred_check
    _
  $region3: #{structure_update_forward.11} parent=0 // pred_check_branch
    %9 = sbr.rel (0) target = $region5
  $region4: #{structure_update_forward.11} parent=0 // pred_region
    _
  $region5: #{structure_update_forward.11} parent=0 // pred_fallthru
    _
  // Predicated region
  $region6: #{structure_update_forward.11} parent=0 // pred_check
    _
  $region7: #{structure_update_forward.11} parent=0 // pred_check_branch
    %11 = sbr.rel (0) target = $region9
  $region8: #{structure_update_forward.11} parent=0 // pred_region
    _
  $region9: #{structure_update_forward.11} parent=0 // pred_fallthru
    _
  // Predicated region
  $region10: #{structure_update_forward.11} parent=0 // pred_check
    _
  $region11: #{structure_update_forward.11} parent=0 // pred_check_branch
    %13 = sbr.rel (0) target = $region13
  $region12: #{structure_update_forward.11} parent=0 // pred_region
    _
  $region13: #{structure_update_forward.11} parent=0 // pred_fallthru
    _
  %v15 = vld [vmem:[%s0] sm:$0xff]
  %v16 = vld [vmem:[%s0 + $0x8] sm:$0xff]
  %v17 = vpack.c.bf16 %v16, %v15
  %v18 = vld [vmem:[%s1] sm:$0xf]
  %v19 = vld [vmem:[%s1 + $0x4] sm:$0xf]
  %v20 = vld [vmem:[%s1 + $0x8] sm:$0xf]
  %v21 = vld [vmem:[%s1 + $0xc] sm:$0xf]
  %v22 = vld [vmem:[%s2] sm:$0x1]
  %v24 = vlaneseq
  %v25 = vshrl.u32 %v24, 7
  %v26 = vsub.s32 0, %v25
  %v27 = vrot.slane %v22, %v26
  %v33 = vunpack.c.l.b16 %v18
  %v34 = vunpack.c.l.b16 %v19
  %v35 = vunpack.c.l.b16 %v20
  %v36 = vunpack.c.l.b16 %v21
  %v37 = vpack.c.b16 %v34, %v33
  %v38 = vpack.c.b16 %v36, %v35
  %vm41 = vcmask 261120
  %v43 = vsel %vm41, %v17, 0
  %45 = vmatprep.subr.bf16.mxu0 0
  %46 = vmatpush1.bf16.msra.mxu0 %v37
  %47 = vmatprep.subr.bf16.mxu0 0
  %48 = vmatpush1.bf16.msra.mxu0 %v38
  %49 = vmatprep.subr.bf16.mxu0 0
  %50 = vmatpush1.bf16.msra.mxu0 0
  %51 = vmatprep.subr.bf16.mxu0 0
  %52 = vmatpush1.bf16.msra.mxu0 0
  %53 = vmatprep.subr.bf16.mxu0 0
  %54 = vmatpush1.bf16.msra.mxu0 0
  %55 = vmatprep.subr.bf16.mxu0 0
  %56 = vmatpush1.bf16.msra.mxu0 0
  %57 = vmatprep.subr.bf16.mxu0 0
  %58 = vmatpush1.bf16.msra.mxu0 0
  %59 = vmatprep.subr.bf16.mxu0 0
  %60 = vmatpush1.bf16.msra.mxu0 0
  %61 = vmatprep.subr.bf16.mxu0 0
  %62 = vmatpush1.bf16.msra.mxu0 0
  %63 = vmatprep.subr.bf16.mxu0 0
  %64 = vmatpush1.bf16.msra.mxu0 0
  %65 = vmatprep.subr.bf16.mxu0 0
  %66 = vmatpush1.bf16.msra.mxu0 0
  %67 = vmatprep.subr.bf16.mxu0 0
  %68 = vmatpush1.bf16.msra.mxu0 0
  %69 = vmatprep.subr.bf16.mxu0 0
  %70 = vmatpush1.bf16.msra.mxu0 0
  %71 = vmatprep.subr.bf16.mxu0 0
  %72 = vmatpush1.bf16.msra.mxu0 0
  %73 = vmatprep.subr.bf16.mxu0 0
  %74 = vmatpush1.bf16.msra.mxu0 0
  %75 = vmatprep.subr.bf16.mxu0 0
  %76 = vmatpush1.bf16.msra.mxu0 0
  %77 = vmatprep.mubr.bf16.mxu0 0
  %78 = vmatmul.mubr.bf16.gmra.mrb[0].mxu0 %v43
  %v79 = vpop.f32.mrb[0].mxu0
  %v80 = vadd.f32 %v27, %v79
  %v81 = vpop.f32.mrb[0].mxu0
  %v82 = vpop.f32.mrb[0].mxu0
  %v83 = vadd.f32 %v27, %v82
  %v84 = vpop.f32.mrb[0].mxu0
  %85 = vdwg.mxu0
  %vm86 = vcmask 130048
  %87 = vst.msk [vmem:[%s3] sm:$0xff] %vm86, %v80
  %88 = vst.msk [vmem:[%s3 + $0x8] sm:$0xff] %vm86, %v83
  // Predicated region
  $region14: #{structure_update_forward.11} parent=0 // pred_check
    _
  $region15: #{structure_update_forward.11} parent=0 // pred_check_branch
    %90 = sbr.rel (0) target = $region17
  $region16: #{structure_update_forward.11} parent=0 // pred_region
    _
  $region17: #{structure_update_forward.11} parent=0 // pred_fallthru
    _
  // Predicated region
  $region18: #{structure_update_forward.11} parent=0 // pred_check
    _
  $region19: #{structure_update_forward.11} parent=0 // pred_check_branch
    %92 = sbr.rel (0) target = $region21
  $region20: #{structure_update_forward.11} parent=0 // pred_region
    _
  $region21: #{structure_update_forward.11} parent=0 // pred_fallthru
    _

// kernel: structure_update_forward.10
$region0: #{structure_update_forward.10}
  #allocation0 [shape = 'u32[]', space=smem, size = 0x4, offset = 0x4, fixed_abs, tag = 'smem constant byte address 0x4 - core index']
  #allocation1 [shape = 'u32[144,128]{1,0:T(1,128)}', space=vmem, size = 0x12000, scoped, tag = 'internal scratch']
  %s0 = inlined_call_operand.vmem [shape: f32[16,256], index: 0, kind: input, shape index: {}]
  %s1 = inlined_call_operand.vmem [shape: f32[16,32], index: 1, kind: input, shape index: {}]
  %s2 = inlined_call_operand.vmem [shape: bf16[256,32], index: 2, kind: input, shape index: {}]
  %s3 = inlined_call_operand.vmem [shape: f32[1,32], index: 3, kind: input, shape index: {}]
  %s4 = inlined_call_operand.vmem [shape: f32[1,32], index: 4, kind: input, shape index: {}]
  %s5 = inlined_call_operand.vmem [shape: f32[1,32], index: 5, kind: input, shape index: {}]
  %s6 = inlined_call_operand.vmem [shape: bf16[32,32], index: 6, kind: input, shape index: {}]
  %s7 = inlined_call_operand.vmem [shape: f32[1,32], index: 7, kind: input, shape index: {}]
  %s8 = inlined_call_operand.vmem [shape: bf16[32,32], index: 8, kind: input, shape index: {}]
  %s9 = inlined_call_operand.vmem [shape: f32[1,32], index: 9, kind: input, shape index: {}]
  %s10 = inlined_call_operand.vmem [shape: bf16[32,32], index: 10, kind: input, shape index: {}]
  %s11 = inlined_call_operand.vmem [shape: f32[1,32], index: 11, kind: input, shape index: {}]
  %s12 = inlined_call_operand.vmem [shape: f32[1,32], index: 12, kind: input, shape index: {}]
  %s13 = inlined_call_operand.vmem [shape: f32[1,32], index: 13, kind: input, shape index: {}]
  %s14 = inlined_call_operand.vmem [shape: f32[16,32], index: 14, kind: output, shape index: {}]
  %s15 = sld [smem:[#allocation0]]
  $region66: #{structure_update_forward.10} parent=0
    _
  %s17 = ssub.s32 1, %s15
  %s18 = scalar_select 0, %s17, %s15
  // Predicated region
  $region2: #{structure_update_forward.10} parent=0 // pred_check
    _
  $region3: #{structure_update_forward.10} parent=0 // pred_check_branch
    %20 = sbr.rel (0) target = $region5
  $region4: #{structure_update_forward.10} parent=0 // pred_region
    _
  $region5: #{structure_update_forward.10} parent=0 // pred_fallthru
    _
  // Predicated region
  $region6: #{structure_update_forward.10} parent=0 // pred_check
    _
  $region7: #{structure_update_forward.10} parent=0 // pred_check_branch
    %22 = sbr.rel (0) target = $region9
  $region8: #{structure_update_forward.10} parent=0 // pred_region
    _
  $region9: #{structure_update_forward.10} parent=0 // pred_fallthru
    _
  // Predicated region
  $region10: #{structure_update_forward.10} parent=0 // pred_check
    _
  $region11: #{structure_update_forward.10} parent=0 // pred_check_branch
    %24 = sbr.rel (0) target = $region13
  $region12: #{structure_update_forward.10} parent=0 // pred_region
    _
  $region13: #{structure_update_forward.10} parent=0 // pred_fallthru
    _
  // Predicated region
  $region14: #{structure_update_forward.10} parent=0 // pred_check
    _
  $region15: #{structure_update_forward.10} parent=0 // pred_check_branch
    %26 = sbr.rel (0) target = $region17
  $region16: #{structure_update_forward.10} parent=0 // pred_region
    _
  $region17: #{structure_update_forward.10} parent=0 // pred_fallthru
    _
  // Predicated region
  $region18: #{structure_update_forward.10} parent=0 // pred_check
    _
  $region19: #{structure_update_forward.10} parent=0 // pred_check_branch
    %28 = sbr.rel (0) target = $region21
  $region20: #{structure_update_forward.10} parent=0 // pred_region
    _
  $region21: #{structure_update_forward.10} parent=0 // pred_fallthru
    _
  // Predicated region
  $region22: #{structure_update_forward.10} parent=0 // pred_check
    _
  $region23: #{structure_update_forward.10} parent=0 // pred_check_branch
    %30 = sbr.rel (0) target = $region25
  $region24: #{structure_update_forward.10} parent=0 // pred_region
    _
  $region25: #{structure_update_forward.10} parent=0 // pred_fallthru
    _
  // Predicated region
  $region26: #{structure_update_forward.10} parent=0 // pred_check
    _
  $region27: #{structure_update_forward.10} parent=0 // pred_check_branch
    %32 = sbr.rel (0) target = $region29
  $region28: #{structure_update_forward.10} parent=0 // pred_region
    _
  $region29: #{structure_update_forward.10} parent=0 // pred_fallthru
    _
  // Predicated region
  $region30: #{structure_update_forward.10} parent=0 // pred_check
    _
  $region31: #{structure_update_forward.10} parent=0 // pred_check_branch
    %34 = sbr.rel (0) target = $region33
  $region32: #{structure_update_forward.10} parent=0 // pred_region
    _
  $region33: #{structure_update_forward.10} parent=0 // pred_fallthru
    _
  // Predicated region
  $region34: #{structure_update_forward.10} parent=0 // pred_check
    _
  $region35: #{structure_update_forward.10} parent=0 // pred_check_branch
    %36 = sbr.rel (0) target = $region37
  $region36: #{structure_update_forward.10} parent=0 // pred_region
    _
  $region37: #{structure_update_forward.10} parent=0 // pred_fallthru
    _
  // Predicated region
  $region38: #{structure_update_forward.10} parent=0 // pred_check
    _
  $region39: #{structure_update_forward.10} parent=0 // pred_check_branch
    %38 = sbr.rel (0) target = $region41
  $region40: #{structure_update_forward.10} parent=0 // pred_region
    _
  $region41: #{structure_update_forward.10} parent=0 // pred_fallthru
    _
  // Predicated region
  $region42: #{structure_update_forward.10} parent=0 // pred_check
    _
  $region43: #{structure_update_forward.10} parent=0 // pred_check_branch
    %40 = sbr.rel (0) target = $region45
  $region44: #{structure_update_forward.10} parent=0 // pred_region
    _
  $region45: #{structure_update_forward.10} parent=0 // pred_fallthru
    _
  // Predicated region
  $region46: #{structure_update_forward.10} parent=0 // pred_check
    _
  $region47: #{structure_update_forward.10} parent=0 // pred_check_branch
    %42 = sbr.rel (0) target = $region49
  $region48: #{structure_update_forward.10} parent=0 // pred_region
    _
  $region49: #{structure_update_forward.10} parent=0 // pred_fallthru
    _
  // Predicated region
  $region50: #{structure_update_forward.10} parent=0 // pred_check
    _
  $region51: #{structure_update_forward.10} parent=0 // pred_check_branch
    %44 = sbr.rel (0) target = $region53
  $region52: #{structure_update_forward.10} parent=0 // pred_region
    _
  $region53: #{structure_update_forward.10} parent=0 // pred_fallthru
    _
  // Predicated region
  $region54: #{structure_update_forward.10} parent=0 // pred_check
    _
  $region55: #{structure_update_forward.10} parent=0 // pred_check_branch
    %46 = sbr.rel (0) target = $region57
  $region56: #{structure_update_forward.10} parent=0 // pred_region
    _
  $region57: #{structure_update_forward.10} parent=0 // pred_fallthru
    _
  %v48 = vld [vmem:[%s0] sm:$0xff]
  %v49 = vld [vmem:[%s0 + $0x8] sm:$0xff]
  %v50 = vld [vmem:[%s0 + $0x10] sm:$0xff]
  %v51 = vld [vmem:[%s0 + $0x18] sm:$0xff]
  %v52 = vpack.c.bf16 %v50, %v48
  %v53 = vpack.c.bf16 %v51, %v49
  %v54 = vld [vmem:[%s2] sm:$0xf]
  %v55 = vld [vmem:[%s2 + $0x4] sm:$0xf]
  %v56 = vld [vmem:[%s2 + $0x8] sm:$0xf]
  %v57 = vld [vmem:[%s2 + $0xc] sm:$0xf]
  %v58 = vld [vmem:[%s2 + $0x10] sm:$0xf]
  %v59 = vld [vmem:[%s2 + $0x14] sm:$0xf]
  %v60 = vld [vmem:[%s2 + $0x18] sm:$0xf]
  %v61 = vld [vmem:[%s2 + $0x1c] sm:$0xf]
  %v62 = vld [vmem:[%s2 + $0x20] sm:$0xf]
  %v63 = vld [vmem:[%s2 + $0x24] sm:$0xf]
  %v64 = vld [vmem:[%s2 + $0x28] sm:$0xf]
  %v65 = vld [vmem:[%s2 + $0x2c] sm:$0xf]
  %v66 = vld [vmem:[%s2 + $0x30] sm:$0xf]
  %v67 = vld [vmem:[%s2 + $0x34] sm:$0xf]
  %v68 = vld [vmem:[%s2 + $0x38] sm:$0xf]
  %v69 = vld [vmem:[%s2 + $0x3c] sm:$0xf]
  %v70 = vld [vmem:[%s2 + $0x40] sm:$0xf]
  %v71 = vld [vmem:[%s2 + $0x44] sm:$0xf]
  %v72 = vld [vmem:[%s2 + $0x48] sm:$0xf]
  %v73 = vld [vmem:[%s2 + $0x4c] sm:$0xf]
  %v74 = vld [vmem:[%s2 + $0x50] sm:$0xf]
  %v75 = vld [vmem:[%s2 + $0x54] sm:$0xf]
  %v76 = vld [vmem:[%s2 + $0x58] sm:$0xf]
  %v77 = vld [vmem:[%s2 + $0x5c] sm:$0xf]
  %v78 = vld [vmem:[%s2 + $0x60] sm:$0xf]
  %v79 = vld [vmem:[%s2 + $0x64] sm:$0xf]
  %v80 = vld [vmem:[%s2 + $0x68] sm:$0xf]
  %v81 = vld [vmem:[%s2 + $0x6c] sm:$0xf]
  %v82 = vld [vmem:[%s2 + $0x70] sm:$0xf]
  %v83 = vld [vmem:[%s2 + $0x74] sm:$0xf]
  %v84 = vld [vmem:[%s2 + $0x78] sm:$0xf]
  %v85 = vld [vmem:[%s2 + $0x7c] sm:$0xf]
  %v86 = vld [vmem:[%s3] sm:$0x1]
  %v88 = vlaneseq
  %v89 = vshrl.u32 %v88, 7
  %v90 = vsub.s32 0, %v89
  %v91 = vrot.slane %v86, %v90
  %v125 = vunpack.c.l.b16 %v54
  %v126 = vunpack.c.l.b16 %v55
  %v127 = vunpack.c.l.b16 %v56
  %v128 = vunpack.c.l.b16 %v57
  %v129 = vunpack.c.l.b16 %v58
  %v130 = vunpack.c.l.b16 %v59
  %v131 = vunpack.c.l.b16 %v60
  %v132 = vunpack.c.l.b16 %v61
  %v133 = vunpack.c.l.b16 %v62
  %v134 = vunpack.c.l.b16 %v63
  %v135 = vunpack.c.l.b16 %v64
  %v136 = vunpack.c.l.b16 %v65
  %v137 = vunpack.c.l.b16 %v66
  %v138 = vunpack.c.l.b16 %v67
  %v139 = vunpack.c.l.b16 %v68
  %v140 = vunpack.c.l.b16 %v69
  %v141 = vunpack.c.l.b16 %v70
  %v142 = vunpack.c.l.b16 %v71
  %v143 = vunpack.c.l.b16 %v72
  %v144 = vunpack.c.l.b16 %v73
  %v145 = vunpack.c.l.b16 %v74
  %v146 = vunpack.c.l.b16 %v75
  %v147 = vunpack.c.l.b16 %v76
  %v148 = vunpack.c.l.b16 %v77
  %v149 = vunpack.c.l.b16 %v78
  %v150 = vunpack.c.l.b16 %v79
  %v151 = vunpack.c.l.b16 %v80
  %v152 = vunpack.c.l.b16 %v81
  %v153 = vunpack.c.l.b16 %v82
  %v154 = vunpack.c.l.b16 %v83
  %v155 = vunpack.c.l.b16 %v84
  %v156 = vunpack.c.l.b16 %v85
  %v157 = vpack.c.b16 %v126, %v125
  %v158 = vpack.c.b16 %v128, %v127
  %v159 = vpack.c.b16 %v130, %v129
  %v160 = vpack.c.b16 %v132, %v131
  %v161 = vpack.c.b16 %v134, %v133
  %v162 = vpack.c.b16 %v136, %v135
  %v163 = vpack.c.b16 %v138, %v137
  %v164 = vpack.c.b16 %v140, %v139
  %v165 = vpack.c.b16 %v142, %v141
  %v166 = vpack.c.b16 %v144, %v143
  %v167 = vpack.c.b16 %v146, %v145
  %v168 = vpack.c.b16 %v148, %v147
  %v169 = vpack.c.b16 %v150, %v149
  %v170 = vpack.c.b16 %v152, %v151
  %v171 = vpack.c.b16 %v154, %v153
  %v172 = vpack.c.b16 %v156, %v155
  %189 = vmatprep.subr.bf16.mxu0 0
  %190 = vmatpush1.bf16.msra.mxu0 %v157
  %191 = vmatprep.subr.bf16.mxu0 0
  %192 = vmatpush1.bf16.msra.mxu0 %v158
  %193 = vmatprep.subr.bf16.mxu0 0
  %194 = vmatpush1.bf16.msra.mxu0 %v159
  %195 = vmatprep.subr.bf16.mxu0 0
  %196 = vmatpush1.bf16.msra.mxu0 %v160
  %197 = vmatprep.subr.bf16.mxu0 0
  %198 = vmatpush1.bf16.msra.mxu0 %v161
  %199 = vmatprep.subr.bf16.mxu0 0
  %200 = vmatpush1.bf16.msra.mxu0 %v162
  %201 = vmatprep.subr.bf16.mxu0 0
  %202 = vmatpush1.bf16.msra.mxu0 %v163
  %203 = vmatprep.subr.bf16.mxu0 0
  %204 = vmatpush1.bf16.msra.mxu0 %v164
  %205 = vmatprep.subr.bf16.mxu0 0
  %206 = vmatpush1.bf16.msra.mxu0 %v165
  %207 = vmatprep.subr.bf16.mxu0 0
  %208 = vmatpush1.bf16.msra.mxu0 %v166
  %209 = vmatprep.subr.bf16.mxu0 0
  %210 = vmatpush1.bf16.msra.mxu0 %v167
  %211 = vmatprep.subr.bf16.mxu0 0
  %212 = vmatpush1.bf16.msra.mxu0 %v168
  %213 = vmatprep.subr.bf16.mxu0 0
  %214 = vmatpush1.bf16.msra.mxu0 %v169
  %215 = vmatprep.subr.bf16.mxu0 0
  %216 = vmatpush1.bf16.msra.mxu0 %v170
  %217 = vmatprep.subr.bf16.mxu0 0
  %218 = vmatpush1.bf16.msra.mxu0 %v171
  %219 = vmatprep.subr.bf16.mxu0 0
  %220 = vmatpush1.bf16.msra.mxu0 %v172
  %221 = vmatprep.mubr.bf16.mxu0 %v53
  %222 = vmatmul.mubr.bf16.gmra.mrb[0].mxu0 %v52
  %v223 = vpop.f32.mrb[0].mxu0
  %v224 = vadd.f32 %v91, %v223
  %v225 = vpop.f32.mrb[0].mxu0
  %v226 = vpop.f32.mrb[0].mxu0
  %v227 = vadd.f32 %v91, %v226
  %v228 = vpop.f32.mrb[0].mxu0
  %229 = vdwg.mxu0
  %v230 = vld [vmem:[%s1] sm:$0xff]
  %v231 = vld [vmem:[%s1 + $0x8] sm:$0xff]
  %v232 = vadd.f32 %v230, %v224
  %v233 = vadd.f32 %v231, %v227
  %vm234 = vcmask 261120
  %v235 = vsel %vm234, %v232, 0.0
  %236 = vadd.xlane.f32.xlu0 %v235
  %v237 = vpop.xlane.xlu0 %236
  %v238 = vsel %vm234, %v233, 0.0
  %239 = vadd.xlane.f32.xlu0 %v238
  %v240 = vpop.xlane.xlu0 %239
  %v241 = vrcp.pop 32.0
  %v242 = vmul.f32 %v237, %v241
  %v243 = vmul.f32 %v240, %v241
  %v244 = vsub.f32 %v232, %v242
  %v245 = vsub.f32 %v233, %v243
  %v246 = vmul.f32 %v244, %v244
  %v247 = vmul.f32 %v245, %v245
  %v248 = vsel %vm234, %v246, 0.0
  %249 = vadd.xlane.f32.xlu0 %v248
  %v250 = vpop.xlane.xlu0 %249
  %v251 = vsel %vm234, %v247, 0.0
  %252 = vadd.xlane.f32.xlu0 %v251
  %v253 = vpop.xlane.xlu0 %252
  %v254 = vmul.f32 %v250, %v241
  %v255 = vmul.f32 %v253, %v241
  %v256 = vadd.f32 %v254, 1e-05
  %v257 = vadd.f32 %v255, 1e-05
  %v258 = vrsqrt.pop %v256
  %v259 = vrsqrt.pop %v257
  %v260 = vmul.f32 %v244, %v258
  %v261 = vmul.f32 %v245, %v259
  %v262 = vld [vmem:[%s4] sm:$0x1]
  %v264 = vlaneseq
  %v265 = vshrl.u32 %v264, 7
  %v266 = vsub.s32 0, %v265
  %v267 = vrot.slane %v262, %v266
  %v269 = vmul.f32 %v260, %v267
  %v270 = vmul.f32 %v261, %v267
  %v271 = vld [vmem:[%s5] sm:$0x1]
  %v273 = vlaneseq
  %v274 = vshrl.u32 %v273, 7
  %v275 = vsub.s32 0, %v274
  %v276 = vrot.slane %v271, %v275
  %v278 = vadd.f32 %v269, %v276
  %v279 = vadd.f32 %v270, %v276
  %v280 = vpack.c.bf16 %v279, %v278
  %v281 = vld [vmem:[%s6] sm:$0xf]
  %v282 = vld [vmem:[%s6 + $0x4] sm:$0xf]
  %v283 = vld [vmem:[%s6 + $0x8] sm:$0xf]
  %v284 = vld [vmem:[%s6 + $0xc] sm:$0xf]
  %v285 = vld [vmem:[%s7] sm:$0x1]
  %v287 = vlaneseq
  %v288 = vshrl.u32 %v287, 7
  %v289 = vsub.s32 0, %v288
  %v290 = vrot.slane %v285, %v289
  %v296 = vunpack.c.l.b16 %v281
  %v297 = vunpack.c.l.b16 %v282
  %v298 = vunpack.c.l.b16 %v283
  %v299 = vunpack.c.l.b16 %v284
  %v300 = vpack.c.b16 %v297, %v296
  %v301 = vpack.c.b16 %v299, %v298
  %v305 = vsel %vm234, %v280, 0
  %307 = vmatprep.subr.bf16.mxu0 0
  %308 = vmatpush1.bf16.msra.mxu0 %v300
  %309 = vmatprep.subr.bf16.mxu0 0
  %310 = vmatpush1.bf16.msra.mxu0 %v301
  %311 = vmatprep.subr.bf16.mxu0 0
  %312 = vmatpush1.bf16.msra.mxu0 0
  %313 = vmatprep.subr.bf16.mxu0 0
  %314 = vmatpush1.bf16.msra.mxu0 0
  %315 = vmatprep.subr.bf16.mxu0 0
  %316 = vmatpush1.bf16.msra.mxu0 0
  %317 = vmatprep.subr.bf16.mxu0 0
  %318 = vmatpush1.bf16.msra.mxu0 0
  %319 = vmatprep.subr.bf16.mxu0 0
  %320 = vmatpush1.bf16.msra.mxu0 0
  %321 = vmatprep.subr.bf16.mxu0 0
  %322 = vmatpush1.bf16.msra.mxu0 0
  %323 = vmatprep.subr.bf16.mxu0 0
  %324 = vmatpush1.bf16.msra.mxu0 0
  %325 = vmatprep.subr.bf16.mxu0 0
  %326 = vmatpush1.bf16.msra.mxu0 0
  %327 = vmatprep.subr.bf16.mxu0 0
  %328 = vmatpush1.bf16.msra.mxu0 0
  %329 = vmatprep.subr.bf16.mxu0 0
  %330 = vmatpush1.bf16.msra.mxu0 0
  %331 = vmatprep.subr.bf16.mxu0 0
  %332 = vmatpush1.bf16.msra.mxu0 0
  %333 = vmatprep.subr.bf16.mxu0 0
  %334 = vmatpush1.bf16.msra.mxu0 0
  %335 = vmatprep.subr.bf16.mxu0 0
  %336 = vmatpush1.bf16.msra.mxu0 0
  %337 = vmatprep.subr.bf16.mxu0 0
  %338 = vmatpush1.bf16.msra.mxu0 0
  %339 = vmatprep.mubr.bf16.mxu0 0
  %340 = vmatmul.mubr.bf16.gmra.mrb[0].mxu0 %v305
  %v341 = vpop.f32.mrb[0].mxu0
  %v342 = vadd.f32 %v290, %v341
  %v343 = vpop.f32.mrb[0].mxu0
  %v344 = vpop.f32.mrb[0].mxu0
  %v345 = vadd.f32 %v290, %v344
  %v346 = vpop.f32.mrb[0].mxu0
  %347 = vdwg.mxu0
  %v348 = vmax.f32 %v342, 0.0
  %v349 = vmax.f32 %v345, 0.0
  %v350 = vpack.c.bf16 %v349, %v348
  %v351 = vld [vmem:[%s8] sm:$0xf]
  %v352 = vld [vmem:[%s8 + $0x4] sm:$0xf]
  %v353 = vld [vmem:[%s8 + $0x8] sm:$0xf]
  %v354 = vld [vmem:[%s8 + $0xc] sm:$0xf]
  %v355 = vld [vmem:[%s9] sm:$0x1]
  %v357 = vlaneseq
  %v358 = vshrl.u32 %v357, 7
  %v359 = vsub.s32 0, %v358
  %v360 = vrot.slane %v355, %v359
  %v366 = vunpack.c.l.b16 %v351
  %v367 = vunpack.c.l.b16 %v352
  %v368 = vunpack.c.l.b16 %v353
  %v369 = vunpack.c.l.b16 %v354
  %v370 = vpack.c.b16 %v367, %v366
  %v371 = vpack.c.b16 %v369, %v368
  %v375 = vsel %vm234, %v350, 0
  %377 = vmatprep.subr.bf16.mxu0 0
  %378 = vmatpush1.bf16.msra.mxu0 %v370
  %379 = vmatprep.subr.bf16.mxu0 0
  %380 = vmatpush1.bf16.msra.mxu0 %v371
  %381 = vmatprep.subr.bf16.mxu0 0
  %382 = vmatpush1.bf16.msra.mxu0 0
  %383 = vmatprep.subr.bf16.mxu0 0
  %384 = vmatpush1.bf16.msra.mxu0 0
  %385 = vmatprep.subr.bf16.mxu0 0
  %386 = vmatpush1.bf16.msra.mxu0 0
  %387 = vmatprep.subr.bf16.mxu0 0
  %388 = vmatpush1.bf16.msra.mxu0 0
  %389 = vmatprep.subr.bf16.mxu0 0
  %390 = vmatpush1.bf16.msra.mxu0 0
  %391 = vmatprep.subr.bf16.mxu0 0
  %392 = vmatpush1.bf16.msra.mxu0 0
  %393 = vmatprep.subr.bf16.mxu0 0
  %394 = vmatpush1.bf16.msra.mxu0 0
  %395 = vmatprep.subr.bf16.mxu0 0
  %396 = vmatpush1.bf16.msra.mxu0 0
  %397 = vmatprep.subr.bf16.mxu0 0
  %398 = vmatpush1.bf16.msra.mxu0 0
  %399 = vmatprep.subr.bf16.mxu0 0
  %400 = vmatpush1.bf16.msra.mxu0 0
  %401 = vmatprep.subr.bf16.mxu0 0
  %402 = vmatpush1.bf16.msra.mxu0 0
  %403 = vmatprep.subr.bf16.mxu0 0
  %404 = vmatpush1.bf16.msra.mxu0 0
  %405 = vmatprep.subr.bf16.mxu0 0
  %406 = vmatpush1.bf16.msra.mxu0 0
  %407 = vmatprep.subr.bf16.mxu0 0
  %408 = vmatpush1.bf16.msra.mxu0 0
  %409 = vmatprep.mubr.bf16.mxu0 0
  %410 = vmatmul.mubr.bf16.gmra.mrb[0].mxu0 %v375
  %v411 = vpop.f32.mrb[0].mxu0
  %v412 = vadd.f32 %v360, %v411
  %v413 = vpop.f32.mrb[0].mxu0
  %v414 = vpop.f32.mrb[0].mxu0
  %v415 = vadd.f32 %v360, %v414
  %v416 = vpop.f32.mrb[0].mxu0
  %417 = vdwg.mxu0
  %v418 = vmax.f32 %v412, 0.0
  %v419 = vmax.f32 %v415, 0.0
  %v420 = vpack.c.bf16 %v419, %v418
  %v421 = vld [vmem:[%s10] sm:$0xf]
  %v422 = vld [vmem:[%s10 + $0x4] sm:$0xf]
  %v423 = vld [vmem:[%s10 + $0x8] sm:$0xf]
  %v424 = vld [vmem:[%s10 + $0xc] sm:$0xf]
  %v425 = vld [vmem:[%s11] sm:$0x1]
  %v427 = vlaneseq
  %v428 = vshrl.u32 %v427, 7
  %v429 = vsub.s32 0, %v428
  %v430 = vrot.slane %v425, %v429
  %v436 = vunpack.c.l.b16 %v421
  %v437 = vunpack.c.l.b16 %v422
  %v438 = vunpack.c.l.b16 %v423
  %v439 = vunpack.c.l.b16 %v424
  %v440 = vpack.c.b16 %v437, %v436
  %v441 = vpack.c.b16 %v439, %v438
  %v445 = vsel %vm234, %v420, 0
  %447 = vmatprep.subr.bf16.mxu0 0
  %448 = vmatpush1.bf16.msra.mxu0 %v440
  %449 = vmatprep.subr.bf16.mxu0 0
  %450 = vmatpush1.bf16.msra.mxu0 %v441
  %451 = vmatprep.subr.bf16.mxu0 0
  %452 = vmatpush1.bf16.msra.mxu0 0
  %453 = vmatprep.subr.bf16.mxu0 0
  %454 = vmatpush1.bf16.msra.mxu0 0
  %455 = vmatprep.subr.bf16.mxu0 0
  %456 = vmatpush1.bf16.msra.mxu0 0
  %457 = vmatprep.subr.bf16.mxu0 0
  %458 = vmatpush1.bf16.msra.mxu0 0
  %459 = vmatprep.subr.bf16.mxu0 0
  %460 = vmatpush1.bf16.msra.mxu0 0
  %461 = vmatprep.subr.bf16.mxu0 0
  %462 = vmatpush1.bf16.msra.mxu0 0
  %463 = vmatprep.subr.bf16.mxu0 0
  %464 = vmatpush1.bf16.msra.mxu0 0
  %465 = vmatprep.subr.bf16.mxu0 0
  %466 = vmatpush1.bf16.msra.mxu0 0
  %467 = vmatprep.subr.bf16.mxu0 0
  %468 = vmatpush1.bf16.msra.mxu0 0
  %469 = vmatprep.subr.bf16.mxu0 0
  %470 = vmatpush1.bf16.msra.mxu0 0
  %471 = vmatprep.subr.bf16.mxu0 0
  %472 = vmatpush1.bf16.msra.mxu0 0
  %473 = vmatprep.subr.bf16.mxu0 0
  %474 = vmatpush1.bf16.msra.mxu0 0
  %475 = vmatprep.subr.bf16.mxu0 0
  %476 = vmatpush1.bf16.msra.mxu0 0
  %477 = vmatprep.subr.bf16.mxu0 0
  %478 = vmatpush1.bf16.msra.mxu0 0
  %479 = vmatprep.mubr.bf16.mxu0 0
  %480 = vmatmul.mubr.bf16.gmra.mrb[0].mxu0 %v445
  %v481 = vpop.f32.mrb[0].mxu0
  %v482 = vadd.f32 %v430, %v481
  %v483 = vpop.f32.mrb[0].mxu0
  %v484 = vpop.f32.mrb[0].mxu0
  %v485 = vadd.f32 %v430, %v484
  %v486 = vpop.f32.mrb[0].mxu0
  %487 = vdwg.mxu0
  %v488 = vadd.f32 %v482, %v278
  %v489 = vadd.f32 %v485, %v279
  %v490 = vsel %vm234, %v488, 0.0
  %491 = vadd.xlane.f32.xlu0 %v490
  %v492 = vpop.xlane.xlu0 %491
  %v493 = vsel %vm234, %v489, 0.0
  %494 = vadd.xlane.f32.xlu0 %v493
  %v495 = vpop.xlane.xlu0 %494
  %v496 = vmul.f32 %v492, %v241
  %v497 = vmul.f32 %v495, %v241
  %v498 = vsub.f32 %v488, %v496
  %v499 = vsub.f32 %v489, %v497
  %v500 = vmul.f32 %v498, %v498
  %v501 = vmul.f32 %v499, %v499
  %v502 = vsel %vm234, %v500, 0.0
  %503 = vadd.xlane.f32.xlu0 %v502
  %v504 = vpop.xlane.xlu0 %503
  %v505 = vsel %vm234, %v501, 0.0
  %506 = vadd.xlane.f32.xlu0 %v505
  %v507 = vpop.xlane.xlu0 %506
  %v508 = vmul.f32 %v504, %v241
  %v509 = vmul.f32 %v507, %v241
  %v510 = vadd.f32 %v508, 1e-05
  %v511 = vadd.f32 %v509, 1e-05
  %v512 = vrsqrt.pop %v510
  %v513 = vrsqrt.pop %v511
  %v514 = vmul.f32 %v498, %v512
  %v515 = vmul.f32 %v499, %v513
  %v516 = vld [vmem:[%s12] sm:$0x1]
  %v518 = vlaneseq
  %v519 = vshrl.u32 %v518, 7
  %v520 = vsub.s32 0, %v519
  %v521 = vrot.slane %v516, %v520
  %v523 = vmul.f32 %v514, %v521
  %v524 = vmul.f32 %v515, %v521
  %v525 = vld [vmem:[%s13] sm:$0x1]
  %v527 = vlaneseq
  %v528 = vshrl.u32 %v527, 7
  %v529 = vsub.s32 0, %v528
  %v530 = vrot.slane %v525, %v529
  %v532 = vadd.f32 %v523, %v530
  %v533 = vadd.f32 %v524, %v530
  %534 = vst.msk [vmem:[%s14] sm:$0xff] %vm234, %v532
  %535 = vst.msk [vmem:[%s14 + $0x8] sm:$0xff] %vm234, %v533
  // Predicated region
  $region58: #{structure_update_forward.10} parent=0 // pred_check
    _
  $region59: #{structure_update_forward.10} parent=0 // pred_check_branch
    %537 = sbr.rel (0) target = $region61
  $region60: #{structure_update_forward.10} parent=0 // pred_region
    _
  $region61: #{structure_update_forward.10} parent=0 // pred_fallthru
    _
  // Predicated region
  $region62: #{structure_update_forward.10} parent=0 // pred_check
    _
  $region63: #{structure_update_forward.10} parent=0 // pred_check_branch
    %539 = sbr.rel (0) target = $region65
  $region64: #{structure_update_forward.10} parent=0 // pred_region
    _
  $region65: #{structure_update_forward.10} parent=0 // pred_fallthru
    _

// kernel: structure_update_forward.15
$region0: #{structure_update_forward.15}
  #allocation0 [shape = 'u32[]', space=smem, size = 0x4, offset = 0x4, fixed_abs, tag = 'smem constant byte address 0x4 - core index']
  #allocation1 [shape = 'u32[144,128]{1,0:T(1,128)}', space=vmem, size = 0x12000, scoped, tag = 'internal scratch']
  %s0 = inlined_call_operand.vmem [shape: f32[16,256], index: 0, kind: input, shape index: {}]
  %s1 = inlined_call_operand.vmem [shape: f32[16,32], index: 1, kind: input, shape index: {}]
  %s2 = inlined_call_operand.vmem [shape: bf16[256,32], index: 2, kind: input, shape index: {}]
  %s3 = inlined_call_operand.vmem [shape: f32[1,32], index: 3, kind: input, shape index: {}]
  %s4 = inlined_call_operand.vmem [shape: f32[1,32], index: 4, kind: input, shape index: {}]
  %s5 = inlined_call_operand.vmem [shape: f32[1,32], index: 5, kind: input, shape index: {}]
  %s6 = inlined_call_operand.vmem [shape: bf16[32,32], index: 6, kind: input, shape index: {}]
  %s7 = inlined_call_operand.vmem [shape: f32[1,32], index: 7, kind: input, shape index: {}]
  %s8 = inlined_call_operand.vmem [shape: bf16[32,32], index: 8, kind: input, shape index: {}]
  %s9 = inlined_call_operand.vmem [shape: f32[1,32], index: 9, kind: input, shape index: {}]
  %s10 = inlined_call_operand.vmem [shape: bf16[32,32], index: 10, kind: input, shape index: {}]
  %s11 = inlined_call_operand.vmem [shape: f32[1,32], index: 11, kind: input, shape index: {}]
  %s12 = inlined_call_operand.vmem [shape: f32[1,32], index: 12, kind: input, shape index: {}]
  %s13 = inlined_call_operand.vmem [shape: f32[1,32], index: 13, kind: input, shape index: {}]
  %s14 = inlined_call_operand.hbm [shape: f32[16,32], index: 14, kind: output, shape index: {}]
  %s15 = sld [smem:[#allocation0]]
  $region66: #{structure_update_forward.15} parent=0
    _
  %s17 = ssub.s32 1, %s15
  %s18 = scalar_select 0, %s17, %s15
  $region1: #{structure_update_forward.15} parent=0
    #allocation2 [shape = 'u8[8192]{0}', space=vmem, size = 0x2000, scoped, tag = 'output window, operand 0, single buffered']
    #allocation3 [shape = 's32[1]{0}', space=sflag, size = 0x4, scoped, tag = 'scoped memory for structure_update_forward.15']
    %19 = vsyncpa [#allocation3], 0
    // Predicated region
    $region2: #{structure_update_forward.15} parent=1 // pred_check
      _
    $region3: #{structure_update_forward.15} parent=1 // pred_check_branch
      %21 = sbr.rel (0) target = $region5
    $region4: #{structure_update_forward.15} parent=1 // pred_region
      _
    $region5: #{structure_update_forward.15} parent=1 // pred_fallthru
      _
    // Predicated region
    $region6: #{structure_update_forward.15} parent=1 // pred_check
      _
    $region7: #{structure_update_forward.15} parent=1 // pred_check_branch
      %23 = sbr.rel (0) target = $region9
    $region8: #{structure_update_forward.15} parent=1 // pred_region
      _
    $region9: #{structure_update_forward.15} parent=1 // pred_fallthru
      _
    // Predicated region
    $region10: #{structure_update_forward.15} parent=1 // pred_check
      _
    $region11: #{structure_update_forward.15} parent=1 // pred_check_branch
      %25 = sbr.rel (0) target = $region13
    $region12: #{structure_update_forward.15} parent=1 // pred_region
      _
    $region13: #{structure_update_forward.15} parent=1 // pred_fallthru
      _
    // Predicated region
    $region14: #{structure_update_forward.15} parent=1 // pred_check
      _
    $region15: #{structure_update_forward.15} parent=1 // pred_check_branch
      %27 = sbr.rel (0) target = $region17
    $region16: #{structure_update_forward.15} parent=1 // pred_region
      _
    $region17: #{structure_update_forward.15} parent=1 // pred_fallthru
      _
    // Predicated region
    $region18: #{structure_update_forward.15} parent=1 // pred_check
      _
    $region19: #{structure_update_forward.15} parent=1 // pred_check_branch
      %29 = sbr.rel (0) target = $region21
    $region20: #{structure_update_forward.15} parent=1 // pred_region
      _
    $region21: #{structure_update_forward.15} parent=1 // pred_fallthru
      _
    // Predicated region
    $region22: #{structure_update_forward.15} parent=1 // pred_check
      _
    $region23: #{structure_update_forward.15} parent=1 // pred_check_branch
      %31 = sbr.rel (0) target = $region25
    $region24: #{structure_update_forward.15} parent=1 // pred_region
      _
    $region25: #{structure_update_forward.15} parent=1 // pred_fallthru
      _
    // Predicated region
    $region26: #{structure_update_forward.15} parent=1 // pred_check
      _
    $region27: #{structure_update_forward.15} parent=1 // pred_check_branch
      %33 = sbr.rel (0) target = $region29
    $region28: #{structure_update_forward.15} parent=1 // pred_region
      _
    $region29: #{structure_update_forward.15} parent=1 // pred_fallthru
      _
    // Predicated region
    $region30: #{structure_update_forward.15} parent=1 // pred_check
      _
    $region31: #{structure_update_forward.15} parent=1 // pred_check_branch
      %35 = sbr.rel (0) target = $region33
    $region32: #{structure_update_forward.15} parent=1 // pred_region
      _
    $region33: #{structure_update_forward.15} parent=1 // pred_fallthru
      _
    // Predicated region
    $region34: #{structure_update_forward.15} parent=1 // pred_check
      _
    $region35: #{structure_update_forward.15} parent=1 // pred_check_branch
      %37 = sbr.rel (0) target = $region37
    $region36: #{structure_update_forward.15} parent=1 // pred_region
      _
    $region37: #{structure_update_forward.15} parent=1 // pred_fallthru
      _
    // Predicated region
    $region38: #{structure_update_forward.15} parent=1 // pred_check
      _
    $region39: #{structure_update_forward.15} parent=1 // pred_check_branch
      %39 = sbr.rel (0) target = $region41
    $region40: #{structure_update_forward.15} parent=1 // pred_region
      _
    $region41: #{structure_update_forward.15} parent=1 // pred_fallthru
      _
    // Predicated region
    $region42: #{structure_update_forward.15} parent=1 // pred_check
      _
    $region43: #{structure_update_forward.15} parent=1 // pred_check_branch
      %41 = sbr.rel (0) target = $region45
    $region44: #{structure_update_forward.15} parent=1 // pred_region
      _
    $region45: #{structure_update_forward.15} parent=1 // pred_fallthru
      _
    // Predicated region
    $region46: #{structure_update_forward.15} parent=1 // pred_check
      _
    $region47: #{structure_update_forward.15} parent=1 // pred_check_branch
      %43 = sbr.rel (0) target = $region49
    $region48: #{structure_update_forward.15} parent=1 // pred_region
      _
    $region49: #{structure_update_forward.15} parent=1 // pred_fallthru
      _
    // Predicated region
    $region50: #{structure_update_forward.15} parent=1 // pred_check
      _
    $region51: #{structure_update_forward.15} parent=1 // pred_check_branch
      %45 = sbr.rel (0) target = $region53
    $region52: #{structure_update_forward.15} parent=1 // pred_region
      _
    $region53: #{structure_update_forward.15} parent=1 // pred_fallthru
      _
    // Predicated region
    $region54: #{structure_update_forward.15} parent=1 // pred_check
      _
    $region55: #{structure_update_forward.15} parent=1 // pred_check_branch
      %47 = sbr.rel (0) target = $region57
    $region56: #{structure_update_forward.15} parent=1 // pred_region
      _
    $region57: #{structure_update_forward.15} parent=1 // pred_fallthru
      _
    %v49 = vld [vmem:[%s0] sm:$0xff]
    %v50 = vld [vmem:[%s0 + $0x8] sm:$0xff]
    %v51 = vld [vmem:[%s0 + $0x10] sm:$0xff]
    %v52 = vld [vmem:[%s0 + $0x18] sm:$0xff]
    %v53 = vpack.c.bf16 %v51, %v49
    %v54 = vpack.c.bf16 %v52, %v50
    %v55 = vld [vmem:[%s2] sm:$0xf]
    %v56 = vld [vmem:[%s2 + $0x4] sm:$0xf]
    %v57 = vld [vmem:[%s2 + $0x8] sm:$0xf]
    %v58 = vld [vmem:[%s2 + $0xc] sm:$0xf]
    %v59 = vld [vmem:[%s2 + $0x10] sm:$0xf]
    %v60 = vld [vmem:[%s2 + $0x14] sm:$0xf]
    %v61 = vld [vmem:[%s2 + $0x18] sm:$0xf]
    %v62 = vld [vmem:[%s2 + $0x1c] sm:$0xf]
    %v63 = vld [vmem:[%s2 + $0x20] sm:$0xf]
    %v64 = vld [vmem:[%s2 + $0x24] sm:$0xf]
    %v65 = vld [vmem:[%s2 + $0x28] sm:$0xf]
    %v66 = vld [vmem:[%s2 + $0x2c] sm:$0xf]
    %v67 = vld [vmem:[%s2 + $0x30] sm:$0xf]
    %v68 = vld [vmem:[%s2 + $0x34] sm:$0xf]
    %v69 = vld [vmem:[%s2 + $0x38] sm:$0xf]
    %v70 = vld [vmem:[%s2 + $0x3c] sm:$0xf]
    %v71 = vld [vmem:[%s2 + $0x40] sm:$0xf]
    %v72 = vld [vmem:[%s2 + $0x44] sm:$0xf]
    %v73 = vld [vmem:[%s2 + $0x48] sm:$0xf]
    %v74 = vld [vmem:[%s2 + $0x4c] sm:$0xf]
    %v75 = vld [vmem:[%s2 + $0x50] sm:$0xf]
    %v76 = vld [vmem:[%s2 + $0x54] sm:$0xf]
    %v77 = vld [vmem:[%s2 + $0x58] sm:$0xf]
    %v78 = vld [vmem:[%s2 + $0x5c] sm:$0xf]
    %v79 = vld [vmem:[%s2 + $0x60] sm:$0xf]
    %v80 = vld [vmem:[%s2 + $0x64] sm:$0xf]
    %v81 = vld [vmem:[%s2 + $0x68] sm:$0xf]
    %v82 = vld [vmem:[%s2 + $0x6c] sm:$0xf]
    %v83 = vld [vmem:[%s2 + $0x70] sm:$0xf]
    %v84 = vld [vmem:[%s2 + $0x74] sm:$0xf]
    %v85 = vld [vmem:[%s2 + $0x78] sm:$0xf]
    %v86 = vld [vmem:[%s2 + $0x7c] sm:$0xf]
    %v87 = vld [vmem:[%s3] sm:$0x1]
    %v89 = vlaneseq
    %v90 = vshrl.u32 %v89, 7
    %v91 = vsub.s32 0, %v90
    %v92 = vrot.slane %v87, %v91
    %v126 = vunpack.c.l.b16 %v55
    %v127 = vunpack.c.l.b16 %v56
    %v128 = vunpack.c.l.b16 %v57
    %v129 = vunpack.c.l.b16 %v58
    %v130 = vunpack.c.l.b16 %v59
    %v131 = vunpack.c.l.b16 %v60
    %v132 = vunpack.c.l.b16 %v61
    %v133 = vunpack.c.l.b16 %v62
    %v134 = vunpack.c.l.b16 %v63
    %v135 = vunpack.c.l.b16 %v64
    %v136 = vunpack.c.l.b16 %v65
    %v137 = vunpack.c.l.b16 %v66
    %v138 = vunpack.c.l.b16 %v67
    %v139 = vunpack.c.l.b16 %v68
    %v140 = vunpack.c.l.b16 %v69
    %v141 = vunpack.c.l.b16 %v70
    %v142 = vunpack.c.l.b16 %v71
    %v143 = vunpack.c.l.b16 %v72
    %v144 = vunpack.c.l.b16 %v73
    %v145 = vunpack.c.l.b16 %v74
    %v146 = vunpack.c.l.b16 %v75
    %v147 = vunpack.c.l.b16 %v76
    %v148 = vunpack.c.l.b16 %v77
    %v149 = vunpack.c.l.b16 %v78
    %v150 = vunpack.c.l.b16 %v79
    %v151 = vunpack.c.l.b16 %v80
    %v152 = vunpack.c.l.b16 %v81
    %v153 = vunpack.c.l.b16 %v82
    %v154 = vunpack.c.l.b16 %v83
    %v155 = vunpack.c.l.b16 %v84
    %v156 = vunpack.c.l.b16 %v85
    %v157 = vunpack.c.l.b16 %v86
    %v158 = vpack.c.b16 %v127, %v126
    %v159 = vpack.c.b16 %v129, %v128
    %v160 = vpack.c.b16 %v131, %v130
    %v161 = vpack.c.b16 %v133, %v132
    %v162 = vpack.c.b16 %v135, %v134
    %v163 = vpack.c.b16 %v137, %v136
    %v164 = vpack.c.b16 %v139, %v138
    %v165 = vpack.c.b16 %v141, %v140
    %v166 = vpack.c.b16 %v143, %v142
    %v167 = vpack.c.b16 %v145, %v144
    %v168 = vpack.c.b16 %v147, %v146
    %v169 = vpack.c.b16 %v149, %v148
    %v170 = vpack.c.b16 %v151, %v150
    %v171 = vpack.c.b16 %v153, %v152
    %v172 = vpack.c.b16 %v155, %v154
    %v173 = vpack.c.b16 %v157, %v156
    %190 = vmatprep.subr.bf16.mxu0 0
    %191 = vmatpush1.bf16.msra.mxu0 %v158
    %192 = vmatprep.subr.bf16.mxu0 0
    %193 = vmatpush1.bf16.msra.mxu0 %v159
    %194 = vmatprep.subr.bf16.mxu0 0
    %195 = vmatpush1.bf16.msra.mxu0 %v160
    %196 = vmatprep.subr.bf16.mxu0 0
    %197 = vmatpush1.bf16.msra.mxu0 %v161
    %198 = vmatprep.subr.bf16.mxu0 0
    %199 = vmatpush1.bf16.msra.mxu0 %v162
    %200 = vmatprep.subr.bf16.mxu0 0
    %201 = vmatpush1.bf16.msra.mxu0 %v163
    %202 = vmatprep.subr.bf16.mxu0 0
    %203 = vmatpush1.bf16.msra.mxu0 %v164
    %204 = vmatprep.subr.bf16.mxu0 0
    %205 = vmatpush1.bf16.msra.mxu0 %v165
    %206 = vmatprep.subr.bf16.mxu0 0
    %207 = vmatpush1.bf16.msra.mxu0 %v166
    %208 = vmatprep.subr.bf16.mxu0 0
    %209 = vmatpush1.bf16.msra.mxu0 %v167
    %210 = vmatprep.subr.bf16.mxu0 0
    %211 = vmatpush1.bf16.msra.mxu0 %v168
    %212 = vmatprep.subr.bf16.mxu0 0
    %213 = vmatpush1.bf16.msra.mxu0 %v169
    %214 = vmatprep.subr.bf16.mxu0 0
    %215 = vmatpush1.bf16.msra.mxu0 %v170
    %216 = vmatprep.subr.bf16.mxu0 0
    %217 = vmatpush1.bf16.msra.mxu0 %v171
    %218 = vmatprep.subr.bf16.mxu0 0
    %219 = vmatpush1.bf16.msra.mxu0 %v172
    %220 = vmatprep.subr.bf16.mxu0 0
    %221 = vmatpush1.bf16.msra.mxu0 %v173
    %222 = vmatprep.mubr.bf16.mxu0 %v54
    %223 = vmatmul.mubr.bf16.gmra.mrb[0].mxu0 %v53
    %v224 = vpop.f32.mrb[0].mxu0
    %v225 = vadd.f32 %v92, %v224
    %v226 = vpop.f32.mrb[0].mxu0
    %v227 = vpop.f32.mrb[0].mxu0
    %v228 = vadd.f32 %v92, %v227
    %v229 = vpop.f32.mrb[0].mxu0
    %230 = vdwg.mxu0
    %v231 = vld [vmem:[%s1] sm:$0xff]
    %v232 = vld [vmem:[%s1 + $0x8] sm:$0xff]
    %v233 = vadd.f32 %v231, %v225
    %v234 = vadd.f32 %v232, %v228
    %vm235 = vcmask 261120
    %v236 = vsel %vm235, %v233, 0.0
    %237 = vadd.xlane.f32.xlu0 %v236
    %v238 = vpop.xlane.xlu0 %237
    %v239 = vsel %vm235, %v234, 0.0
    %240 = vadd.xlane.f32.xlu0 %v239
    %v241 = vpop.xlane.xlu0 %240
    %v242 = vrcp.pop 32.0
    %v243 = vmul.f32 %v238, %v242
    %v244 = vmul.f32 %v241, %v242
    %v245 = vsub.f32 %v233, %v243
    %v246 = vsub.f32 %v234, %v244
    %v247 = vmul.f32 %v245, %v245
    %v248 = vmul.f32 %v246, %v246
    %v249 = vsel %vm235, %v247, 0.0
    %250 = vadd.xlane.f32.xlu0 %v249
    %v251 = vpop.xlane.xlu0 %250
    %v252 = vsel %vm235, %v248, 0.0
    %253 = vadd.xlane.f32.xlu0 %v252
    %v254 = vpop.xlane.xlu0 %253
    %v255 = vmul.f32 %v251, %v242
    %v256 = vmul.f32 %v254, %v242
    %v257 = vadd.f32 %v255, 1e-05
    %v258 = vadd.f32 %v256, 1e-05
    %v259 = vrsqrt.pop %v257
    %v260 = vrsqrt.pop %v258
    %v261 = vmul.f32 %v245, %v259
    %v262 = vmul.f32 %v246, %v260
    %v263 = vld [vmem:[%s4] sm:$0x1]
    %v265 = vlaneseq
    %v266 = vshrl.u32 %v265, 7
    %v267 = vsub.s32 0, %v266
    %v268 = vrot.slane %v263, %v267
    %v270 = vmul.f32 %v261, %v268
    %v271 = vmul.f32 %v262, %v268
    %v272 = vld [vmem:[%s5] sm:$0x1]
    %v274 = vlaneseq
    %v275 = vshrl.u32 %v274, 7
    %v276 = vsub.s32 0, %v275
    %v277 = vrot.slane %v272, %v276
    %v279 = vadd.f32 %v270, %v277
    %v280 = vadd.f32 %v271, %v277
    %v281 = vpack.c.bf16 %v280, %v279
    %v282 = vld [vmem:[%s6] sm:$0xf]
    %v283 = vld [vmem:[%s6 + $0x4] sm:$0xf]
    %v284 = vld [vmem:[%s6 + $0x8] sm:$0xf]
    %v285 = vld [vmem:[%s6 + $0xc] sm:$0xf]
    %v286 = vld [vmem:[%s7] sm:$0x1]
    %v288 = vlaneseq
    %v289 = vshrl.u32 %v288, 7
    %v290 = vsub.s32 0, %v289
    %v291 = vrot.slane %v286, %v290
    %v297 = vunpack.c.l.b16 %v282
    %v298 = vunpack.c.l.b16 %v283
    %v299 = vunpack.c.l.b16 %v284
    %v300 = vunpack.c.l.b16 %v285
    %v301 = vpack.c.b16 %v298, %v297
    %v302 = vpack.c.b16 %v300, %v299
    %v306 = vsel %vm235, %v281, 0
    %308 = vmatprep.subr.bf16.mxu0 0
    %309 = vmatpush1.bf16.msra.mxu0 %v301
    %310 = vmatprep.subr.bf16.mxu0 0
    %311 = vmatpush1.bf16.msra.mxu0 %v302
    %312 = vmatprep.subr.bf16.mxu0 0
    %313 = vmatpush1.bf16.msra.mxu0 0
    %314 = vmatprep.subr.bf16.mxu0 0
    %315 = vmatpush1.bf16.msra.mxu0 0
    %316 = vmatprep.subr.bf16.mxu0 0
    %317 = vmatpush1.bf16.msra.mxu0 0
    %318 = vmatprep.subr.bf16.mxu0 0
    %319 = vmatpush1.bf16.msra.mxu0 0
    %320 = vmatprep.subr.bf16.mxu0 0
    %321 = vmatpush1.bf16.msra.mxu0 0
    %322 = vmatprep.subr.bf16.mxu0 0
    %323 = vmatpush1.bf16.msra.mxu0 0
    %324 = vmatprep.subr.bf16.mxu0 0
    %325 = vmatpush1.bf16.msra.mxu0 0
    %326 = vmatprep.subr.bf16.mxu0 0
    %327 = vmatpush1.bf16.msra.mxu0 0
    %328 = vmatprep.subr.bf16.mxu0 0
    %329 = vmatpush1.bf16.msra.mxu0 0
    %330 = vmatprep.subr.bf16.mxu0 0
    %331 = vmatpush1.bf16.msra.mxu0 0
    %332 = vmatprep.subr.bf16.mxu0 0
    %333 = vmatpush1.bf16.msra.mxu0 0
    %334 = vmatprep.subr.bf16.mxu0 0
    %335 = vmatpush1.bf16.msra.mxu0 0
    %336 = vmatprep.subr.bf16.mxu0 0
    %337 = vmatpush1.bf16.msra.mxu0 0
    %338 = vmatprep.subr.bf16.mxu0 0
    %339 = vmatpush1.bf16.msra.mxu0 0
    %340 = vmatprep.mubr.bf16.mxu0 0
    %341 = vmatmul.mubr.bf16.gmra.mrb[0].mxu0 %v306
    %v342 = vpop.f32.mrb[0].mxu0
    %v343 = vadd.f32 %v291, %v342
    %v344 = vpop.f32.mrb[0].mxu0
    %v345 = vpop.f32.mrb[0].mxu0
    %v346 = vadd.f32 %v291, %v345
    %v347 = vpop.f32.mrb[0].mxu0
    %348 = vdwg.mxu0
    %v349 = vmax.f32 %v343, 0.0
    %v350 = vmax.f32 %v346, 0.0
    %v351 = vpack.c.bf16 %v350, %v349
    %v352 = vld [vmem:[%s8] sm:$0xf]
    %v353 = vld [vmem:[%s8 + $0x4] sm:$0xf]
    %v354 = vld [vmem:[%s8 + $0x8] sm:$0xf]
    %v355 = vld [vmem:[%s8 + $0xc] sm:$0xf]
    %v356 = vld [vmem:[%s9] sm:$0x1]
    %v358 = vlaneseq
    %v359 = vshrl.u32 %v358, 7
    %v360 = vsub.s32 0, %v359
    %v361 = vrot.slane %v356, %v360
    %v367 = vunpack.c.l.b16 %v352
    %v368 = vunpack.c.l.b16 %v353
    %v369 = vunpack.c.l.b16 %v354
    %v370 = vunpack.c.l.b16 %v355
    %v371 = vpack.c.b16 %v368, %v367
    %v372 = vpack.c.b16 %v370, %v369
    %v376 = vsel %vm235, %v351, 0
    %378 = vmatprep.subr.bf16.mxu0 0
    %379 = vmatpush1.bf16.msra.mxu0 %v371
    %380 = vmatprep.subr.bf16.mxu0 0
    %381 = vmatpush1.bf16.msra.mxu0 %v372
    %382 = vmatprep.subr.bf16.mxu0 0
    %383 = vmatpush1.bf16.msra.mxu0 0
    %384 = vmatprep.subr.bf16.mxu0 0
    %385 = vmatpush1.bf16.msra.mxu0 0
    %386 = vmatprep.subr.bf16.mxu0 0
    %387 = vmatpush1.bf16.msra.mxu0 0
    %388 = vmatprep.subr.bf16.mxu0 0
    %389 = vmatpush1.bf16.msra.mxu0 0
    %390 = vmatprep.subr.bf16.mxu0 0
    %391 = vmatpush1.bf16.msra.mxu0 0
    %392 = vmatprep.subr.bf16.mxu0 0
    %393 = vmatpush1.bf16.msra.mxu0 0
    %394 = vmatprep.subr.bf16.mxu0 0
    %395 = vmatpush1.bf16.msra.mxu0 0
    %396 = vmatprep.subr.bf16.mxu0 0
    %397 = vmatpush1.bf16.msra.mxu0 0
    %398 = vmatprep.subr.bf16.mxu0 0
    %399 = vmatpush1.bf16.msra.mxu0 0
    %400 = vmatprep.subr.bf16.mxu0 0
    %401 = vmatpush1.bf16.msra.mxu0 0
    %402 = vmatprep.subr.bf16.mxu0 0
    %403 = vmatpush1.bf16.msra.mxu0 0
    %404 = vmatprep.subr.bf16.mxu0 0
    %405 = vmatpush1.bf16.msra.mxu0 0
    %406 = vmatprep.subr.bf16.mxu0 0
    %407 = vmatpush1.bf16.msra.mxu0 0
    %408 = vmatprep.subr.bf16.mxu0 0
    %409 = vmatpush1.bf16.msra.mxu0 0
    %410 = vmatprep.mubr.bf16.mxu0 0
    %411 = vmatmul.mubr.bf16.gmra.mrb[0].mxu0 %v376
    %v412 = vpop.f32.mrb[0].mxu0
    %v413 = vadd.f32 %v361, %v412
    %v414 = vpop.f32.mrb[0].mxu0
    %v415 = vpop.f32.mrb[0].mxu0
    %v416 = vadd.f32 %v361, %v415
    %v417 = vpop.f32.mrb[0].mxu0
    %418 = vdwg.mxu0
    %v419 = vmax.f32 %v413, 0.0
    %v420 = vmax.f32 %v416, 0.0
    %v421 = vpack.c.bf16 %v420, %v419
    %v422 = vld [vmem:[%s10] sm:$0xf]
    %v423 = vld [vmem:[%s10 + $0x4] sm:$0xf]
    %v424 = vld [vmem:[%s10 + $0x8] sm:$0xf]
    %v425 = vld [vmem:[%s10 + $0xc] sm:$0xf]
    %v426 = vld [vmem:[%s11] sm:$0x1]
    %v428 = vlaneseq
    %v429 = vshrl.u32 %v428, 7
    %v430 = vsub.s32 0, %v429
    %v431 = vrot.slane %v426, %v430
    %v437 = vunpack.c.l.b16 %v422
    %v438 = vunpack.c.l.b16 %v423
    %v439 = vunpack.c.l.b16 %v424
    %v440 = vunpack.c.l.b16 %v425
    %v441 = vpack.c.b16 %v438, %v437
    %v442 = vpack.c.b16 %v440, %v439
    %v446 = vsel %vm235, %v421, 0
    %448 = vmatprep.subr.bf16.mxu0 0
    %449 = vmatpush1.bf16.msra.mxu0 %v441
    %450 = vmatprep.subr.bf16.mxu0 0
    %451 = vmatpush1.bf16.msra.mxu0 %v442
    %452 = vmatprep.subr.bf16.mxu0 0
    %453 = vmatpush1.bf16.msra.mxu0 0
    %454 = vmatprep.subr.bf16.mxu0 0
    %455 = vmatpush1.bf16.msra.mxu0 0
    %456 = vmatprep.subr.bf16.mxu0 0
    %457 = vmatpush1.bf16.msra.mxu0 0
    %458 = vmatprep.subr.bf16.mxu0 0
    %459 = vmatpush1.bf16.msra.mxu0 0
    %460 = vmatprep.subr.bf16.mxu0 0
    %461 = vmatpush1.bf16.msra.mxu0 0
    %462 = vmatprep.subr.bf16.mxu0 0
    %463 = vmatpush1.bf16.msra.mxu0 0
    %464 = vmatprep.subr.bf16.mxu0 0
    %465 = vmatpush1.bf16.msra.mxu0 0
    %466 = vmatprep.subr.bf16.mxu0 0
    %467 = vmatpush1.bf16.msra.mxu0 0
    %468 = vmatprep.subr.bf16.mxu0 0
    %469 = vmatpush1.bf16.msra.mxu0 0
    %470 = vmatprep.subr.bf16.mxu0 0
    %471 = vmatpush1.bf16.msra.mxu0 0
    %472 = vmatprep.subr.bf16.mxu0 0
    %473 = vmatpush1.bf16.msra.mxu0 0
    %474 = vmatprep.subr.bf16.mxu0 0
    %475 = vmatpush1.bf16.msra.mxu0 0
    %476 = vmatprep.subr.bf16.mxu0 0
    %477 = vmatpush1.bf16.msra.mxu0 0
    %478 = vmatprep.subr.bf16.mxu0 0
    %479 = vmatpush1.bf16.msra.mxu0 0
    %480 = vmatprep.mubr.bf16.mxu0 0
    %481 = vmatmul.mubr.bf16.gmra.mrb[0].mxu0 %v446
    %v482 = vpop.f32.mrb[0].mxu0
    %v483 = vadd.f32 %v431, %v482
    %v484 = vpop.f32.mrb[0].mxu0
    %v485 = vpop.f32.mrb[0].mxu0
    %v486 = vadd.f32 %v431, %v485
    %v487 = vpop.f32.mrb[0].mxu0
    %488 = vdwg.mxu0
    %v489 = vadd.f32 %v483, %v279
    %v490 = vadd.f32 %v486, %v280
    %v491 = vsel %vm235, %v489, 0.0
    %492 = vadd.xlane.f32.xlu0 %v491
    %v493 = vpop.xlane.xlu0 %492
    %v494 = vsel %vm235, %v490, 0.0
    %495 = vadd.xlane.f32.xlu0 %v494
    %v496 = vpop.xlane.xlu0 %495
    %v497 = vmul.f32 %v493, %v242
    %v498 = vmul.f32 %v496, %v242
    %v499 = vsub.f32 %v489, %v497
    %v500 = vsub.f32 %v490, %v498
    %v501 = vmul.f32 %v499, %v499
    %v502 = vmul.f32 %v500, %v500
    %v503 = vsel %vm235, %v501, 0.0
    %504 = vadd.xlane.f32.xlu0 %v503
    %v505 = vpop.xlane.xlu0 %504
    %v506 = vsel %vm235, %v502, 0.0
    %507 = vadd.xlane.f32.xlu0 %v506
    %v508 = vpop.xlane.xlu0 %507
    %v509 = vmul.f32 %v505, %v242
    %v510 = vmul.f32 %v508, %v242
    %v511 = vadd.f32 %v509, 1e-05
    %v512 = vadd.f32 %v510, 1e-05
    %v513 = vrsqrt.pop %v511
    %v514 = vrsqrt.pop %v512
    %v515 = vmul.f32 %v499, %v513
    %v516 = vmul.f32 %v500, %v514
    %v517 = vld [vmem:[%s12] sm:$0x1]
    %v519 = vlaneseq
    %v520 = vshrl.u32 %v519, 7
    %v521 = vsub.s32 0, %v520
    %v522 = vrot.slane %v517, %v521
    %v524 = vmul.f32 %v515, %v522
    %v525 = vmul.f32 %v516, %v522
    %v526 = vld [vmem:[%s13] sm:$0x1]
    %v528 = vlaneseq
    %v529 = vshrl.u32 %v528, 7
    %v530 = vsub.s32 0, %v529
    %v531 = vrot.slane %v526, %v530
    %v533 = vadd.f32 %v524, %v531
    %v534 = vadd.f32 %v525, %v531
    %535 = vst.msk [vmem:[#allocation2] sm:$0xff] %vm235, %v533
    %536 = vst.msk [vmem:[#allocation2 + $0x8] sm:$0xff] %vm235, %v534
    // Predicated region
    $region58: #{structure_update_forward.15} parent=1 // pred_check
      _
    $region59: #{structure_update_forward.15} parent=1 // pred_check_branch
      %538 = sbr.rel (0) target = $region61
    $region60: #{structure_update_forward.15} parent=1 // pred_region
      %s540 = ssub.s32 256, 256
      %541 = vsyncadd [#allocation3], %s540
      %s542 = sshll.u32 [#allocation2], 4
      %s543 = int_to_ptr.vmem [resolvable:$true] %s542
      %548 = dma.vmem_to_hbm [thread:$0]  %s543, 256, %s14, [#allocation3], 128, 128, 8
    $region61: #{structure_update_forward.15} parent=1 // pred_fallthru
      _
    // Predicated region
    $region62: #{structure_update_forward.15} parent=1 // pred_check
      _
    $region63: #{structure_update_forward.15} parent=1 // pred_check_branch
      %550 = sbr.rel (0) target = $region65
    $region64: #{structure_update_forward.15} parent=1 // pred_region
      %551 = dma.done [#allocation3], 256
    $region65: #{structure_update_forward.15} parent=1 // pred_fallthru
      _
    %552 = vsyncpa [#allocation3], 1

// kernel: structure_update_forward.12
$region0: #{structure_update_forward.12}
  #allocation0 [shape = 'u32[]', space=smem, size = 0x4, offset = 0x4, fixed_abs, tag = 'smem constant byte address 0x4 - core index']
  #allocation1 [shape = 'u32[144,128]{1,0:T(1,128)}', space=vmem, size = 0x12000, scoped, tag = 'internal scratch']
  %s0 = inlined_call_operand.vmem [shape: bf16[2,8,8,16], index: 0, kind: input, shape index: {}]
  %s1 = inlined_call_operand.vmem [shape: f32[2,8,48], index: 1, kind: input, shape index: {}]
  %s2 = inlined_call_operand.vmem [shape: f32[2,8,48], index: 2, kind: input, shape index: {}]
  %s3 = inlined_call_operand.vmem [shape: f32[2,8,16], index: 3, kind: input, shape index: {}]
  %s4 = inlined_call_operand.vmem [shape: f32[2,8,16], index: 4, kind: input, shape index: {}]
  %s5 = inlined_call_operand.vmem [shape: bf16[2,8,8], index: 5, kind: input, shape index: {}]
  %s6 = inlined_call_operand.vmem [shape: bf16[16,48], index: 6, kind: input, shape index: {}]
  %s7 = inlined_call_operand.vmem [shape: bf16[48,48], index: 7, kind: input, shape index: {}]
  %s8 = inlined_call_operand.vmem [shape: f32[1,48], index: 8, kind: input, shape index: {}]
  %s9 = inlined_call_operand.vmem [shape: bf16[48,16], index: 9, kind: input, shape index: {}]
  %s10 = inlined_call_operand.vmem [shape: bf16[16,16], index: 10, kind: input, shape index: {}]
  %s11 = inlined_call_operand.vmem [shape: f32[1,16], index: 11, kind: input, shape index: {}]
  %s12 = inlined_call_operand.vmem [shape: f32[1,16], index: 12, kind: input, shape index: {}]
  %s13 = inlined_call_operand.vmem [shape: bf16[2,8,8,16], index: 13, kind: output, shape index: {}]
  %s14 = sld [smem:[#allocation0]]
  $region85: #{structure_update_forward.12} parent=0
    _
  %s16 = ssub.s32 1, %s14
  %s17 = scalar_select 0, %s16, %s14
  loop: start=0, step=1, limit=4
  $region2: #{structure_update_forward.12} parent=0 // loop_pre_header
    _
  $region3: #{structure_update_forward.12} parent=0 // loop_header
    %s19 = sphi 0, %s23
    %p20 = scmp.ge.s32.totalorder %s19, 4
    %s26 = sphi 0, %s38
    %s27 = sphi 0, %s34
    %s28 = sphi 0, %s26
    %s29 = sphi 0, %s27
    %s30 = sphi 0, %s28
    %s31 = sphi 0, %s29
    %s43 = sphi 0, %s45
    %s46 = sphi 0, %s43
    %s47 = sphi 0, %s46
    %s63 = sphi 0, %s47
    %s71 = sphi 0, %s73
    %s74 = sphi 0, %s71
    %s75 = sphi 0, %s74
    %s91 = sphi 0, %s75
    %s97 = sphi 0, %s99
    %s100 = sphi 0, %s97
    %s101 = sphi 0, %s100
    %s117 = sphi 0, %s101
    %s125 = sphi 0, %s127
    %s128 = sphi 0, %s125
    %s129 = sphi 0, %s128
    %s145 = sphi 0, %s129
    %s151 = sphi 0, %s153
    %s154 = sphi 0, %s151
    %s155 = sphi 0, %s154
    %s171 = sphi 0, %s155
    %s179 = sphi 0, %s181
    %s182 = sphi 0, %s179
    %s183 = sphi 0, %s182
    %s199 = sphi 0, %s183
    %s203 = sphi 0, %s203
    %s205 = sphi 0, %s203
    %s206 = sphi 0, %s205
    %s220 = sphi 0, %s206
    %s224 = sphi 0, %s224
    %s226 = sphi 0, %s224
    %s227 = sphi 0, %s226
    %s241 = sphi 0, %s227
    %s245 = sphi 0, %s245
    %s247 = sphi 0, %s245
    %s248 = sphi 0, %s247
    %s262 = sphi 0, %s248
    %s266 = sphi 0, %s266
    %s268 = sphi 0, %s266
    %s269 = sphi 0, %s268
    %s283 = sphi 0, %s269
    %s287 = sphi 0, %s287
    %s289 = sphi 0, %s287
    %s290 = sphi 0, %s289
    %s304 = sphi 0, %s290
    %s308 = sphi 0, %s308
    %s310 = sphi 0, %s308
    %s311 = sphi 0, %s310
    %s325 = sphi 0, %s311
    %s329 = sphi 0, %s329
    %s331 = sphi 0, %s329
    %s332 = sphi 0, %s331
    %s346 = sphi 0, %s332
    %s354 = sphi 0, %s356
    %s357 = sphi 0, %s354
    %s358 = sphi 0, %s357
    %s374 = sphi 0, %s358
  $region4: #{structure_update_forward.12} parent=0 // loop_header_branch
    %22 = sbr.rel (%p20) target = $region8
  $region5: #{structure_update_forward.12} parent=0 // loop_body
    %s24 = ssub.s32 %s19, 1
    %s25 = ssub.s32 %s19, 2
    %s32 = sadd.s32 1, %s27
    %p33 = scmp.ge.s32.totalorder %s32, 1
    %s34 = scalar_select %p33, 0, %s32
    %s35 = sadd.s32 1, %s26
    %s36 = scalar_select %p33, %s35, %s26
    %p37 = scmp.ge.s32.totalorder %s36, 2
    %s38 = scalar_select %p37, 0, %s36
    %s39 = ssub.s32 %s26, %s38
    %s40 = ssub.s32 %s27, %s34
    %s41 = sor.u32 %s39, %s40
    %p42 = scmp.eq.s32.totalorder %s41, 0
    %s44 = sadd.s32 %s43, 1
    %s45 = scalar_select %p42, %s43, %s44
    %p48 = pneg %p42
    %p49 = scmp.eq.s32.totalorder %s19, 1
    %p50 = por %p48, %p49
    %p51 = scmp.ne.s32.totalorder %s43, %s46
    %p52 = scmp.eq.s32.totalorder %s19, 0
    %p53 = por %p51, %p52
    %p54 = scmp.ne.s32.totalorder %s43, %s46
    %p55 = scmp.eq.s32.totalorder %s24, 1
    %p56 = por %p54, %p55
    %p57 = scmp.ne.s32.totalorder %s46, %s47
    %p58 = scmp.eq.s32.totalorder %s24, 0
    %p59 = por %p57, %p58
    %p60 = scmp.ne.s32.totalorder %s46, %s47
    %p61 = scmp.eq.s32.totalorder %s25, 1
    %p62 = por %p60, %p61
    %p64 = scmp.ne.s32.totalorder %s47, %s63
    %p65 = scmp.eq.s32.totalorder %s25, 0
    %p66 = por %p64, %p65
    %s67 = ssub.s32 %s26, %s38
    %s68 = ssub.s32 %s27, %s34
    %s69 = sor.u32 %s67, %s68
    %p70 = scmp.eq.s32.totalorder %s69, 0
    %s72 = sadd.s32 %s71, 1
    %s73 = scalar_select %p70, %s71, %s72
    %p76 = pneg %p70
    %p77 = scmp.eq.s32.totalorder %s19, 1
    %p78 = por %p76, %p77
    %p79 = scmp.ne.s32.totalorder %s71, %s74
    %p80 = scmp.eq.s32.totalorder %s19, 0
    %p81 = por %p79, %p80
    %p82 = scmp.ne.s32.totalorder %s71, %s74
    %p83 = scmp.eq.s32.totalorder %s24, 1
    %p84 = por %p82, %p83
    %p85 = scmp.ne.s32.totalorder %s74, %s75
    %p86 = scmp.eq.s32.totalorder %s24, 0
    %p87 = por %p85, %p86
    %p88 = scmp.ne.s32.totalorder %s74, %s75
    %p89 = scmp.eq.s32.totalorder %s25, 1
    %p90 = por %p88, %p89
    %p92 = scmp.ne.s32.totalorder %s75, %s91
    %p93 = scmp.eq.s32.totalorder %s25, 0
    %p94 = por %p92, %p93
    %s95 = ssub.s32 %s26, %s38
    %p96 = scmp.eq.s32.totalorder %s95, 0
    %s98 = sadd.s32 %s97, 1
    %s99 = scalar_select %p96, %s97, %s98
    %p102 = pneg %p96
    %p103 = scmp.eq.s32.totalorder %s19, 1
    %p104 = por %p102, %p103
    %p105 = scmp.ne.s32.totalorder %s97, %s100
    %p106 = scmp.eq.s32.totalorder %s19, 0
    %p107 = por %p105, %p106
    %p108 = scmp.ne.s32.totalorder %s97, %s100
    %p109 = scmp.eq.s32.totalorder %s24, 1
    %p110 = por %p108, %p109
    %p111 = scmp.ne.s32.totalorder %s100, %s101
    %p112 = scmp.eq.s32.totalorder %s24, 0
    %p113 = por %p111, %p112
    %p114 = scmp.ne.s32.totalorder %s100, %s101
    %p115 = scmp.eq.s32.totalorder %s25, 1
    %p116 = por %p114, %p115
    %p118 = scmp.ne.s32.totalorder %s101, %s117
    %p119 = scmp.eq.s32.totalorder %s25, 0
    %p120 = por %p118, %p119
    %s121 = ssub.s32 %s26, %s38
    %s122 = ssub.s32 %s27, %s34
    %s123 = sor.u32 %s121, %s122
    %p124 = scmp.eq.s32.totalorder %s123, 0
    %s126 = sadd.s32 %s125, 1
    %s127 = scalar_select %p124, %s125, %s126
    %p130 = pneg %p124
    %p131 = scmp.eq.s32.totalorder %s19, 1
    %p132 = por %p130, %p131
    %p133 = scmp.ne.s32.totalorder %s125, %s128
    %p134 = scmp.eq.s32.totalorder %s19, 0
    %p135 = por %p133, %p134
    %p136 = scmp.ne.s32.totalorder %s125, %s128
    %p137 = scmp.eq.s32.totalorder %s24, 1
    %p138 = por %p136, %p137
    %p139 = scmp.ne.s32.totalorder %s128, %s129
    %p140 = scmp.eq.s32.totalorder %s24, 0
    %p141 = por %p139, %p140
    %p142 = scmp.ne.s32.totalorder %s128, %s129
    %p143 = scmp.eq.s32.totalorder %s25, 1
    %p144 = por %p142, %p143
    %p146 = scmp.ne.s32.totalorder %s129, %s145
    %p147 = scmp.eq.s32.totalorder %s25, 0
    %p148 = por %p146, %p147
    %s149 = ssub.s32 %s26, %s38
    %p150 = scmp.eq.s32.totalorder %s149, 0
    %s152 = sadd.s32 %s151, 1
    %s153 = scalar_select %p150, %s151, %s152
    %p156 = pneg %p150
    %p157 = scmp.eq.s32.totalorder %s19, 1
    %p158 = por %p156, %p157
    %p159 = scmp.ne.s32.totalorder %s151, %s154
    %p160 = scmp.eq.s32.totalorder %s19, 0
    %p161 = por %p159, %p160
    %p162 = scmp.ne.s32.totalorder %s151, %s154
    %p163 = scmp.eq.s32.totalorder %s24, 1
    %p164 = por %p162, %p163
    %p165 = scmp.ne.s32.totalorder %s154, %s155
    %p166 = scmp.eq.s32.totalorder %s24, 0
    %p167 = por %p165, %p166
    %p168 = scmp.ne.s32.totalorder %s154, %s155
    %p169 = scmp.eq.s32.totalorder %s25, 1
    %p170 = por %p168, %p169
    %p172 = scmp.ne.s32.totalorder %s155, %s171
    %p173 = scmp.eq.s32.totalorder %s25, 0
    %p174 = por %p172, %p173
    %s175 = ssub.s32 %s26, %s38
    %s176 = ssub.s32 %s27, %s34
    %s177 = sor.u32 %s175, %s176
    %p178 = scmp.eq.s32.totalorder %s177, 0
    %s180 = sadd.s32 %s179, 1
    %s181 = scalar_select %p178, %s179, %s180
    %p184 = pneg %p178
    %p185 = scmp.eq.s32.totalorder %s19, 1
    %p186 = por %p184, %p185
    %p187 = scmp.ne.s32.totalorder %s179, %s182
    %p188 = scmp.eq.s32.totalorder %s19, 0
    %p189 = por %p187, %p188
    %p190 = scmp.ne.s32.totalorder %s179, %s182
    %p191 = scmp.eq.s32.totalorder %s24, 1
    %p192 = por %p190, %p191
    %p193 = scmp.ne.s32.totalorder %s182, %s183
    %p194 = scmp.eq.s32.totalorder %s24, 0
    %p195 = por %p193, %p194
    %p196 = scmp.ne.s32.totalorder %s182, %s183
    %p197 = scmp.eq.s32.totalorder %s25, 1
    %p198 = por %p196, %p197
    %p200 = scmp.ne.s32.totalorder %s183, %s199
    %p201 = scmp.eq.s32.totalorder %s25, 0
    %p202 = por %p200, %p201
    %s204 = sadd.s32 %s203, 1
    %p207 = scmp.eq.s32.totalorder %s19, 1
    %p208 = scmp.ne.s32.totalorder %s203, %s205
    %p209 = scmp.eq.s32.totalorder %s19, 0
    %p210 = por %p208, %p209
    %p211 = scmp.ne.s32.totalorder %s203, %s205
    %p212 = scmp.eq.s32.totalorder %s24, 1
    %p213 = por %p211, %p212
    %p214 = scmp.ne.s32.totalorder %s205, %s206
    %p215 = scmp.eq.s32.totalorder %s24, 0
    %p216 = por %p214, %p215
    %p217 = scmp.ne.s32.totalorder %s205, %s206
    %p218 = scmp.eq.s32.totalorder %s25, 1
    %p219 = por %p217, %p218
    %p221 = scmp.ne.s32.totalorder %s206, %s220
    %p222 = scmp.eq.s32.totalorder %s25, 0
    %p223 = por %p221, %p222
    %s225 = sadd.s32 %s224, 1
    %p228 = scmp.eq.s32.totalorder %s19, 1
    %p229 = scmp.ne.s32.totalorder %s224, %s226
    %p230 = scmp.eq.s32.totalorder %s19, 0
    %p231 = por %p229, %p230
    %p232 = scmp.ne.s32.totalorder %s224, %s226
    %p233 = scmp.eq.s32.totalorder %s24, 1
    %p234 = por %p232, %p233
    %p235 = scmp.ne.s32.totalorder %s226, %s227
    %p236 = scmp.eq.s32.totalorder %s24, 0
    %p237 = por %p235, %p236
    %p238 = scmp.ne.s32.totalorder %s226, %s227
    %p239 = scmp.eq.s32.totalorder %s25, 1
    %p240 = por %p238, %p239
    %p242 = scmp.ne.s32.totalorder %s227, %s241
    %p243 = scmp.eq.s32.totalorder %s25, 0
    %p244 = por %p242, %p243
    %s246 = sadd.s32 %s245, 1
    %p249 = scmp.eq.s32.totalorder %s19, 1
    %p250 = scmp.ne.s32.totalorder %s245, %s247
    %p251 = scmp.eq.s32.totalorder %s19, 0
    %p252 = por %p250, %p251
    %p253 = scmp.ne.s32.totalorder %s245, %s247
    %p254 = scmp.eq.s32.totalorder %s24, 1
    %p255 = por %p253, %p254
    %p256 = scmp.ne.s32.totalorder %s247, %s248
    %p257 = scmp.eq.s32.totalorder %s24, 0
    %p258 = por %p256, %p257
    %p259 = scmp.ne.s32.totalorder %s247, %s248
    %p260 = scmp.eq.s32.totalorder %s25, 1
    %p261 = por %p259, %p260
    %p263 = scmp.ne.s32.totalorder %s248, %s262
    %p264 = scmp.eq.s32.totalorder %s25, 0
    %p265 = por %p263, %p264
    %s267 = sadd.s32 %s266, 1
    %p270 = scmp.eq.s32.totalorder %s19, 1
    %p271 = scmp.ne.s32.totalorder %s266, %s268
    %p272 = scmp.eq.s32.totalorder %s19, 0
    %p273 = por %p271, %p272
    %p274 = scmp.ne.s32.totalorder %s266, %s268
    %p275 = scmp.eq.s32.totalorder %s24, 1
    %p276 = por %p274, %p275
    %p277 = scmp.ne.s32.totalorder %s268, %s269
    %p278 = scmp.eq.s32.totalorder %s24, 0
    %p279 = por %p277, %p278
    %p280 = scmp.ne.s32.totalorder %s268, %s269
    %p281 = scmp.eq.s32.totalorder %s25, 1
    %p282 = por %p280, %p281
    %p284 = scmp.ne.s32.totalorder %s269, %s283
    %p285 = scmp.eq.s32.totalorder %s25, 0
    %p286 = por %p284, %p285
    %s288 = sadd.s32 %s287, 1
    %p291 = scmp.eq.s32.totalorder %s19, 1
    %p292 = scmp.ne.s32.totalorder %s287, %s289
    %p293 = scmp.eq.s32.totalorder %s19, 0
    %p294 = por %p292, %p293
    %p295 = scmp.ne.s32.totalorder %s287, %s289
    %p296 = scmp.eq.s32.totalorder %s24, 1
    %p297 = por %p295, %p296
    %p298 = scmp.ne.s32.totalorder %s289, %s290
    %p299 = scmp.eq.s32.totalorder %s24, 0
    %p300 = por %p298, %p299
    %p301 = scmp.ne.s32.totalorder %s289, %s290
    %p302 = scmp.eq.s32.totalorder %s25, 1
    %p303 = por %p301, %p302
    %p305 = scmp.ne.s32.totalorder %s290, %s304
    %p306 = scmp.eq.s32.totalorder %s25, 0
    %p307 = por %p305, %p306
    %s309 = sadd.s32 %s308, 1
    %p312 = scmp.eq.s32.totalorder %s19, 1
    %p313 = scmp.ne.s32.totalorder %s308, %s310
    %p314 = scmp.eq.s32.totalorder %s19, 0
    %p315 = por %p313, %p314
    %p316 = scmp.ne.s32.totalorder %s308, %s310
    %p317 = scmp.eq.s32.totalorder %s24, 1
    %p318 = por %p316, %p317
    %p319 = scmp.ne.s32.totalorder %s310, %s311
    %p320 = scmp.eq.s32.totalorder %s24, 0
    %p321 = por %p319, %p320
    %p322 = scmp.ne.s32.totalorder %s310, %s311
    %p323 = scmp.eq.s32.totalorder %s25, 1
    %p324 = por %p322, %p323
    %p326 = scmp.ne.s32.totalorder %s311, %s325
    %p327 = scmp.eq.s32.totalorder %s25, 0
    %p328 = por %p326, %p327
    %s330 = sadd.s32 %s329, 1
    %p333 = scmp.eq.s32.totalorder %s19, 1
    %p334 = scmp.ne.s32.totalorder %s329, %s331
    %p335 = scmp.eq.s32.totalorder %s19, 0
    %p336 = por %p334, %p335
    %p337 = scmp.ne.s32.totalorder %s329, %s331
    %p338 = scmp.eq.s32.totalorder %s24, 1
    %p339 = por %p337, %p338
    %p340 = scmp.ne.s32.totalorder %s331, %s332
    %p341 = scmp.eq.s32.totalorder %s24, 0
    %p342 = por %p340, %p341
    %p343 = scmp.ne.s32.totalorder %s331, %s332
    %p344 = scmp.eq.s32.totalorder %s25, 1
    %p345 = por %p343, %p344
    %p347 = scmp.ne.s32.totalorder %s332, %s346
    %p348 = scmp.eq.s32.totalorder %s25, 0
    %p349 = por %p347, %p348
    %s350 = ssub.s32 %s26, %s38
    %s351 = ssub.s32 %s27, %s34
    %s352 = sor.u32 %s350, %s351
    %p353 = scmp.eq.s32.totalorder %s352, 0
    %s355 = sadd.s32 %s354, 1
    %s356 = scalar_select %p353, %s354, %s355
    %p359 = pneg %p353
    %p360 = scmp.eq.s32.totalorder %s19, 1
    %p361 = por %p359, %p360
    %p362 = scmp.ne.s32.totalorder %s354, %s357
    %p363 = scmp.eq.s32.totalorder %s19, 0
    %p364 = por %p362, %p363
    %p365 = scmp.ne.s32.totalorder %s354, %s357
    %p366 = scmp.eq.s32.totalorder %s24, 1
    %p367 = por %p365, %p366
    %p368 = scmp.ne.s32.totalorder %s357, %s358
    %p369 = scmp.eq.s32.totalorder %s24, 0
    %p370 = por %p368, %p369
    %p371 = scmp.ne.s32.totalorder %s357, %s358
    %p372 = scmp.eq.s32.totalorder %s25, 1
    %p373 = por %p371, %p372
    %p375 = scmp.ne.s32.totalorder %s358, %s374
    %p376 = scmp.eq.s32.totalorder %s25, 0
    %p377 = por %p375, %p376
    %p378 = scmp.le.s32.totalorder 1, %s19
    %p379 = scmp.lt.s32.totalorder %s19, 3
    %p380 = pnand %p378, %p379
    %p381 = pneg %p380
    // Predicated region
    $region9: #{structure_update_forward.12} parent=5 // pred_check
      _
    $region10: #{structure_update_forward.12} parent=5 // pred_check_branch
      %383 = sbr.rel (%p380) target = $region12
    $region11: #{structure_update_forward.12} parent=5 // pred_region
      %s384 = ssub.s32 %s19, 1
      // Predicated region
      $region13: #{structure_update_forward.12} parent=11 // pred_check
        %p385 = pneg %p216
      $region14: #{structure_update_forward.12} parent=11 // pred_check_branch
        %387 = sbr.rel (%p385) target = $region16
      $region15: #{structure_update_forward.12} parent=11 // pred_region
        _
      $region16: #{structure_update_forward.12} parent=11 // pred_fallthru
        _
      // Predicated region
      $region17: #{structure_update_forward.12} parent=11 // pred_check
        %p388 = pneg %p237
      $region18: #{structure_update_forward.12} parent=11 // pred_check_branch
        %390 = sbr.rel (%p388) target = $region20
      $region19: #{structure_update_forward.12} parent=11 // pred_region
        _
      $region20: #{structure_update_forward.12} parent=11 // pred_fallthru
        _
      // Predicated region
      $region21: #{structure_update_forward.12} parent=11 // pred_check
        %p391 = pneg %p258
      $region22: #{structure_update_forward.12} parent=11 // pred_check_branch
        %393 = sbr.rel (%p391) target = $region24
      $region23: #{structure_update_forward.12} parent=11 // pred_region
        _
      $region24: #{structure_update_forward.12} parent=11 // pred_fallthru
        _
      // Predicated region
      $region25: #{structure_update_forward.12} parent=11 // pred_check
        %p394 = pneg %p279
      $region26: #{structure_update_forward.12} parent=11 // pred_check_branch
        %396 = sbr.rel (%p394) target = $region28
      $region27: #{structure_update_forward.12} parent=11 // pred_region
        _
      $region28: #{structure_update_forward.12} parent=11 // pred_fallthru
        _
      // Predicated region
      $region29: #{structure_update_forward.12} parent=11 // pred_check
        %p397 = pneg %p300
      $region30: #{structure_update_forward.12} parent=11 // pred_check_branch
        %399 = sbr.rel (%p397) target = $region32
      $region31: #{structure_update_forward.12} parent=11 // pred_region
        _
      $region32: #{structure_update_forward.12} parent=11 // pred_fallthru
        _
      // Predicated region
      $region33: #{structure_update_forward.12} parent=11 // pred_check
        %p400 = pneg %p321
      $region34: #{structure_update_forward.12} parent=11 // pred_check_branch
        %402 = sbr.rel (%p400) target = $region36
      $region35: #{structure_update_forward.12} parent=11 // pred_region
        _
      $region36: #{structure_update_forward.12} parent=11 // pred_fallthru
        _
      // Predicated region
      $region37: #{structure_update_forward.12} parent=11 // pred_check
        %p403 = pneg %p342
      $region38: #{structure_update_forward.12} parent=11 // pred_check_branch
        %405 = sbr.rel (%p403) target = $region40
      $region39: #{structure_update_forward.12} parent=11 // pred_region
        _
      $region40: #{structure_update_forward.12} parent=11 // pred_fallthru
        _
    $region12: #{structure_update_forward.12} parent=5 // pred_fallthru
      _
    %p406 = scmp.lt.s32.totalorder %s19, 2
    // Predicated region
    $region41: #{structure_update_forward.12} parent=5 // pred_check
      %p407 = pneg %p406
    $region42: #{structure_update_forward.12} parent=5 // pred_check_branch
      %409 = sbr.rel (%p407) target = $region44
    $region43: #{structure_update_forward.12} parent=5 // pred_region
      // Predicated region
      $region45: #{structure_update_forward.12} parent=43 // pred_check
        %p410 = pneg %p53
      $region46: #{structure_update_forward.12} parent=43 // pred_check_branch
        %412 = sbr.rel (%p410) target = $region48
      $region47: #{structure_update_forward.12} parent=43 // pred_region
        %s413 = smul.u32 8, %s27
        %p414 = scmp.lt.s32.totalorder %s26, 1
        %s415 = scalar_select %p414, %s26, 1
        %p416 = scmp.lt.s32.totalorder %s413, 7
        %s417 = scalar_select %p416, %s413, 7
        %s418 = smul.addr %s415, 8
        %s419 = sadd.s32 %s417, %s418
        %s420 = smul.addr %s419, 4
        %s421 = scalar_lea.vmem %s0, %s420
        %s422 = smul.u32 8, %s27
      $region48: #{structure_update_forward.12} parent=43 // pred_fallthru
        _
      // Predicated region
      $region49: #{structure_update_forward.12} parent=43 // pred_check
        %p423 = pneg %p81
      $region50: #{structure_update_forward.12} parent=43 // pred_check_branch
        %425 = sbr.rel (%p423) target = $region52
      $region51: #{structure_update_forward.12} parent=43 // pred_region
        %p426 = scmp.lt.s32.totalorder %s26, 1
        %s427 = scalar_select %p426, %s26, 1
        %p428 = scmp.lt.s32.totalorder %s27, 0
        %s429 = scalar_select %p428, %s27, 0
        %s430 = sadd.s32 %s429, %s427
        %s431 = smul.addr %s430, 8
        %s432 = scalar_lea.vmem %s1, %s431
      $region52: #{structure_update_forward.12} parent=43 // pred_fallthru
        _
      // Predicated region
      $region53: #{structure_update_forward.12} parent=43 // pred_check
        %p433 = pneg %p107
      $region54: #{structure_update_forward.12} parent=43 // pred_check_branch
        %435 = sbr.rel (%p433) target = $region56
      $region55: #{structure_update_forward.12} parent=43 // pred_region
        %p436 = scmp.lt.s32.totalorder %s26, 1
        %s437 = scalar_select %p436, %s26, 1
        %s438 = smul.addr %s437, 8
        %s439 = scalar_lea.vmem %s2, %s438
      $region56: #{structure_update_forward.12} parent=43 // pred_fallthru
        _
      // Predicated region
      $region57: #{structure_update_forward.12} parent=43 // pred_check
        %p440 = pneg %p135
      $region58: #{structure_update_forward.12} parent=43 // pred_check_branch
        %442 = sbr.rel (%p440) target = $region60
      $region59: #{structure_update_forward.12} parent=43 // pred_region
        %p443 = scmp.lt.s32.totalorder %s26, 1
        %s444 = scalar_select %p443, %s26, 1
        %p445 = scmp.lt.s32.totalorder %s27, 0
        %s446 = scalar_select %p445, %s27, 0
        %s447 = sadd.s32 %s446, %s444
        %s448 = smul.addr %s447, 8
        %s449 = scalar_lea.vmem %s3, %s448
      $region60: #{structure_update_forward.12} parent=43 // pred_fallthru
        _
      // Predicated region
      $region61: #{structure_update_forward.12} parent=43 // pred_check
        %p450 = pneg %p161
      $region62: #{structure_update_forward.12} parent=43 // pred_check_branch
        %452 = sbr.rel (%p450) target = $region64
      $region63: #{structure_update_forward.12} parent=43 // pred_region
        %p453 = scmp.lt.s32.totalorder %s26, 1
        %s454 = scalar_select %p453, %s26, 1
        %s455 = smul.addr %s454, 8
        %s456 = scalar_lea.vmem %s4, %s455
      $region64: #{structure_update_forward.12} parent=43 // pred_fallthru
        _
      // Predicated region
      $region65: #{structure_update_forward.12} parent=43 // pred_check
        %p457 = pneg %p189
      $region66: #{structure_update_forward.12} parent=43 // pred_check_branch
        %459 = sbr.rel (%p457) target = $region68
      $region67: #{structure_update_forward.12} parent=43 // pred_region
        %p460 = scmp.lt.s32.totalorder %s26, 1
        %s461 = scalar_select %p460, %s26, 1
        %p462 = scmp.lt.s32.totalorder %s27, 0
        %s463 = scalar_select %p462, %s27, 0
        %s464 = sadd.s32 %s463, %s461
        %s465 = smul.addr %s464, 4
        %s466 = scalar_lea.vmem %s5, %s465
      $region68: #{structure_update_forward.12} parent=43 // pred_fallthru
        _
    $region44: #{structure_update_forward.12} parent=5 // pred_fallthru
      _
    %p467 = scmp.le.s32.totalorder 1, %s19
    %p468 = scmp.lt.s32.totalorder %s19, 3
    %p469 = pnand %p467, %p468
    %p470 = pneg %p469
    // Predicated region
    $region69: #{structure_update_forward.12} parent=5 // pred_check
      _
    $region70: #{structure_update_forward.12} parent=5 // pred_check_branch
      %472 = sbr.rel (%p469) target = $region72
    $region71: #{structure_update_forward.12} parent=5 // pred_region
      %s473 = ssub.s32 %s19, 1
      %s474 = smul.u32 8, %s29
      %p475 = scmp.lt.s32.totalorder %s28, 1
      %s476 = scalar_select %p475, %s28, 1
      %p477 = scmp.lt.s32.totalorder %s474, 7
      %s478 = scalar_select %p477, %s474, 7
      %s479 = smul.addr %s476, 8
      %s480 = sadd.s32 %s478, %s479
      %s481 = smul.addr %s480, 4
      %s482 = scalar_lea.vmem %s0, %s481
      %p483 = pneg %p59
      %p484 = pneg %p56
      %p485 = scmp.lt.s32.totalorder %s28, 1
      %s486 = scalar_select %p485, %s28, 1
      %p487 = scmp.lt.s32.totalorder %s29, 0
      %s488 = scalar_select %p487, %s29, 0
      %s489 = sadd.s32 %s488, %s486
      %s490 = smul.addr %s489, 8
      %s491 = scalar_lea.vmem %s1, %s490
      %p492 = pneg %p87
      %p493 = pneg %p84
      %p494 = scmp.lt.s32.totalorder %s28, 1
      %s495 = scalar_select %p494, %s28, 1
      %s496 = smul.addr %s495, 8
      %s497 = scalar_lea.vmem %s2, %s496
      %p498 = pneg %p113
      %p499 = pneg %p110
      %p500 = scmp.lt.s32.totalorder %s28, 1
      %s501 = scalar_select %p500, %s28, 1
      %p502 = scmp.lt.s32.totalorder %s29, 0
      %s503 = scalar_select %p502, %s29, 0
      %s504 = sadd.s32 %s503, %s501
      %s505 = smul.addr %s504, 8
      %s506 = scalar_lea.vmem %s3, %s505
      %p507 = pneg %p141
      %p508 = pneg %p138
      %p509 = scmp.lt.s32.totalorder %s28, 1
      %s510 = scalar_select %p509, %s28, 1
      %s511 = smul.addr %s510, 8
      %s512 = scalar_lea.vmem %s4, %s511
      %p513 = pneg %p167
      %p514 = pneg %p164
      %p515 = scmp.lt.s32.totalorder %s28, 1
      %s516 = scalar_select %p515, %s28, 1
      %p517 = scmp.lt.s32.totalorder %s29, 0
      %s518 = scalar_select %p517, %s29, 0
      %s519 = sadd.s32 %s518, %s516
      %s520 = smul.addr %s519, 4
      %s521 = scalar_lea.vmem %s5, %s520
      %p522 = pneg %p195
      %p523 = pneg %p192
      %p524 = pneg %p216
      %p525 = pneg %p213
      %p526 = pneg %p237
      %p527 = pneg %p234
      %p528 = pneg %p258
      %p529 = pneg %p255
      %p530 = pneg %p279
      %p531 = pneg %p276
      %p532 = pneg %p300
      %p533 = pneg %p297
      %p534 = pneg %p321
      %p535 = pneg %p318
      %p536 = pneg %p342
      %p537 = pneg %p339
      %p538 = pneg %p370
      %p539 = pneg %p367
      %s540 = smul.u32 8, %s29
      %p541 = scmp.lt.s32.totalorder %s28, 1
      %s542 = scalar_select %p541, %s28, 1
      %p543 = scmp.lt.s32.totalorder %s540, 7
      %s544 = scalar_select %p543, %s540, 7
      %s545 = smul.addr %s542, 8
      %s546 = sadd.s32 %s544, %s545
      %s547 = smul.addr %s546, 4
      %s548 = scalar_lea.vmem %s13, %s547
      %s549 = smul.u32 8, %s29
      %p550 = scmp.lt.s32.totalorder %s28, 1
      %s551 = scalar_select %p550, %s28, 1
      %p552 = scmp.lt.s32.totalorder %s549, 7
      %s553 = scalar_select %p552, %s549, 7
      %s554 = smul.addr %s551, 8
      %s555 = sadd.s32 %s553, %s554
      %s556 = smul.addr %s555, 4
      %s557 = scalar_lea.vmem %s0, %s556
      %s558 = smul.u32 8, %s29
      %p559 = scmp.lt.s32.totalorder %s28, 1
      %s560 = scalar_select %p559, %s28, 1
      %p561 = scmp.lt.s32.totalorder %s29, 0
      %s562 = scalar_select %p561, %s29, 0
      %s563 = sadd.s32 %s562, %s560
      %s564 = smul.addr %s563, 8
      %s565 = scalar_lea.vmem %s1, %s564
      %p566 = scmp.lt.s32.totalorder %s28, 1
      %s567 = scalar_select %p566, %s28, 1
      %s568 = smul.addr %s567, 8
      %s569 = scalar_lea.vmem %s2, %s568
      %p570 = scmp.lt.s32.totalorder %s28, 1
      %s571 = scalar_select %p570, %s28, 1
      %p572 = scmp.lt.s32.totalorder %s29, 0
      %s573 = scalar_select %p572, %s29, 0
      %s574 = sadd.s32 %s573, %s571
      %s575 = smul.addr %s574, 8
      %s576 = scalar_lea.vmem %s3, %s575
      %p577 = scmp.lt.s32.totalorder %s28, 1
      %s578 = scalar_select %p577, %s28, 1
      %s579 = smul.addr %s578, 8
      %s580 = scalar_lea.vmem %s4, %s579
      %p581 = scmp.lt.s32.totalorder %s28, 1
      %s582 = scalar_select %p581, %s28, 1
      %p583 = scmp.lt.s32.totalorder %s29, 0
      %s584 = scalar_select %p583, %s29, 0
      %s585 = sadd.s32 %s584, %s582
      %s586 = smul.addr %s585, 4
      %s587 = scalar_lea.vmem %s5, %s586
      %s588 = smul.u32 8, %s29
      %p589 = scmp.lt.s32.totalorder %s28, 1
      %s590 = scalar_select %p589, %s28, 1
      %p591 = scmp.lt.s32.totalorder %s588, 7
      %s592 = scalar_select %p591, %s588, 7
      %s593 = smul.addr %s590, 8
      %s594 = sadd.s32 %s592, %s593
      %s595 = smul.addr %s594, 4
      %s596 = scalar_lea.vmem %s13, %s595
      %s597 = smul.u32 8, %s29
      %v599 = vld [vmem:[%s557] sm:$0xf]
      %v600 = vld [vmem:[%s557 + $0x4] sm:$0xf]
      %v601 = vld [vmem:[%s557 + $0x8] sm:$0xf]
      %v602 = vld [vmem:[%s557 + $0xc] sm:$0xf]
      %v603 = vld [vmem:[%s557 + $0x10] sm:$0xf]
      %v604 = vld [vmem:[%s557 + $0x14] sm:$0xf]
      %v605 = vld [vmem:[%s557 + $0x18] sm:$0xf]
      %v606 = vld [vmem:[%s557 + $0x1c] sm:$0xf]
      %v607 = vld [vmem:[%s6] sm:$0xf]
      %v608 = vld [vmem:[%s6 + $0x4] sm:$0xf]
      %v617 = vunpack.c.l.b16 %v599
      %v618 = vunpack.c.l.b16 %v600
      %v619 = vunpack.c.l.b16 %v601
      %v620 = vunpack.c.l.b16 %v602
      %v621 = vunpack.c.l.b16 %v603
      %v622 = vunpack.c.l.b16 %v604
      %v623 = vunpack.c.l.b16 %v605
      %v624 = vunpack.c.l.b16 %v606
      %v625 = vpack.c.b16 %v618, %v617
      %v626 = vpack.c.b16 %v620, %v619
      %v627 = vpack.c.b16 %v622, %v621
      %v628 = vpack.c.b16 %v624, %v623
      %v631 = vunpack.c.l.b16 %v607
      %v632 = vunpack.c.l.b16 %v608
      %v633 = vpack.c.b16 %v632, %v631
      %vm635 = vcmask 130048
      %v637 = vsel %vm635, %v625, 0
      %v640 = vsel %vm635, %v626, 0
      %v643 = vsel %vm635, %v627, 0
      %v646 = vsel %vm635, %v628, 0
      %648 = vmatprep.subr.bf16.mxu0 0
      %649 = vmatpush1.bf16.msra.mxu0 %v633
      %650 = vmatprep.subr.bf16.mxu0 0
      %651 = vmatpush1.bf16.msra.mxu0 0
      %652 = vmatprep.subr.bf16.mxu0 0
      %653 = vmatpush1.bf16.msra.mxu0 0
      %654 = vmatprep.subr.bf16.mxu0 0
      %655 = vmatpush1.bf16.msra.mxu0 0
      %656 = vmatprep.subr.bf16.mxu0 0
      %657 = vmatpush1.bf16.msra.mxu0 0
      %658 = vmatprep.subr.bf16.mxu0 0
      %659 = vmatpush1.bf16.msra.mxu0 0
      %660 = vmatprep.subr.bf16.mxu0 0
      %661 = vmatpush1.bf16.msra.mxu0 0
      %662 = vmatprep.subr.bf16.mxu0 0
      %663 = vmatpush1.bf16.msra.mxu0 0
      %664 = vmatprep.subr.bf16.mxu0 0
      %665 = vmatpush1.bf16.msra.mxu0 0
      %666 = vmatprep.subr.bf16.mxu0 0
      %667 = vmatpush1.bf16.msra.mxu0 0
      %668 = vmatprep.subr.bf16.mxu0 0
      %669 = vmatpush1.bf16.msra.mxu0 0
      %670 = vmatprep.subr.bf16.mxu0 0
      %671 = vmatpush1.bf16.msra.mxu0 0
      %672 = vmatprep.subr.bf16.mxu0 0
      %673 = vmatpush1.bf16.msra.mxu0 0
      %674 = vmatprep.subr.bf16.mxu0 0
      %675 = vmatpush1.bf16.msra.mxu0 0
      %676 = vmatprep.subr.bf16.mxu0 0
      %677 = vmatpush1.bf16.msra.mxu0 0
      %678 = vmatprep.subr.bf16.mxu0 0
      %679 = vmatpush1.bf16.msra.mxu0 0
      %680 = vmatprep.mubr.bf16.mxu0 0
      %681 = vmatmul.mubr.bf16.gmra.mrb[0].mxu0 %v637
      %v682 = vpop.f32.mrb[0].mxu0
      %v683 = vadd.f32 0.0, %v682
      %v684 = vpop.f32.mrb[0].mxu0
      %v685 = vpop.f32.mrb[0].mxu0
      %v686 = vadd.f32 0.0, %v685
      %v687 = vpop.f32.mrb[0].mxu0
      %688 = vmatprep.mubr.bf16.mxu0 0
      %689 = vmatmul.mubr.bf16.gmra.mrb[0].mxu0 %v640
      %v690 = vpop.f32.mrb[0].mxu0
      %v691 = vadd.f32 0.0, %v690
      %v692 = vpop.f32.mrb[0].mxu0
      %v693 = vpop.f32.mrb[0].mxu0
      %v694 = vadd.f32 0.0, %v693
      %v695 = vpop.f32.mrb[0].mxu0
      %696 = vmatprep.mubr.bf16.mxu0 0
      %697 = vmatmul.mubr.bf16.gmra.mrb[0].mxu0 %v643
      %v698 = vpop.f32.mrb[0].mxu0
      %v699 = vadd.f32 0.0, %v698
      %v700 = vpop.f32.mrb[0].mxu0
      %v701 = vpop.f32.mrb[0].mxu0
      %v702 = vadd.f32 0.0, %v701
      %v703 = vpop.f32.mrb[0].mxu0
      %704 = vmatprep.mubr.bf16.mxu0 0
      %705 = vmatmul.mubr.bf16.gmra.mrb[0].mxu0 %v646
      %v706 = vpop.f32.mrb[0].mxu0
      %v707 = vadd.f32 0.0, %v706
      %v708 = vpop.f32.mrb[0].mxu0
      %v709 = vpop.f32.mrb[0].mxu0
      %v710 = vadd.f32 0.0, %v709
      %v711 = vpop.f32.mrb[0].mxu0
      %712 = vdwg.mxu0
      %v713 = vld [vmem:[%s565] sm:$0xff]
      %v715 = vcombine.high %v713, %v713
      %v717 = vunpack.c.l.s4 1966171168
      %v718 = vunpack.c.0.s8 %v717
      %v719 = vlaneseq
      %v720 = vshrl.u32 %v719, 7
      %v721 = vsub.s32 %v718, %v720
      %v722 = vrot.slane %v713, %v721
      %v724 = vunpack.c.l.s4 1966171168
      %v725 = vunpack.c.0.s8 %v724
      %v726 = vlaneseq
      %v727 = vshrl.u32 %v726, 7
      %v728 = vsub.s32 %v725, %v727
      %v729 = vrot.slane %v715, %v728
      %v730 = vcombine.high %v722, %v722
      %v731 = vcombine.high %v729, %v729
      %v733 = vunpack.c.l.s4 1966171168
      %v734 = vunpack.c.0.s8 %v733
      %v735 = vlaneseq
      %v736 = vshrl.u32 %v735, 7
      %v737 = vsub.s32 %v734, %v736
      %v738 = vrot.slane %v722, %v737
      %v740 = vunpack.c.l.s4 1966171168
      %v741 = vunpack.c.0.s8 %v740
      %v742 = vlaneseq
      %v743 = vshrl.u32 %v742, 7
      %v744 = vsub.s32 %v741, %v743
      %v745 = vrot.slane %v729, %v744
      %v747 = vunpack.c.l.s4 1966171168
      %v748 = vunpack.c.0.s8 %v747
      %v749 = vlaneseq
      %v750 = vshrl.u32 %v749, 7
      %v751 = vsub.s32 %v748, %v750
      %v752 = vrot.slane %v730, %v751
      %v754 = vunpack.c.l.s4 1966171168
      %v755 = vunpack.c.0.s8 %v754
      %v756 = vlaneseq
      %v757 = vshrl.u32 %v756, 7
      %v758 = vsub.s32 %v755, %v757
      %v759 = vrot.slane %v731, %v758
      %v760 = vcombine.high %v738, %v738
      %v761 = vcombine.high %v745, %v745
      %v762 = vcombine.high %v752, %v752
      %v763 = vcombine.high %v759, %v759
      %v764 = vlaneseq
      %v765 = vshrl.u32 %v764, 7
      %v766 = vsub.s32 0, %v765
      %v767 = vrot.slane %v738, %v766
      %v768 = vlaneseq
      %v769 = vshrl.u32 %v768, 7
      %v770 = vsub.s32 0, %v769
      %v771 = vrot.slane %v752, %v770
      %v772 = vlaneseq
      %v773 = vshrl.u32 %v772, 7
      %v774 = vsub.s32 0, %v773
      %v775 = vrot.slane %v760, %v774
      %v776 = vlaneseq
      %v777 = vshrl.u32 %v776, 7
      %v778 = vsub.s32 0, %v777
      %v779 = vrot.slane %v762, %v778
      %v780 = vlaneseq
      %v781 = vshrl.u32 %v780, 7
      %v782 = vsub.s32 0, %v781
      %v783 = vrot.slane %v745, %v782
      %v784 = vlaneseq
      %v785 = vshrl.u32 %v784, 7
      %v786 = vsub.s32 0, %v785
      %v787 = vrot.slane %v759, %v786
      %v788 = vlaneseq
      %v789 = vshrl.u32 %v788, 7
      %v790 = vsub.s32 0, %v789
      %v791 = vrot.slane %v761, %v790
      %v792 = vlaneseq
      %v793 = vshrl.u32 %v792, 7
      %v794 = vsub.s32 0, %v793
      %v795 = vrot.slane %v763, %v794
      %v804 = vadd.f32 %v683, %v767
      %v805 = vadd.f32 %v686, %v771
      %v806 = vadd.f32 %v691, %v775
      %v807 = vadd.f32 %v694, %v779
      %v808 = vadd.f32 %v699, %v783
      %v809 = vadd.f32 %v702, %v787
      %v810 = vadd.f32 %v707, %v791
      %v811 = vadd.f32 %v710, %v795
      %v812 = vld [vmem:[%s569] sm:$0xff]
      %v813 = vadd.f32 %v804, %v812
      %v814 = vadd.f32 %v805, %v812
      %v815 = vadd.f32 %v806, %v812
      %v816 = vadd.f32 %v807, %v812
      %v817 = vadd.f32 %v808, %v812
      %v818 = vadd.f32 %v809, %v812
      %v819 = vadd.f32 %v810, %v812
      %v820 = vadd.f32 %v811, %v812
      %v821 = vmax.f32 %v813, 0.0
      %v822 = vmax.f32 %v814, 0.0
      %v823 = vmax.f32 %v815, 0.0
      %v824 = vmax.f32 %v816, 0.0
      %v825 = vmax.f32 %v817, 0.0
      %v826 = vmax.f32 %v818, 0.0
      %v827 = vmax.f32 %v819, 0.0
      %v828 = vmax.f32 %v820, 0.0
      %v829 = vpack.c.bf16 %v822, %v821
      %v830 = vpack.c.bf16 %v824, %v823
      %v831 = vpack.c.bf16 %v826, %v825
      %v832 = vpack.c.bf16 %v828, %v827
      %v833 = vld [vmem:[%s7] sm:$0xf]
      %v834 = vld [vmem:[%s7 + $0x4] sm:$0xf]
      %v835 = vld [vmem:[%s7 + $0x8] sm:$0xf]
      %v836 = vld [vmem:[%s7 + $0xc] sm:$0xf]
      %v837 = vld [vmem:[%s7 + $0x10] sm:$0xf]
      %v838 = vld [vmem:[%s7 + $0x14] sm:$0xf]
      %v839 = vld [vmem:[%s8] sm:$0x1]
      %v841 = vlaneseq
      %v842 = vshrl.u32 %v841, 7
      %v843 = vsub.s32 0, %v842
      %v844 = vrot.slane %v839, %v843
      %v852 = vunpack.c.l.b16 %v833
      %v853 = vunpack.c.l.b16 %v834
      %v854 = vunpack.c.l.b16 %v835
      %v855 = vunpack.c.l.b16 %v836
      %v856 = vunpack.c.l.b16 %v837
      %v857 = vunpack.c.l.b16 %v838
      %v858 = vpack.c.b16 %v853, %v852
      %v859 = vpack.c.b16 %v855, %v854
      %v860 = vpack.c.b16 %v857, %v856
      %vm864 = vcmask 392192
      %v866 = vsel %vm864, %v829, 0
      %v869 = vsel %vm864, %v830, 0
      %v872 = vsel %vm864, %v831, 0
      %v875 = vsel %vm864, %v832, 0
      %877 = vmatprep.subr.bf16.mxu0 0
      %878 = vmatpush1.bf16.msra.mxu0 %v858
      %879 = vmatprep.subr.bf16.mxu0 0
      %880 = vmatpush1.bf16.msra.mxu0 %v859
      %881 = vmatprep.subr.bf16.mxu0 0
      %882 = vmatpush1.bf16.msra.mxu0 %v860
      %883 = vmatprep.subr.bf16.mxu0 0
      %884 = vmatpush1.bf16.msra.mxu0 0
      %885 = vmatprep.subr.bf16.mxu0 0
      %886 = vmatpush1.bf16.msra.mxu0 0
      %887 = vmatprep.subr.bf16.mxu0 0
      %888 = vmatpush1.bf16.msra.mxu0 0
      %889 = vmatprep.subr.bf16.mxu0 0
      %890 = vmatpush1.bf16.msra.mxu0 0
      %891 = vmatprep.subr.bf16.mxu0 0
      %892 = vmatpush1.bf16.msra.mxu0 0
      %893 = vmatprep.subr.bf16.mxu0 0
      %894 = vmatpush1.bf16.msra.mxu0 0
      %895 = vmatprep.subr.bf16.mxu0 0
      %896 = vmatpush1.bf16.msra.mxu0 0
      %897 = vmatprep.subr.bf16.mxu0 0
      %898 = vmatpush1.bf16.msra.mxu0 0
      %899 = vmatprep.subr.bf16.mxu0 0
      %900 = vmatpush1.bf16.msra.mxu0 0
      %901 = vmatprep.subr.bf16.mxu0 0
      %902 = vmatpush1.bf16.msra.mxu0 0
      %903 = vmatprep.subr.bf16.mxu0 0
      %904 = vmatpush1.bf16.msra.mxu0 0
      %905 = vmatprep.subr.bf16.mxu0 0
      %906 = vmatpush1.bf16.msra.mxu0 0
      %907 = vmatprep.subr.bf16.mxu0 0
      %908 = vmatpush1.bf16.msra.mxu0 0
      %909 = vmatprep.mubr.bf16.mxu0 0
      %910 = vmatmul.mubr.bf16.gmra.mrb[0].mxu0 %v866
      %v911 = vpop.f32.mrb[0].mxu0
      %v912 = vadd.f32 %v844, %v911
      %v913 = vpop.f32.mrb[0].mxu0
      %v914 = vpop.f32.mrb[0].mxu0
      %v915 = vadd.f32 %v844, %v914
      %v916 = vpop.f32.mrb[0].mxu0
      %917 = vmatprep.mubr.bf16.mxu0 0
      %918 = vmatmul.mubr.bf16.gmra.mrb[0].mxu0 %v869
      %v919 = vpop.f32.mrb[0].mxu0
      %v920 = vadd.f32 %v844, %v919
      %v921 = vpop.f32.mrb[0].mxu0
      %v922 = vpop.f32.mrb[0].mxu0
      %v923 = vadd.f32 %v844, %v922
      %v924 = vpop.f32.mrb[0].mxu0
      %925 = vmatprep.mubr.bf16.mxu0 0
      %926 = vmatmul.mubr.bf16.gmra.mrb[0].mxu0 %v872
      %v927 = vpop.f32.mrb[0].mxu0
      %v928 = vadd.f32 %v844, %v927
      %v929 = vpop.f32.mrb[0].mxu0
      %v930 = vpop.f32.mrb[0].mxu0
      %v931 = vadd.f32 %v844, %v930
      %v932 = vpop.f32.mrb[0].mxu0
      %933 = vmatprep.mubr.bf16.mxu0 0
      %934 = vmatmul.mubr.bf16.gmra.mrb[0].mxu0 %v875
      %v935 = vpop.f32.mrb[0].mxu0
      %v936 = vadd.f32 %v844, %v935
      %v937 = vpop.f32.mrb[0].mxu0
      %v938 = vpop.f32.mrb[0].mxu0
      %v939 = vadd.f32 %v844, %v938
      %v940 = vpop.f32.mrb[0].mxu0
      %941 = vdwg.mxu0
      %v942 = vmax.f32 %v912, 0.0
      %v943 = vmax.f32 %v915, 0.0
      %v944 = vmax.f32 %v920, 0.0
      %v945 = vmax.f32 %v923, 0.0
      %v946 = vmax.f32 %v928, 0.0
      %v947 = vmax.f32 %v931, 0.0
      %v948 = vmax.f32 %v936, 0.0
      %v949 = vmax.f32 %v939, 0.0
      %v950 = vpack.c.bf16 %v943, %v942
      %v951 = vpack.c.bf16 %v945, %v944
      %v952 = vpack.c.bf16 %v947, %v946
      %v953 = vpack.c.bf16 %v949, %v948
      %v954 = vld [vmem:[%s9] sm:$0xf]
      %v955 = vld [vmem:[%s9 + $0x4] sm:$0xf]
      %v956 = vld [vmem:[%s9 + $0x8] sm:$0xf]
      %v957 = vld [vmem:[%s9 + $0xc] sm:$0xf]
      %v958 = vld [vmem:[%s9 + $0x10] sm:$0xf]
      %v959 = vld [vmem:[%s9 + $0x14] sm:$0xf]
      %v960 = vld [vmem:[%s10] sm:$0xf]
      %v961 = vld [vmem:[%s10 + $0x4] sm:$0xf]
      %v964 = vunpack.c.l.b16 %v960
      %v965 = vunpack.c.l.b16 %v961
      %v966 = vpack.c.b16 %v965, %v964
      %968 = vmatprep.subr.bf16.mxu0 0
      %969 = vmatpush1.bf16.msra.mxu0 %v966
      %970 = vmatprep.subr.bf16.mxu0 0
      %971 = vmatpush1.bf16.msra.mxu0 0
      %972 = vmatprep.subr.bf16.mxu0 0
      %973 = vmatpush1.bf16.msra.mxu0 0
      %974 = vmatprep.subr.bf16.mxu0 0
      %975 = vmatpush1.bf16.msra.mxu0 0
      %976 = vmatprep.subr.bf16.mxu0 0
      %977 = vmatpush1.bf16.msra.mxu0 0
      %978 = vmatprep.subr.bf16.mxu0 0
      %979 = vmatpush1.bf16.msra.mxu0 0
      %980 = vmatprep.subr.bf16.mxu0 0
      %981 = vmatpush1.bf16.msra.mxu0 0
      %982 = vmatprep.subr.bf16.mxu0 0
      %983 = vmatpush1.bf16.msra.mxu0 0
      %984 = vmatprep.subr.bf16.mxu0 0
      %985 = vmatpush1.bf16.msra.mxu0 0
      %986 = vmatprep.subr.bf16.mxu0 0
      %987 = vmatpush1.bf16.msra.mxu0 0
      %988 = vmatprep.subr.bf16.mxu0 0
      %989 = vmatpush1.bf16.msra.mxu0 0
      %990 = vmatprep.subr.bf16.mxu0 0
      %991 = vmatpush1.bf16.msra.mxu0 0
      %992 = vmatprep.subr.bf16.mxu0 0
      %993 = vmatpush1.bf16.msra.mxu0 0
      %994 = vmatprep.subr.bf16.mxu0 0
      %995 = vmatpush1.bf16.msra.mxu0 0
      %996 = vmatprep.subr.bf16.mxu0 0
      %997 = vmatpush1.bf16.msra.mxu0 0
      %998 = vmatprep.subr.bf16.mxu0 0
      %999 = vmatpush1.bf16.msra.mxu0 0
      %1000 = vmatprep.mubr.bf16.mxu0 0
      %1001 = vmatmul.mubr.bf16.gmra.mrb[0].mxu0 %v637
      %v1002 = vpop.f32.mrb[0].mxu0
      %v1003 = vadd.f32 0.0, %v1002
      %v1004 = vpop.f32.mrb[0].mxu0
      %v1005 = vpop.f32.mrb[0].mxu0
      %v1006 = vadd.f32 0.0, %v1005
      %v1007 = vpop.f32.mrb[0].mxu0
      %1008 = vmatprep.mubr.bf16.mxu0 0
      %1009 = vmatmul.mubr.bf16.gmra.mrb[0].mxu0 %v640
      %v1010 = vpop.f32.mrb[0].mxu0
      %v1011 = vadd.f32 0.0, %v1010
      %v1012 = vpop.f32.mrb[0].mxu0
      %v1013 = vpop.f32.mrb[0].mxu0
      %v1014 = vadd.f32 0.0, %v1013
      %v1015 = vpop.f32.mrb[0].mxu0
      %1016 = vmatprep.mubr.bf16.mxu0 0
      %1017 = vmatmul.mubr.bf16.gmra.mrb[0].mxu0 %v643
      %v1018 = vpop.f32.mrb[0].mxu0
      %v1019 = vadd.f32 0.0, %v1018
      %v1020 = vpop.f32.mrb[0].mxu0
      %v1021 = vpop.f32.mrb[0].mxu0
      %v1022 = vadd.f32 0.0, %v1021
      %v1023 = vpop.f32.mrb[0].mxu0
      %1024 = vmatprep.mubr.bf16.mxu0 0
      %1025 = vmatmul.mubr.bf16.gmra.mrb[0].mxu0 %v646
      %v1026 = vpop.f32.mrb[0].mxu0
      %v1027 = vadd.f32 0.0, %v1026
      %v1028 = vpop.f32.mrb[0].mxu0
      %v1029 = vpop.f32.mrb[0].mxu0
      %v1030 = vadd.f32 0.0, %v1029
      %v1031 = vpop.f32.mrb[0].mxu0
      %1032 = vdwg.mxu0
      %v1039 = vunpack.c.l.b16 %v954
      %v1040 = vunpack.c.l.b16 %v955
      %v1041 = vunpack.c.l.b16 %v956
      %v1042 = vunpack.c.l.b16 %v957
      %v1043 = vunpack.c.l.b16 %v958
      %v1044 = vunpack.c.l.b16 %v959
      %v1045 = vpack.c.b16 %v1040, %v1039
      %v1046 = vpack.c.b16 %v1042, %v1041
      %v1047 = vpack.c.b16 %v1044, %v1043
      %v1052 = vsel %vm864, %v950, 0
      %v1055 = vsel %vm864, %v951, 0
      %v1058 = vsel %vm864, %v952, 0
      %v1061 = vsel %vm864, %v953, 0
      %1063 = vmatprep.subr.bf16.mxu0 0
      %1064 = vmatpush1.bf16.msra.mxu0 %v1045
      %1065 = vmatprep.subr.bf16.mxu0 0
      %1066 = vmatpush1.bf16.msra.mxu0 %v1046
      %1067 = vmatprep.subr.bf16.mxu0 0
      %1068 = vmatpush1.bf16.msra.mxu0 %v1047
      %1069 = vmatprep.subr.bf16.mxu0 0
      %1070 = vmatpush1.bf16.msra.mxu0 0
      %1071 = vmatprep.subr.bf16.mxu0 0
      %1072 = vmatpush1.bf16.msra.mxu0 0
      %1073 = vmatprep.subr.bf16.mxu0 0
      %1074 = vmatpush1.bf16.msra.mxu0 0
      %1075 = vmatprep.subr.bf16.mxu0 0
      %1076 = vmatpush1.bf16.msra.mxu0 0
      %1077 = vmatprep.subr.bf16.mxu0 0
      %1078 = vmatpush1.bf16.msra.mxu0 0
      %1079 = vmatprep.subr.bf16.mxu0 0
      %1080 = vmatpush1.bf16.msra.mxu0 0
      %1081 = vmatprep.subr.bf16.mxu0 0
      %1082 = vmatpush1.bf16.msra.mxu0 0
      %1083 = vmatprep.subr.bf16.mxu0 0
      %1084 = vmatpush1.bf16.msra.mxu0 0
      %1085 = vmatprep.subr.bf16.mxu0 0
      %1086 = vmatpush1.bf16.msra.mxu0 0
      %1087 = vmatprep.subr.bf16.mxu0 0
      %1088 = vmatpush1.bf16.msra.mxu0 0
      %1089 = vmatprep.subr.bf16.mxu0 0
      %1090 = vmatpush1.bf16.msra.mxu0 0
      %1091 = vmatprep.subr.bf16.mxu0 0
      %1092 = vmatpush1.bf16.msra.mxu0 0
      %1093 = vmatprep.subr.bf16.mxu0 0
      %1094 = vmatpush1.bf16.msra.mxu0 0
      %1095 = vmatprep.mubr.bf16.mxu0 0
      %1096 = vmatmul.mubr.bf16.gmra.mrb[0].mxu0 %v1052
      %v1097 = vpop.f32.mrb[0].mxu0
      %v1098 = vadd.f32 %v1003, %v1097
      %v1099 = vpop.f32.mrb[0].mxu0
      %v1100 = vpop.f32.mrb[0].mxu0
      %v1101 = vadd.f32 %v1006, %v1100
      %v1102 = vpop.f32.mrb[0].mxu0
      %1103 = vmatprep.mubr.bf16.mxu0 0
      %1104 = vmatmul.mubr.bf16.gmra.mrb[0].mxu0 %v1055
      %v1105 = vpop.f32.mrb[0].mxu0
      %v1106 = vadd.f32 %v1011, %v1105
      %v1107 = vpop.f32.mrb[0].mxu0
      %v1108 = vpop.f32.mrb[0].mxu0
      %v1109 = vadd.f32 %v1014, %v1108
      %v1110 = vpop.f32.mrb[0].mxu0
      %1111 = vmatprep.mubr.bf16.mxu0 0
      %1112 = vmatmul.mubr.bf16.gmra.mrb[0].mxu0 %v1058
      %v1113 = vpop.f32.mrb[0].mxu0
      %v1114 = vadd.f32 %v1019, %v1113
      %v1115 = vpop.f32.mrb[0].mxu0
      %v1116 = vpop.f32.mrb[0].mxu0
      %v1117 = vadd.f32 %v1022, %v1116
      %v1118 = vpop.f32.mrb[0].mxu0
      %1119 = vmatprep.mubr.bf16.mxu0 0
      %1120 = vmatmul.mubr.bf16.gmra.mrb[0].mxu0 %v1061
      %v1121 = vpop.f32.mrb[0].mxu0
      %v1122 = vadd.f32 %v1027, %v1121
      %v1123 = vpop.f32.mrb[0].mxu0
      %v1124 = vpop.f32.mrb[0].mxu0
      %v1125 = vadd.f32 %v1030, %v1124
      %v1126 = vpop.f32.mrb[0].mxu0
      %1127 = vdwg.mxu0
      %v1128 = vld [vmem:[%s576] sm:$0xff]
      %v1130 = vcombine.high %v1128, %v1128
      %v1132 = vunpack.c.l.s4 1966171168
      %v1133 = vunpack.c.0.s8 %v1132
      %v1134 = vlaneseq
      %v1135 = vshrl.u32 %v1134, 7
      %v1136 = vsub.s32 %v1133, %v1135
      %v1137 = vrot.slane %v1128, %v1136
      %v1139 = vunpack.c.l.s4 1966171168
      %v1140 = vunpack.c.0.s8 %v1139
      %v1141 = vlaneseq
      %v1142 = vshrl.u32 %v1141, 7
      %v1143 = vsub.s32 %v1140, %v1142
      %v1144 = vrot.slane %v1130, %v1143
      %v1145 = vcombine.high %v1137, %v1137
      %v1146 = vcombine.high %v1144, %v1144
      %v1148 = vunpack.c.l.s4 1966171168
      %v1149 = vunpack.c.0.s8 %v1148
      %v1150 = vlaneseq
      %v1151 = vshrl.u32 %v1150, 7
      %v1152 = vsub.s32 %v1149, %v1151
      %v1153 = vrot.slane %v1137, %v1152
      %v1155 = vunpack.c.l.s4 1966171168
      %v1156 = vunpack.c.0.s8 %v1155
      %v1157 = vlaneseq
      %v1158 = vshrl.u32 %v1157, 7
      %v1159 = vsub.s32 %v1156, %v1158
      %v1160 = vrot.slane %v1144, %v1159
      %v1162 = vunpack.c.l.s4 1966171168
      %v1163 = vunpack.c.0.s8 %v1162
      %v1164 = vlaneseq
      %v1165 = vshrl.u32 %v1164, 7
      %v1166 = vsub.s32 %v1163, %v1165
      %v1167 = vrot.slane %v1145, %v1166
      %v1169 = vunpack.c.l.s4 1966171168
      %v1170 = vunpack.c.0.s8 %v1169
      %v1171 = vlaneseq
      %v1172 = vshrl.u32 %v1171, 7
      %v1173 = vsub.s32 %v1170, %v1172
      %v1174 = vrot.slane %v1146, %v1173
      %v1175 = vcombine.high %v1153, %v1153
      %v1176 = vcombine.high %v1160, %v1160
      %v1177 = vcombine.high %v1167, %v1167
      %v1178 = vcombine.high %v1174, %v1174
      %v1179 = vlaneseq
      %v1180 = vshrl.u32 %v1179, 7
      %v1181 = vsub.s32 0, %v1180
      %v1182 = vrot.slane %v1153, %v1181
      %v1183 = vlaneseq
      %v1184 = vshrl.u32 %v1183, 7
      %v1185 = vsub.s32 0, %v1184
      %v1186 = vrot.slane %v1167, %v1185
      %v1187 = vlaneseq
      %v1188 = vshrl.u32 %v1187, 7
      %v1189 = vsub.s32 0, %v1188
      %v1190 = vrot.slane %v1175, %v1189
      %v1191 = vlaneseq
      %v1192 = vshrl.u32 %v1191, 7
      %v1193 = vsub.s32 0, %v1192
      %v1194 = vrot.slane %v1177, %v1193
      %v1195 = vlaneseq
      %v1196 = vshrl.u32 %v1195, 7
      %v1197 = vsub.s32 0, %v1196
      %v1198 = vrot.slane %v1160, %v1197
      %v1199 = vlaneseq
      %v1200 = vshrl.u32 %v1199, 7
      %v1201 = vsub.s32 0, %v1200
      %v1202 = vrot.slane %v1174, %v1201
      %v1203 = vlaneseq
      %v1204 = vshrl.u32 %v1203, 7
      %v1205 = vsub.s32 0, %v1204
      %v1206 = vrot.slane %v1176, %v1205
      %v1207 = vlaneseq
      %v1208 = vshrl.u32 %v1207, 7
      %v1209 = vsub.s32 0, %v1208
      %v1210 = vrot.slane %v1178, %v1209
      %v1219 = vadd.f32 %v1098, %v1182
      %v1220 = vadd.f32 %v1101, %v1186
      %v1221 = vadd.f32 %v1106, %v1190
      %v1222 = vadd.f32 %v1109, %v1194
      %v1223 = vadd.f32 %v1114, %v1198
      %v1224 = vadd.f32 %v1117, %v1202
      %v1225 = vadd.f32 %v1122, %v1206
      %v1226 = vadd.f32 %v1125, %v1210
      %v1227 = vld [vmem:[%s580] sm:$0xff]
      %v1228 = vadd.f32 %v1219, %v1227
      %v1229 = vadd.f32 %v1220, %v1227
      %v1230 = vadd.f32 %v1221, %v1227
      %v1231 = vadd.f32 %v1222, %v1227
      %v1232 = vadd.f32 %v1223, %v1227
      %v1233 = vadd.f32 %v1224, %v1227
      %v1234 = vadd.f32 %v1225, %v1227
      %v1235 = vadd.f32 %v1226, %v1227
      %v1236 = vsel %vm635, %v1228, 0.0
      %1237 = vadd.xlane.f32.xlu0 %v1236
      %v1238 = vpop.xlane.xlu0 %1237
      %v1239 = vsel %vm635, %v1229, 0.0
      %1240 = vadd.xlane.f32.xlu0 %v1239
      %v1241 = vpop.xlane.xlu0 %1240
      %v1242 = vsel %vm635, %v1230, 0.0
      %1243 = vadd.xlane.f32.xlu0 %v1242
      %v1244 = vpop.xlane.xlu0 %1243
      %v1245 = vsel %vm635, %v1231, 0.0
      %1246 = vadd.xlane.f32.xlu0 %v1245
      %v1247 = vpop.xlane.xlu0 %1246
      %v1248 = vsel %vm635, %v1232, 0.0
      %1249 = vadd.xlane.f32.xlu0 %v1248
      %v1250 = vpop.xlane.xlu0 %1249
      %v1251 = vsel %vm635, %v1233, 0.0
      %1252 = vadd.xlane.f32.xlu0 %v1251
      %v1253 = vpop.xlane.xlu0 %1252
      %v1254 = vsel %vm635, %v1234, 0.0
      %1255 = vadd.xlane.f32.xlu0 %v1254
      %v1256 = vpop.xlane.xlu0 %1255
      %v1257 = vsel %vm635, %v1235, 0.0
      %1258 = vadd.xlane.f32.xlu0 %v1257
      %v1259 = vpop.xlane.xlu0 %1258
      %v1260 = vrcp.pop 16.0
      %v1261 = vmul.f32 %v1238, %v1260
      %v1262 = vmul.f32 %v1241, %v1260
      %v1263 = vmul.f32 %v1244, %v1260
      %v1264 = vmul.f32 %v1247, %v1260
      %v1265 = vmul.f32 %v1250, %v1260
      %v1266 = vmul.f32 %v1253, %v1260
      %v1267 = vmul.f32 %v1256, %v1260
      %v1268 = vmul.f32 %v1259, %v1260
      %v1269 = vsub.f32 %v1228, %v1261
      %v1270 = vsub.f32 %v1229, %v1262
      %v1271 = vsub.f32 %v1230, %v1263
      %v1272 = vsub.f32 %v1231, %v1264
      %v1273 = vsub.f32 %v1232, %v1265
      %v1274 = vsub.f32 %v1233, %v1266
      %v1275 = vsub.f32 %v1234, %v1267
      %v1276 = vsub.f32 %v1235, %v1268
      %v1277 = vmul.f32 %v1269, %v1269
      %v1278 = vmul.f32 %v1270, %v1270
      %v1279 = vmul.f32 %v1271, %v1271
      %v1280 = vmul.f32 %v1272, %v1272
      %v1281 = vmul.f32 %v1273, %v1273
      %v1282 = vmul.f32 %v1274, %v1274
      %v1283 = vmul.f32 %v1275, %v1275
      %v1284 = vmul.f32 %v1276, %v1276
      %v1285 = vsel %vm635, %v1277, 0.0
      %1286 = vadd.xlane.f32.xlu0 %v1285
      %v1287 = vpop.xlane.xlu0 %1286
      %v1288 = vsel %vm635, %v1278, 0.0
      %1289 = vadd.xlane.f32.xlu0 %v1288
      %v1290 = vpop.xlane.xlu0 %1289
      %v1291 = vsel %vm635, %v1279, 0.0
      %1292 = vadd.xlane.f32.xlu0 %v1291
      %v1293 = vpop.xlane.xlu0 %1292
      %v1294 = vsel %vm635, %v1280, 0.0
      %1295 = vadd.xlane.f32.xlu0 %v1294
      %v1296 = vpop.xlane.xlu0 %1295
      %v1297 = vsel %vm635, %v1281, 0.0
      %1298 = vadd.xlane.f32.xlu0 %v1297
      %v1299 = vpop.xlane.xlu0 %1298
      %v1300 = vsel %vm635, %v1282, 0.0
      %1301 = vadd.xlane.f32.xlu0 %v1300
      %v1302 = vpop.xlane.xlu0 %1301
      %v1303 = vsel %vm635, %v1283, 0.0
      %1304 = vadd.xlane.f32.xlu0 %v1303
      %v1305 = vpop.xlane.xlu0 %1304
      %v1306 = vsel %vm635, %v1284, 0.0
      %1307 = vadd.xlane.f32.xlu0 %v1306
      %v1308 = vpop.xlane.xlu0 %1307
      %v1309 = vmul.f32 %v1287, %v1260
      %v1310 = vmul.f32 %v1290, %v1260
      %v1311 = vmul.f32 %v1293, %v1260
      %v1312 = vmul.f32 %v1296, %v1260
      %v1313 = vmul.f32 %v1299, %v1260
      %v1314 = vmul.f32 %v1302, %v1260
      %v1315 = vmul.f32 %v1305, %v1260
      %v1316 = vmul.f32 %v1308, %v1260
      %v1317 = vadd.f32 %v1309, 1e-05
      %v1318 = vadd.f32 %v1310, 1e-05
      %v1319 = vadd.f32 %v1311, 1e-05
      %v1320 = vadd.f32 %v1312, 1e-05
      %v1321 = vadd.f32 %v1313, 1e-05
      %v1322 = vadd.f32 %v1314, 1e-05
      %v1323 = vadd.f32 %v1315, 1e-05
      %v1324 = vadd.f32 %v1316, 1e-05
      %v1325 = vrsqrt.pop %v1317
      %v1326 = vrsqrt.pop %v1318
      %v1327 = vrsqrt.pop %v1319
      %v1328 = vrsqrt.pop %v1320
      %v1329 = vrsqrt.pop %v1321
      %v1330 = vrsqrt.pop %v1322
      %v1331 = vrsqrt.pop %v1323
      %v1332 = vrsqrt.pop %v1324
      %v1333 = vmul.f32 %v1269, %v1325
      %v1334 = vmul.f32 %v1270, %v1326
      %v1335 = vmul.f32 %v1271, %v1327
      %v1336 = vmul.f32 %v1272, %v1328
      %v1337 = vmul.f32 %v1273, %v1329
      %v1338 = vmul.f32 %v1274, %v1330
      %v1339 = vmul.f32 %v1275, %v1331
      %v1340 = vmul.f32 %v1276, %v1332
      %v1341 = vld [vmem:[%s11] sm:$0x1]
      %v1343 = vlaneseq
      %v1344 = vshrl.u32 %v1343, 7
      %v1345 = vsub.s32 0, %v1344
      %v1346 = vrot.slane %v1341, %v1345
      %v1348 = vmul.f32 %v1333, %v1346
      %v1349 = vmul.f32 %v1334, %v1346
      %v1350 = vmul.f32 %v1335, %v1346
      %v1351 = vmul.f32 %v1336, %v1346
      %v1352 = vmul.f32 %v1337, %v1346
      %v1353 = vmul.f32 %v1338, %v1346
      %v1354 = vmul.f32 %v1339, %v1346
      %v1355 = vmul.f32 %v1340, %v1346
      %v1356 = vld [vmem:[%s12] sm:$0x1]
      %v1358 = vlaneseq
      %v1359 = vshrl.u32 %v1358, 7
      %v1360 = vsub.s32 0, %v1359
      %v1361 = vrot.slane %v1356, %v1360
      %v1363 = vadd.f32 %v1348, %v1361
      %v1364 = vadd.f32 %v1349, %v1361
      %v1365 = vadd.f32 %v1350, %v1361
      %v1366 = vadd.f32 %v1351, %v1361
      %v1367 = vadd.f32 %v1352, %v1361
      %v1368 = vadd.f32 %v1353, %v1361
      %v1369 = vadd.f32 %v1354, %v1361
      %v1370 = vadd.f32 %v1355, %v1361
      %v1371 = vld [vmem:[%s587] sm:$0xf]
      %v1373 = vpack.i.b16 %v1371, %v1371
      %v1375 = vlaneseq
      %v1376 = vshrl.u32 %v1375, 7
      %v1377 = vsub.s32 0, %v1376
      %v1378 = vrot.slane %v1373, %v1377
      %1380 = vbcast.lane.c.b16.xlu0 %v1378, 256
      %v1381 = vpop.permute.xlu0 %1380
      %v1382 = vshrl.u32 %v1371, 16
      %v1383 = vpack.i.b16 %v1382, %v1382
      %v1385 = vlaneseq
      %v1386 = vshrl.u32 %v1385, 7
      %v1387 = vsub.s32 0, %v1386
      %v1388 = vrot.slane %v1383, %v1387
      %1390 = vbcast.lane.c.b16.xlu0 %v1388, 256
      %v1391 = vpop.permute.xlu0 %1390
      %v1392 = vlaneseq
      %v1393 = vshrl.u32 %v1392, 7
      %v1394 = vsub.s32 1, %v1393
      %v1395 = vrot.slane %v1373, %v1394
      %1397 = vbcast.lane.c.b16.xlu0 %v1395, 256
      %v1398 = vpop.permute.xlu0 %1397
      %v1399 = vlaneseq
      %v1400 = vshrl.u32 %v1399, 7
      %v1401 = vsub.s32 1, %v1400
      %v1402 = vrot.slane %v1383, %v1401
      %1404 = vbcast.lane.c.b16.xlu0 %v1402, 256
      %v1405 = vpop.permute.xlu0 %1404
      %v1406 = vlaneseq
      %v1407 = vshrl.u32 %v1406, 7
      %v1408 = vsub.s32 2, %v1407
      %v1409 = vrot.slane %v1373, %v1408
      %1411 = vbcast.lane.c.b16.xlu0 %v1409, 256
      %v1412 = vpop.permute.xlu0 %1411
      %v1413 = vlaneseq
      %v1414 = vshrl.u32 %v1413, 7
      %v1415 = vsub.s32 2, %v1414
      %v1416 = vrot.slane %v1383, %v1415
      %1418 = vbcast.lane.c.b16.xlu0 %v1416, 256
      %v1419 = vpop.permute.xlu0 %1418
      %v1420 = vlaneseq
      %v1421 = vshrl.u32 %v1420, 7
      %v1422 = vsub.s32 3, %v1421
      %v1423 = vrot.slane %v1373, %v1422
      %1425 = vbcast.lane.c.b16.xlu0 %v1423, 256
      %v1426 = vpop.permute.xlu0 %1425
      %v1427 = vlaneseq
      %v1428 = vshrl.u32 %v1427, 7
      %v1429 = vsub.s32 3, %v1428
      %v1430 = vrot.slane %v1383, %v1429
      %1432 = vbcast.lane.c.b16.xlu0 %v1430, 256
      %v1433 = vpop.permute.xlu0 %1432
      %v1434 = vunpack.c.l.bf16 %v1381
      %v1435 = vunpack.c.l.bf16 %v1391
      %v1436 = vunpack.c.l.bf16 %v1398
      %v1437 = vunpack.c.l.bf16 %v1405
      %v1438 = vunpack.c.l.bf16 %v1412
      %v1439 = vunpack.c.l.bf16 %v1419
      %v1440 = vunpack.c.l.bf16 %v1426
      %v1441 = vunpack.c.l.bf16 %v1433
      %v1442 = vmul.f32 %v1363, %v1434
      %v1443 = vmul.f32 %v1364, %v1435
      %v1444 = vmul.f32 %v1365, %v1436
      %v1445 = vmul.f32 %v1366, %v1437
      %v1446 = vmul.f32 %v1367, %v1438
      %v1447 = vmul.f32 %v1368, %v1439
      %v1448 = vmul.f32 %v1369, %v1440
      %v1449 = vmul.f32 %v1370, %v1441
      %v1450 = vpack.c.bf16 %v1442, %v1442
      %v1451 = vpack.c.bf16 %v1443, %v1443
      %v1452 = vpack.c.bf16 %v1444, %v1444
      %v1453 = vpack.c.bf16 %v1445, %v1445
      %v1454 = vpack.c.bf16 %v1446, %v1446
      %v1455 = vpack.c.bf16 %v1447, %v1447
      %v1456 = vpack.c.bf16 %v1448, %v1448
      %v1457 = vpack.c.bf16 %v1449, %v1449
      %vm1458 = vcmask 125952
      %1459 = vst.msk [vmem:[%s596] sm:$0xf] %vm1458, %v1450
      %1460 = vst.msk [vmem:[%s596 + $0x4] sm:$0xf] %vm1458, %v1451
      %1461 = vst.msk [vmem:[%s596 + $0x8] sm:$0xf] %vm1458, %v1452
      %1462 = vst.msk [vmem:[%s596 + $0xc] sm:$0xf] %vm1458, %v1453
      %1463 = vst.msk [vmem:[%s596 + $0x10] sm:$0xf] %vm1458, %v1454
      %1464 = vst.msk [vmem:[%s596 + $0x14] sm:$0xf] %vm1458, %v1455
      %1465 = vst.msk [vmem:[%s596 + $0x18] sm:$0xf] %vm1458, %v1456
      %1466 = vst.msk [vmem:[%s596 + $0x1c] sm:$0xf] %vm1458, %v1457
      %s1467 = smul.u32 8, %s29
      %p1468 = scmp.lt.s32.totalorder %s28, 1
      %s1469 = scalar_select %p1468, %s28, 1
      %p1470 = scmp.lt.s32.totalorder %s1467, 7
      %s1471 = scalar_select %p1470, %s1467, 7
      %s1472 = smul.addr %s1469, 8
      %s1473 = sadd.s32 %s1471, %s1472
      %s1474 = smul.addr %s1473, 4
      %s1475 = scalar_lea.vmem %s13, %s1474
      // Predicated region
      $region73: #{structure_update_forward.12} parent=71 // pred_check
        %p1476 = pneg %p367
      $region74: #{structure_update_forward.12} parent=71 // pred_check_branch
        %1478 = sbr.rel (%p1476) target = $region76
      $region75: #{structure_update_forward.12} parent=71 // pred_region
        %s1479 = smul.u32 8, %s29
      $region76: #{structure_update_forward.12} parent=71 // pred_fallthru
        _
    $region72: #{structure_update_forward.12} parent=5 // pred_fallthru
      _
    %p1480 = scmp.le.s32.totalorder 2, %s19
    // Predicated region
    $region77: #{structure_update_forward.12} parent=5 // pred_check
      %p1481 = pneg %p1480
    $region78: #{structure_update_forward.12} parent=5 // pred_check_branch
      %1483 = sbr.rel (%p1481) target = $region80
    $region79: #{structure_update_forward.12} parent=5 // pred_region
      %s1484 = ssub.s32 %s19, 2
      // Predicated region
      $region81: #{structure_update_forward.12} parent=79 // pred_check
        %p1485 = pneg %p373
      $region82: #{structure_update_forward.12} parent=79 // pred_check_branch
        %1487 = sbr.rel (%p1485) target = $region84
      $region83: #{structure_update_forward.12} parent=79 // pred_region
        %s1488 = smul.u32 8, %s31
        %p1489 = scmp.lt.s32.totalorder %s30, 1
        %s1490 = scalar_select %p1489, %s30, 1
        %p1491 = scmp.lt.s32.totalorder %s1488, 7
        %s1492 = scalar_select %p1491, %s1488, 7
        %s1493 = smul.addr %s1490, 8
        %s1494 = sadd.s32 %s1492, %s1493
        %s1495 = smul.addr %s1494, 4
        %s1496 = scalar_lea.vmem %s13, %s1495
      $region84: #{structure_update_forward.12} parent=79 // pred_fallthru
        _
    $region80: #{structure_update_forward.12} parent=5 // pred_fallthru
      _
  $region6: #{structure_update_forward.12} parent=0 // loop_footer
    %s23 = sadd.s32 1, %s19
  $region7: #{structure_update_forward.12} parent=0 // loop_footer_branch
    %18 = sbr.rel target = $region3
  $region8: #{structure_update_forward.12} parent=0 // loop_exit
    _

</llo_original>
